<compile_context>
chip_gen: v7x
topology: tpu7x:2x2x1
jax: 0.10.0
libtpu: 0.0.40
codegen_flags: <defaults>
</compile_context>

<pallas_src>
import functools

import jax
import jax.numpy as jnp
from jax.experimental import pallas as pl
from jax.experimental.pallas import tpu as pltpu


# ----------------------------------------------------------------------------
# Fused kernel: conv1x1 + BN + ReLU + channel attention + spatial attention
# ----------------------------------------------------------------------------
def _fusion_kernel(xl_ref, xg_ref, w1_ref, bias_ref, wfc1_ref, wfc2_ref, wm_ref,
                   o_ref, pad_ref, *, H, W, K, pad_lo):
    """One batch element, channels-last.

    xl_ref/xg_ref : (1, HW, C)    local / global features
    w1_ref        : (2C, C)       1x1-conv weight, BN scale folded into columns
    bias_ref      : (1, C)        folded BN bias
    wfc1_ref      : (C, Cr)       channel-attention MLP (shared)
    wfc2_ref      : (Cr, C)
    wm_ref        : (K*K, HW, 2)  per-tap spatial weights * column-validity mask
    o_ref         : (1, HW, C)
    pad_ref       : (HW + 2*pad_lo, 2) VMEM scratch (zero-padded [avg|max] maps)
    """
    HW = H * W
    P = (K - 1) // 2

    # --- 1x1 conv over the channel concat: ONE MXU matmul + bias + ReLU ---
    xin = jnp.concatenate([xl_ref[0], xg_ref[0]], axis=-1)            # (HW, 2C)
    x = jnp.dot(xin, w1_ref[...], preferred_element_type=jnp.float32)  # (HW, C)
    x = jnp.maximum(x + bias_ref[...], 0.0)

    # --- Channel attention: stacked avg/max stats through the shared MLP once ---
    avg_c = jnp.sum(x, axis=0, keepdims=True) * (1.0 / HW)            # (1, C)
    max_c = jnp.max(x, axis=0, keepdims=True)                         # (1, C)
    stats = jnp.concatenate([avg_c, max_c], axis=0)                   # (2, C)
    hmid = jnp.maximum(
        jnp.dot(stats, wfc1_ref[...], preferred_element_type=jnp.float32), 0.0)
    z = jnp.dot(hmid, wfc2_ref[...], preferred_element_type=jnp.float32)  # (2, C)
    ca = jax.nn.sigmoid(jnp.sum(z, axis=0, keepdims=True))            # (1, C)
    y = x * ca                                                        # (HW, C)

    # --- Spatial attention stats (per-pixel channel mean / max), kept in HW-domain ---
    c = y.shape[1]
    s_avg = jnp.sum(y, axis=1, keepdims=True) * (1.0 / c)             # (HW, 1)
    s_max = jnp.max(y, axis=1, keepdims=True)                         # (HW, 1)
    zpad = jnp.zeros((pad_lo, 2), jnp.float32)
    pad_ref[...] = jnp.concatenate(
        [zpad, jnp.concatenate([s_avg, s_max], axis=1), zpad], axis=0)

    # --- 7x7 spatial conv as 49 shifted reads of the zero-padded maps ---
    # For tap (kh, kw): contribution(p) = w * maps[p + (kh-P)*W + (kw-P)], valid
    # only when the column shift stays inside the row (mask folded into wm).
    acc2 = jnp.zeros((HW, 2), jnp.float32)
    for kh in range(K):                                   # unrolled 7x7 taps
        dh = kh - P
        for kw in range(K):
            dw = kw - P
            off = pad_lo + dh * W + dw
            tap = pad_ref[off:off + HW, :]                # (HW, 2)
            acc2 = acc2 + wm_ref[kh * K + kw] * tap
    sa = jax.nn.sigmoid(acc2[:, 0:1] + acc2[:, 1:2])      # (HW, 1)

    # --- final multiply, lane-dense store ---
    o_ref[0] = y * sa


# ----------------------------------------------------------------------------
# Wrapper: weight folding / layout glue
# ----------------------------------------------------------------------------
def fusion_module_forward(feat_local, feat_global, params, *, eps=1e-5):
    N, C, H, W = feat_local.shape
    HW = H * W
    K = params["w_spatial"].shape[-1]
    P = (K - 1) // 2
    Cr = params["wfc1"].shape[0]

    # NCHW -> channels-last (N, HW, C)
    xl = jnp.transpose(feat_local, (0, 2, 3, 1)).reshape(N, HW, C)
    xg = jnp.transpose(feat_global, (0, 2, 3, 1)).reshape(N, HW, C)

    # conv1x1 weight (C_out, 2C_in, 1, 1) -> (2C_in, C_out); fold BN scale into columns
    scale_v = params["bn_gamma"] * jax.lax.rsqrt(params["bn_var"] + eps)
    bias_v = params["bn_beta"] - params["bn_mean"] * scale_v
    w1 = jnp.transpose(params["w_conv1x1"].reshape(C, 2 * C)) * scale_v[None, :]
    bias = bias_v.reshape(1, C)

    wfc1_t = jnp.transpose(params["wfc1"].reshape(Cr, C))   # (C, Cr)
    wfc2_t = jnp.transpose(params["wfc2"].reshape(C, Cr))   # (Cr, C)

    # Per-tap spatial weights pre-multiplied by the column-validity mask.
    col = jnp.arange(HW, dtype=jnp.int32) % W                           # (HW,)
    dw = jnp.arange(K, dtype=jnp.int32) - P                             # (K,)
    colmask = ((col[:, None] + dw[None, :] >= 0)
               & (col[:, None] + dw[None, :] < W)).astype(jnp.float32)  # (HW, K)
    w_sp = params["w_spatial"].reshape(2, K, K)                         # [avg, max]
    wm = (jnp.transpose(w_sp, (1, 2, 0))[:, :, None, :]                 # (K, K, 1, 2)
          * jnp.transpose(colmask)[None, :, :, None])                   # (1, K, HW, 1)
    wm = wm.reshape(K * K, HW, 2)

    pad_lo = ((P * (W + 1) + 7) // 8) * 8        # sublane-aligned zero-pad depth
    pad_total = HW + 2 * pad_lo

    out_cl = pl.pallas_call(
        functools.partial(_fusion_kernel, H=H, W=W, K=K, pad_lo=pad_lo),
        out_shape=jax.ShapeDtypeStruct((N, HW, C), jnp.float32),
        grid=(N,),
        in_specs=[
            pl.BlockSpec((1, HW, C), lambda b: (b, 0, 0)),
            pl.BlockSpec((1, HW, C), lambda b: (b, 0, 0)),
            pl.BlockSpec((2 * C, C), lambda b: (0, 0)),
            pl.BlockSpec((1, C), lambda b: (0, 0)),
            pl.BlockSpec((C, Cr), lambda b: (0, 0)),
            pl.BlockSpec((Cr, C), lambda b: (0, 0)),
            pl.BlockSpec((K * K, HW, 2), lambda b: (0, 0, 0)),
        ],
        out_specs=pl.BlockSpec((1, HW, C), lambda b: (b, 0, 0)),
        scratch_shapes=[pltpu.VMEM((pad_total, 2), jnp.float32)],
        compiler_params=pltpu.CompilerParams(dimension_semantics=("parallel",)),
    )(xl, xg, w1, bias, wfc1_t, wfc2_t, wm)

    # back to NCHW to match the PyTorch module interface
    return jnp.transpose(out_cl.reshape(N, H, W, C), (0, 3, 1, 2))


# ----------------------------------------------------------------------------
# Plain-JAX reference (for correctness check)
# ----------------------------------------------------------------------------
def reference_forward(feat_local, feat_global, params):
    N, C, H, W = feat_local.shape
    eps = 1e-5
    x = jnp.concatenate([feat_local, feat_global], axis=1)            # (N,2C,H,W)
    w1 = params["w_conv1x1"].reshape(C, 2 * C)
    x = jnp.einsum("oc,nchw->nohw", w1, x)
    scale = params["bn_gamma"] / jnp.sqrt(params["bn_var"] + eps)
    x = ((x - params["bn_mean"][None, :, None, None])
         * scale[None, :, None, None]
         + params["bn_beta"][None, :, None, None])
    x = jnp.maximum(x, 0.0)

    Cr = params["wfc1"].shape[0]
    wfc1 = params["wfc1"].reshape(Cr, C)
    wfc2 = params["wfc2"].reshape(C, Cr)
    avg_c = jnp.mean(x, axis=(2, 3))
    max_c = jnp.max(x, axis=(2, 3))

    def fc(v):
        return jnp.maximum(v @ wfc1.T, 0.0) @ wfc2.T

    ca = jax.nn.sigmoid(fc(avg_c) + fc(max_c))[:, :, None, None]
    y = x * ca

    avg_s = jnp.mean(y, axis=1, keepdims=True)
    max_s = jnp.max(y, axis=1, keepdims=True)
    cat = jnp.concatenate([avg_s, max_s], axis=1)
    attn = jax.lax.conv_general_dilated(
        cat, params["w_spatial"], (1, 1), "SAME",
        dimension_numbers=("NCHW", "OIHW", "NCHW"))
    return y * jax.nn.sigmoid(attn)


if __name__ == "__main__":
    # channels must be >= reduction(=16); use C=32 so the bottleneck is 2.
    N, C, H, W = 2, 32, 8, 8
    red = 16
    Cr = C // red
    K = 7

    key = jax.random.PRNGKey(0)
    ks = jax.random.split(key, 10)
    params = {
        "w_conv1x1": jax.random.normal(ks[0], (C, 2 * C, 1, 1), jnp.float32) * 0.05,
        "bn_gamma":  jax.random.normal(ks[1], (C,), jnp.float32) * 0.1 + 1.0,
        "bn_beta":   jax.random.normal(ks[2], (C,), jnp.float32) * 0.1,
        "bn_mean":   jax.random.normal(ks[3], (C,), jnp.float32) * 0.1,
        "bn_var":    jax.random.uniform(ks[4], (C,), jnp.float32, 0.5, 1.5),
        "wfc1":      jax.random.normal(ks[5], (Cr, C, 1, 1), jnp.float32) * 0.1,
        "wfc2":      jax.random.normal(ks[6], (C, Cr, 1, 1), jnp.float32) * 0.1,
        "w_spatial": jax.random.normal(ks[7], (1, 2, K, K), jnp.float32) * 0.1,
    }
    feat_local = jax.random.normal(ks[8], (N, C, H, W), jnp.float32)
    feat_global = jax.random.normal(ks[9], (N, C, H, W), jnp.float32)

    out = fusion_module_forward(feat_local, feat_global, params)
    out = jax.block_until_ready(out)

    ref = jax.block_until_ready(reference_forward(feat_local, feat_global, params))
    assert out.shape == (N, C, H, W), out.shape
    assert jnp.allclose(out, ref, rtol=1e-2, atol=1e-2), float(
        jnp.max(jnp.abs(out - ref)))

    print("KERNEL_OK")
</pallas_src>

<mosaic_0001>
module attributes {stable_mosaic.version = 11 : i64} {
  func.func @_fusion_kernel(%arg0: i32, %arg1: memref<1x64x32xf32, #tpu.memory_space<vmem>>, %arg2: memref<1x64x32xf32, #tpu.memory_space<vmem>>, %arg3: memref<64x32xf32, #tpu.memory_space<vmem>>, %arg4: memref<1x32xf32, #tpu.memory_space<vmem>>, %arg5: memref<32x2xf32, #tpu.memory_space<vmem>>, %arg6: memref<2x32xf32, #tpu.memory_space<vmem>>, %arg7: memref<49x64x2xf32, #tpu.memory_space<vmem>>, %arg8: memref<1x64x32xf32, #tpu.memory_space<vmem>>, %arg9: memref<128x2xf32, #tpu.memory_space<vmem>>) attributes {dimension_semantics = [#tpu.dimension_semantics<parallel>], iteration_bounds = array<i64: 2>, scalar_prefetch = 0 : i64, scratch_operands = 1 : i64, tpu.core_type = #tpu.core_type<tc>, window_params = [{transform_indices = @transform_0, window_bounds = array<i64: 1, 64, 32>}, {transform_indices = @transform_1, window_bounds = array<i64: 1, 64, 32>}, {pipeline_mode = #tpu.pipeline_mode<synchronous>, transform_indices = @transform_2, window_bounds = array<i64: 64, 32>}, {pipeline_mode = #tpu.pipeline_mode<synchronous>, transform_indices = @transform_3, window_bounds = array<i64: 1, 32>}, {pipeline_mode = #tpu.pipeline_mode<synchronous>, transform_indices = @transform_4, window_bounds = array<i64: 32, 2>}, {pipeline_mode = #tpu.pipeline_mode<synchronous>, transform_indices = @transform_5, window_bounds = array<i64: 2, 32>}, {pipeline_mode = #tpu.pipeline_mode<synchronous>, transform_indices = @transform_6, window_bounds = array<i64: 49, 64, 2>}, {transform_indices = @transform_7, window_bounds = array<i64: 1, 64, 32>}]} {
    %c0 = arith.constant 0 : index
    %c0_0 = arith.constant 0 : index
    %c0_1 = arith.constant 0 : index
    %0 = vector.load %arg1[%c0, %c0_0, %c0_1] : memref<1x64x32xf32, #tpu.memory_space<vmem>>, vector<1x64x32xf32>
    %1 = vector.shape_cast %0 : vector<1x64x32xf32> to vector<64x32xf32>
    %c0_2 = arith.constant 0 : index
    %c0_3 = arith.constant 0 : index
    %c0_4 = arith.constant 0 : index
    %2 = vector.load %arg2[%c0_2, %c0_3, %c0_4] : memref<1x64x32xf32, #tpu.memory_space<vmem>>, vector<1x64x32xf32>
    %3 = vector.shape_cast %2 : vector<1x64x32xf32> to vector<64x32xf32>
    %4 = tpu.concatenate %1, %3 in 1 : vector<64x32xf32>, vector<64x32xf32> -> vector<64x64xf32>
    %c0_5 = arith.constant 0 : index
    %c0_6 = arith.constant 0 : index
    %5 = vector.load %arg3[%c0_5, %c0_6] : memref<64x32xf32, #tpu.memory_space<vmem>>, vector<64x32xf32>
    %cst = arith.constant dense<0.000000e+00> : vector<64x32xf32>
    %6 = tpu.matmul %4, %5, %cst {dimension_numbers = #tpu.dot_dimension_numbers<[1], [0], [0], [1], [0, 0, 1, 1], [], []>} : vector<64x64xf32>, vector<64x32xf32>, vector<64x32xf32> -> vector<64x32xf32>
    %c0_7 = arith.constant 0 : index
    %c0_8 = arith.constant 0 : index
    %7 = vector.load %arg4[%c0_7, %c0_8] : memref<1x32xf32, #tpu.memory_space<vmem>>, vector<1x32xf32>
    %8 = vector.broadcast %7 : vector<1x32xf32> to vector<64x32xf32>
    %9 = arith.addf %6, %8 : vector<64x32xf32>
    %cst_9 = arith.constant 0.000000e+00 : f32
    %10 = vector.broadcast %cst_9 : f32 to vector<64x32xf32>
    %11 = arith.maximumf %9, %10 : vector<64x32xf32>
    %cst_10 = arith.constant dense<0.000000e+00> : vector<32xf32>
    %12 = vector.multi_reduction <add>, %11, %cst_10 [0] : vector<64x32xf32> to vector<32xf32>
    %13 = vector.shape_cast %12 : vector<32xf32> to vector<1x32xf32>
    %cst_11 = arith.constant 1.562500e-02 : f32
    %14 = vector.broadcast %cst_11 : f32 to vector<1x32xf32>
    %15 = arith.mulf %13, %14 : vector<1x32xf32>
    %cst_12 = arith.constant dense<0xFF800000> : vector<32xf32>
    %16 = vector.multi_reduction <maximumf>, %11, %cst_12 [0] : vector<64x32xf32> to vector<32xf32>
    %17 = vector.shape_cast %16 : vector<32xf32> to vector<1x32xf32>
    %18 = tpu.concatenate %15, %17 in 0 : vector<1x32xf32>, vector<1x32xf32> -> vector<2x32xf32>
    %c0_13 = arith.constant 0 : index
    %c0_14 = arith.constant 0 : index
    %19 = vector.load %arg5[%c0_13, %c0_14] : memref<32x2xf32, #tpu.memory_space<vmem>>, vector<32x2xf32>
    %cst_15 = arith.constant dense<0.000000e+00> : vector<2x2xf32>
    %20 = tpu.matmul %18, %19, %cst_15 {dimension_numbers = #tpu.dot_dimension_numbers<[1], [0], [0], [1], [0, 0, 1, 1], [], []>} : vector<2x32xf32>, vector<32x2xf32>, vector<2x2xf32> -> vector<2x2xf32>
    %cst_16 = arith.constant 0.000000e+00 : f32
    %21 = vector.broadcast %cst_16 : f32 to vector<2x2xf32>
    %22 = arith.maximumf %20, %21 : vector<2x2xf32>
    %c0_17 = arith.constant 0 : index
    %c0_18 = arith.constant 0 : index
    %23 = vector.load %arg6[%c0_17, %c0_18] : memref<2x32xf32, #tpu.memory_space<vmem>>, vector<2x32xf32>
    %cst_19 = arith.constant dense<0.000000e+00> : vector<2x32xf32>
    %24 = tpu.matmul %22, %23, %cst_19 {dimension_numbers = #tpu.dot_dimension_numbers<[1], [0], [0], [1], [0, 0, 1, 1], [], []>} : vector<2x2xf32>, vector<2x32xf32>, vector<2x32xf32> -> vector<2x32xf32>
    %cst_20 = arith.constant dense<0.000000e+00> : vector<32xf32>
    %25 = vector.multi_reduction <add>, %24, %cst_20 [0] : vector<2x32xf32> to vector<32xf32>
    %26 = vector.shape_cast %25 : vector<32xf32> to vector<1x32xf32>
    %27 = arith.negf %26 : vector<1x32xf32>
    %28 = math.exp %27 : vector<1x32xf32>
    %cst_21 = arith.constant 1.000000e+00 : f32
    %29 = vector.broadcast %cst_21 : f32 to vector<1x32xf32>
    %30 = arith.addf %29, %28 : vector<1x32xf32>
    %31 = arith.divf %29, %30 : vector<1x32xf32>
    %32 = vector.broadcast %31 : vector<1x32xf32> to vector<64x32xf32>
    %33 = arith.mulf %11, %32 : vector<64x32xf32>
    %cst_22 = arith.constant dense<0.000000e+00> : vector<64xf32>
    %34 = vector.multi_reduction <add>, %33, %cst_22 [1] : vector<64x32xf32> to vector<64xf32>
    %35 = vector.shape_cast %34 : vector<64xf32> to vector<64x1xf32>
    %cst_23 = arith.constant 3.125000e-02 : f32
    %36 = vector.broadcast %cst_23 : f32 to vector<64x1xf32>
    %37 = arith.mulf %35, %36 : vector<64x1xf32>
    %cst_24 = arith.constant dense<0xFF800000> : vector<64xf32>
    %38 = vector.multi_reduction <maximumf>, %33, %cst_24 [1] : vector<64x32xf32> to vector<64xf32>
    %39 = vector.shape_cast %38 : vector<64xf32> to vector<64x1xf32>
    %cst_25 = arith.constant 0.000000e+00 : f32
    %40 = vector.broadcast %cst_25 : f32 to vector<32x2xf32>
    %41 = tpu.concatenate %37, %39 in 1 : vector<64x1xf32>, vector<64x1xf32> -> vector<64x2xf32>
    %42 = tpu.concatenate %40, %41, %40 in 0 : vector<32x2xf32>, vector<64x2xf32>, vector<32x2xf32> -> vector<128x2xf32>
    %c0_26 = arith.constant 0 : index
    %c0_27 = arith.constant 0 : index
    %43 = vector.load %arg9[%c0_26, %c0_27] : memref<128x2xf32, #tpu.memory_space<vmem>>, vector<128x2xf32>
    tpu.vector_store %arg9[%c0_26, %c0_27], %42 {strides = array<i32>} : memref<128x2xf32, #tpu.memory_space<vmem>>, vector<128x2xf32>,
    %cst_28 = arith.constant 0.000000e+00 : f32
    %44 = vector.broadcast %cst_28 : f32 to vector<64x2xf32>
    %c5 = arith.constant 5 : index
    %c0_29 = arith.constant 0 : index
    %45 = vector.load %arg9[%c5, %c0_29] : memref<128x2xf32, #tpu.memory_space<vmem>>, vector<64x2xf32>
    %c0_30 = arith.constant 0 : index
    %c0_31 = arith.constant 0 : index
    %c0_32 = arith.constant 0 : index
    %46 = vector.load %arg7[%c0_30, %c0_31, %c0_32] : memref<49x64x2xf32, #tpu.memory_space<vmem>>, vector<1x64x2xf32>
    %47 = vector.shape_cast %46 : vector<1x64x2xf32> to vector<64x2xf32>
    %48 = arith.mulf %47, %45 : vector<64x2xf32>
    %49 = arith.addf %44, %48 : vector<64x2xf32>
    %c6 = arith.constant 6 : index
    %c0_33 = arith.constant 0 : index
    %50 = vector.load %arg9[%c6, %c0_33] : memref<128x2xf32, #tpu.memory_space<vmem>>, vector<64x2xf32>
    %c1 = arith.constant 1 : index
    %c0_34 = arith.constant 0 : index
    %c0_35 = arith.constant 0 : index
    %51 = vector.load %arg7[%c1, %c0_34, %c0_35] : memref<49x64x2xf32, #tpu.memory_space<vmem>>, vector<1x64x2xf32>
    %52 = vector.shape_cast %51 : vector<1x64x2xf32> to vector<64x2xf32>
    %53 = arith.mulf %52, %50 : vector<64x2xf32>
    %54 = arith.addf %49, %53 : vector<64x2xf32>
    %c7 = arith.constant 7 : index
    %c0_36 = arith.constant 0 : index
    %55 = vector.load %arg9[%c7, %c0_36] : memref<128x2xf32, #tpu.memory_space<vmem>>, vector<64x2xf32>
    %c2 = arith.constant 2 : index
    %c0_37 = arith.constant 0 : index
    %c0_38 = arith.constant 0 : index
    %56 = vector.load %arg7[%c2, %c0_37, %c0_38] : memref<49x64x2xf32, #tpu.memory_space<vmem>>, vector<1x64x2xf32>
    %57 = vector.shape_cast %56 : vector<1x64x2xf32> to vector<64x2xf32>
    %58 = arith.mulf %57, %55 : vector<64x2xf32>
    %59 = arith.addf %54, %58 : vector<64x2xf32>
    %c8 = arith.constant 8 : index
    %c0_39 = arith.constant 0 : index
    %60 = vector.load %arg9[%c8, %c0_39] : memref<128x2xf32, #tpu.memory_space<vmem>>, vector<64x2xf32>
    %c3 = arith.constant 3 : index
    %c0_40 = arith.constant 0 : index
    %c0_41 = arith.constant 0 : index
    %61 = vector.load %arg7[%c3, %c0_40, %c0_41] : memref<49x64x2xf32, #tpu.memory_space<vmem>>, vector<1x64x2xf32>
    %62 = vector.shape_cast %61 : vector<1x64x2xf32> to vector<64x2xf32>
    %63 = arith.mulf %62, %60 : vector<64x2xf32>
    %64 = arith.addf %59, %63 : vector<64x2xf32>
    %c9 = arith.constant 9 : index
    %c0_42 = arith.constant 0 : index
    %65 = vector.load %arg9[%c9, %c0_42] : memref<128x2xf32, #tpu.memory_space<vmem>>, vector<64x2xf32>
    %c4 = arith.constant 4 : index
    %c0_43 = arith.constant 0 : index
    %c0_44 = arith.constant 0 : index
    %66 = vector.load %arg7[%c4, %c0_43, %c0_44] : memref<49x64x2xf32, #tpu.memory_space<vmem>>, vector<1x64x2xf32>
    %67 = vector.shape_cast %66 : vector<1x64x2xf32> to vector<64x2xf32>
    %68 = arith.mulf %67, %65 : vector<64x2xf32>
    %69 = arith.addf %64, %68 : vector<64x2xf32>
    %c10 = arith.constant 10 : index
    %c0_45 = arith.constant 0 : index
    %70 = vector.load %arg9[%c10, %c0_45] : memref<128x2xf32, #tpu.memory_space<vmem>>, vector<64x2xf32>
    %c5_46 = arith.constant 5 : index
    %c0_47 = arith.constant 0 : index
    %c0_48 = arith.constant 0 : index
    %71 = vector.load %arg7[%c5_46, %c0_47, %c0_48] : memref<49x64x2xf32, #tpu.memory_space<vmem>>, vector<1x64x2xf32>
    %72 = vector.shape_cast %71 : vector<1x64x2xf32> to vector<64x2xf32>
    %73 = arith.mulf %72, %70 : vector<64x2xf32>
    %74 = arith.addf %69, %73 : vector<64x2xf32>
    %c11 = arith.constant 11 : index
    %c0_49 = arith.constant 0 : index
    %75 = vector.load %arg9[%c11, %c0_49] : memref<128x2xf32, #tpu.memory_space<vmem>>, vector<64x2xf32>
    %c6_50 = arith.constant 6 : index
    %c0_51 = arith.constant 0 : index
    %c0_52 = arith.constant 0 : index
    %76 = vector.load %arg7[%c6_50, %c0_51, %c0_52] : memref<49x64x2xf32, #tpu.memory_space<vmem>>, vector<1x64x2xf32>
    %77 = vector.shape_cast %76 : vector<1x64x2xf32> to vector<64x2xf32>
    %78 = arith.mulf %77, %75 : vector<64x2xf32>
    %79 = arith.addf %74, %78 : vector<64x2xf32>
    %c13 = arith.constant 13 : index
    %c0_53 = arith.constant 0 : index
    %80 = vector.load %arg9[%c13, %c0_53] : memref<128x2xf32, #tpu.memory_space<vmem>>, vector<64x2xf32>
    %c7_54 = arith.constant 7 : index
    %c0_55 = arith.constant 0 : index
    %c0_56 = arith.constant 0 : index
    %81 = vector.load %arg7[%c7_54, %c0_55, %c0_56] : memref<49x64x2xf32, #tpu.memory_space<vmem>>, vector<1x64x2xf32>
    %82 = vector.shape_cast %81 : vector<1x64x2xf32> to vector<64x2xf32>
    %83 = arith.mulf %82, %80 : vector<64x2xf32>
    %84 = arith.addf %79, %83 : vector<64x2xf32>
    %c14 = arith.constant 14 : index
    %c0_57 = arith.constant 0 : index
    %85 = vector.load %arg9[%c14, %c0_57] : memref<128x2xf32, #tpu.memory_space<vmem>>, vector<64x2xf32>
    %c8_58 = arith.constant 8 : index
    %c0_59 = arith.constant 0 : index
    %c0_60 = arith.constant 0 : index
    %86 = vector.load %arg7[%c8_58, %c0_59, %c0_60] : memref<49x64x2xf32, #tpu.memory_space<vmem>>, vector<1x64x2xf32>
    %87 = vector.shape_cast %86 : vector<1x64x2xf32> to vector<64x2xf32>
    %88 = arith.mulf %87, %85 : vector<64x2xf32>
    %89 = arith.addf %84, %88 : vector<64x2xf32>
    %c15 = arith.constant 15 : index
    %c0_61 = arith.constant 0 : index
    %90 = vector.load %arg9[%c15, %c0_61] : memref<128x2xf32, #tpu.memory_space<vmem>>, vector<64x2xf32>
    %c9_62 = arith.constant 9 : index
    %c0_63 = arith.constant 0 : index
    %c0_64 = arith.constant 0 : index
    %91 = vector.load %arg7[%c9_62, %c0_63, %c0_64] : memref<49x64x2xf32, #tpu.memory_space<vmem>>, vector<1x64x2xf32>
    %92 = vector.shape_cast %91 : vector<1x64x2xf32> to vector<64x2xf32>
    %93 = arith.mulf %92, %90 : vector<64x2xf32>
    %94 = arith.addf %89, %93 : vector<64x2xf32>
    %c16 = arith.constant 16 : index
    %c0_65 = arith.constant 0 : index
    %95 = vector.load %arg9[%c16, %c0_65] : memref<128x2xf32, #tpu.memory_space<vmem>>, vector<64x2xf32>
    %c10_66 = arith.constant 10 : index
    %c0_67 = arith.constant 0 : index
    %c0_68 = arith.constant 0 : index
    %96 = vector.load %arg7[%c10_66, %c0_67, %c0_68] : memref<49x64x2xf32, #tpu.memory_space<vmem>>, vector<1x64x2xf32>
    %97 = vector.shape_cast %96 : vector<1x64x2xf32> to vector<64x2xf32>
    %98 = arith.mulf %97, %95 : vector<64x2xf32>
    %99 = arith.addf %94, %98 : vector<64x2xf32>
    %c17 = arith.constant 17 : index
    %c0_69 = arith.constant 0 : index
    %100 = vector.load %arg9[%c17, %c0_69] : memref<128x2xf32, #tpu.memory_space<vmem>>, vector<64x2xf32>
    %c11_70 = arith.constant 11 : index
    %c0_71 = arith.constant 0 : index
    %c0_72 = arith.constant 0 : index
    %101 = vector.load %arg7[%c11_70, %c0_71, %c0_72] : memref<49x64x2xf32, #tpu.memory_space<vmem>>, vector<1x64x2xf32>
    %102 = vector.shape_cast %101 : vector<1x64x2xf32> to vector<64x2xf32>
    %103 = arith.mulf %102, %100 : vector<64x2xf32>
    %104 = arith.addf %99, %103 : vector<64x2xf32>
    %c18 = arith.constant 18 : index
    %c0_73 = arith.constant 0 : index
    %105 = vector.load %arg9[%c18, %c0_73] : memref<128x2xf32, #tpu.memory_space<vmem>>, vector<64x2xf32>
    %c12 = arith.constant 12 : index
    %c0_74 = arith.constant 0 : index
    %c0_75 = arith.constant 0 : index
    %106 = vector.load %arg7[%c12, %c0_74, %c0_75] : memref<49x64x2xf32, #tpu.memory_space<vmem>>, vector<1x64x2xf32>
    %107 = vector.shape_cast %106 : vector<1x64x2xf32> to vector<64x2xf32>
    %108 = arith.mulf %107, %105 : vector<64x2xf32>
    %109 = arith.addf %104, %108 : vector<64x2xf32>
    %c19 = arith.constant 19 : index
    %c0_76 = arith.constant 0 : index
    %110 = vector.load %arg9[%c19, %c0_76] : memref<128x2xf32, #tpu.memory_space<vmem>>, vector<64x2xf32>
    %c13_77 = arith.constant 13 : index
    %c0_78 = arith.constant 0 : index
    %c0_79 = arith.constant 0 : index
    %111 = vector.load %arg7[%c13_77, %c0_78, %c0_79] : memref<49x64x2xf32, #tpu.memory_space<vmem>>, vector<1x64x2xf32>
    %112 = vector.shape_cast %111 : vector<1x64x2xf32> to vector<64x2xf32>
    %113 = arith.mulf %112, %110 : vector<64x2xf32>
    %114 = arith.addf %109, %113 : vector<64x2xf32>
    %c21 = arith.constant 21 : index
    %c0_80 = arith.constant 0 : index
    %115 = vector.load %arg9[%c21, %c0_80] : memref<128x2xf32, #tpu.memory_space<vmem>>, vector<64x2xf32>
    %c14_81 = arith.constant 14 : index
    %c0_82 = arith.constant 0 : index
    %c0_83 = arith.constant 0 : index
    %116 = vector.load %arg7[%c14_81, %c0_82, %c0_83] : memref<49x64x2xf32, #tpu.memory_space<vmem>>, vector<1x64x2xf32>
    %117 = vector.shape_cast %116 : vector<1x64x2xf32> to vector<64x2xf32>
    %118 = arith.mulf %117, %115 : vector<64x2xf32>
    %119 = arith.addf %114, %118 : vector<64x2xf32>
    %c22 = arith.constant 22 : index
    %c0_84 = arith.constant 0 : index
    %120 = vector.load %arg9[%c22, %c0_84] : memref<128x2xf32, #tpu.memory_space<vmem>>, vector<64x2xf32>
    %c15_85 = arith.constant 15 : index
    %c0_86 = arith.constant 0 : index
    %c0_87 = arith.constant 0 : index
    %121 = vector.load %arg7[%c15_85, %c0_86, %c0_87] : memref<49x64x2xf32, #tpu.memory_space<vmem>>, vector<1x64x2xf32>
    %122 = vector.shape_cast %121 : vector<1x64x2xf32> to vector<64x2xf32>
    %123 = arith.mulf %122, %120 : vector<64x2xf32>
    %124 = arith.addf %119, %123 : vector<64x2xf32>
    %c23 = arith.constant 23 : index
    %c0_88 = arith.constant 0 : index
    %125 = vector.load %arg9[%c23, %c0_88] : memref<128x2xf32, #tpu.memory_space<vmem>>, vector<64x2xf32>
    %c16_89 = arith.constant 16 : index
    %c0_90 = arith.constant 0 : index
    %c0_91 = arith.constant 0 : index
    %126 = vector.load %arg7[%c16_89, %c0_90, %c0_91] : memref<49x64x2xf32, #tpu.memory_space<vmem>>, vector<1x64x2xf32>
    %127 = vector.shape_cast %126 : vector<1x64x2xf32> to vector<64x2xf32>
    %128 = arith.mulf %127, %125 : vector<64x2xf32>
    %129 = arith.addf %124, %128 : vector<64x2xf32>
    %c24 = arith.constant 24 : index
    %c0_92 = arith.constant 0 : index
    %130 = vector.load %arg9[%c24, %c0_92] : memref<128x2xf32, #tpu.memory_space<vmem>>, vector<64x2xf32>
    %c17_93 = arith.constant 17 : index
    %c0_94 = arith.constant 0 : index
    %c0_95 = arith.constant 0 : index
    %131 = vector.load %arg7[%c17_93, %c0_94, %c0_95] : memref<49x64x2xf32, #tpu.memory_space<vmem>>, vector<1x64x2xf32>
    %132 = vector.shape_cast %131 : vector<1x64x2xf32> to vector<64x2xf32>
    %133 = arith.mulf %132, %130 : vector<64x2xf32>
    %134 = arith.addf %129, %133 : vector<64x2xf32>
    %c25 = arith.constant 25 : index
    %c0_96 = arith.constant 0 : index
    %135 = vector.load %arg9[%c25, %c0_96] : memref<128x2xf32, #tpu.memory_space<vmem>>, vector<64x2xf32>
    %c18_97 = arith.constant 18 : index
    %c0_98 = arith.constant 0 : index
    %c0_99 = arith.constant 0 : index
    %136 = vector.load %arg7[%c18_97, %c0_98, %c0_99] : memref<49x64x2xf32, #tpu.memory_space<vmem>>, vector<1x64x2xf32>
    %137 = vector.shape_cast %136 : vector<1x64x2xf32> to vector<64x2xf32>
    %138 = arith.mulf %137, %135 : vector<64x2xf32>
    %139 = arith.addf %134, %138 : vector<64x2xf32>
    %c26 = arith.constant 26 : index
    %c0_100 = arith.constant 0 : index
    %140 = vector.load %arg9[%c26, %c0_100] : memref<128x2xf32, #tpu.memory_space<vmem>>, vector<64x2xf32>
    %c19_101 = arith.constant 19 : index
    %c0_102 = arith.constant 0 : index
    %c0_103 = arith.constant 0 : index
    %141 = vector.load %arg7[%c19_101, %c0_102, %c0_103] : memref<49x64x2xf32, #tpu.memory_space<vmem>>, vector<1x64x2xf32>
    %142 = vector.shape_cast %141 : vector<1x64x2xf32> to vector<64x2xf32>
    %143 = arith.mulf %142, %140 : vector<64x2xf32>
    %144 = arith.addf %139, %143 : vector<64x2xf32>
    %c27 = arith.constant 27 : index
    %c0_104 = arith.constant 0 : index
    %145 = vector.load %arg9[%c27, %c0_104] : memref<128x2xf32, #tpu.memory_space<vmem>>, vector<64x2xf32>
    %c20 = arith.constant 20 : index
    %c0_105 = arith.constant 0 : index
    %c0_106 = arith.constant 0 : index
    %146 = vector.load %arg7[%c20, %c0_105, %c0_106] : memref<49x64x2xf32, #tpu.memory_space<vmem>>, vector<1x64x2xf32>
    %147 = vector.shape_cast %146 : vector<1x64x2xf32> to vector<64x2xf32>
    %148 = arith.mulf %147, %145 : vector<64x2xf32>
    %149 = arith.addf %144, %148 : vector<64x2xf32>
    %c29 = arith.constant 29 : index
    %c0_107 = arith.constant 0 : index
    %150 = vector.load %arg9[%c29, %c0_107] : memref<128x2xf32, #tpu.memory_space<vmem>>, vector<64x2xf32>
    %c21_108 = arith.constant 21 : index
    %c0_109 = arith.constant 0 : index
    %c0_110 = arith.constant 0 : index
    %151 = vector.load %arg7[%c21_108, %c0_109, %c0_110] : memref<49x64x2xf32, #tpu.memory_space<vmem>>, vector<1x64x2xf32>
    %152 = vector.shape_cast %151 : vector<1x64x2xf32> to vector<64x2xf32>
    %153 = arith.mulf %152, %150 : vector<64x2xf32>
    %154 = arith.addf %149, %153 : vector<64x2xf32>
    %c30 = arith.constant 30 : index
    %c0_111 = arith.constant 0 : index
    %155 = vector.load %arg9[%c30, %c0_111] : memref<128x2xf32, #tpu.memory_space<vmem>>, vector<64x2xf32>
    %c22_112 = arith.constant 22 : index
    %c0_113 = arith.constant 0 : index
    %c0_114 = arith.constant 0 : index
    %156 = vector.load %arg7[%c22_112, %c0_113, %c0_114] : memref<49x64x2xf32, #tpu.memory_space<vmem>>, vector<1x64x2xf32>
    %157 = vector.shape_cast %156 : vector<1x64x2xf32> to vector<64x2xf32>
    %158 = arith.mulf %157, %155 : vector<64x2xf32>
    %159 = arith.addf %154, %158 : vector<64x2xf32>
    %c31 = arith.constant 31 : index
    %c0_115 = arith.constant 0 : index
    %160 = vector.load %arg9[%c31, %c0_115] : memref<128x2xf32, #tpu.memory_space<vmem>>, vector<64x2xf32>
    %c23_116 = arith.constant 23 : index
    %c0_117 = arith.constant 0 : index
    %c0_118 = arith.constant 0 : index
    %161 = vector.load %arg7[%c23_116, %c0_117, %c0_118] : memref<49x64x2xf32, #tpu.memory_space<vmem>>, vector<1x64x2xf32>
    %162 = vector.shape_cast %161 : vector<1x64x2xf32> to vector<64x2xf32>
    %163 = arith.mulf %162, %160 : vector<64x2xf32>
    %164 = arith.addf %159, %163 : vector<64x2xf32>
    %c32 = arith.constant 32 : index
    %c0_119 = arith.constant 0 : index
    %165 = vector.load %arg9[%c32, %c0_119] : memref<128x2xf32, #tpu.memory_space<vmem>>, vector<64x2xf32>
    %c24_120 = arith.constant 24 : index
    %c0_121 = arith.constant 0 : index
    %c0_122 = arith.constant 0 : index
    %166 = vector.load %arg7[%c24_120, %c0_121, %c0_122] : memref<49x64x2xf32, #tpu.memory_space<vmem>>, vector<1x64x2xf32>
    %167 = vector.shape_cast %166 : vector<1x64x2xf32> to vector<64x2xf32>
    %168 = arith.mulf %167, %165 : vector<64x2xf32>
    %169 = arith.addf %164, %168 : vector<64x2xf32>
    %c33 = arith.constant 33 : index
    %c0_123 = arith.constant 0 : index
    %170 = vector.load %arg9[%c33, %c0_123] : memref<128x2xf32, #tpu.memory_space<vmem>>, vector<64x2xf32>
    %c25_124 = arith.constant 25 : index
    %c0_125 = arith.constant 0 : index
    %c0_126 = arith.constant 0 : index
    %171 = vector.load %arg7[%c25_124, %c0_125, %c0_126] : memref<49x64x2xf32, #tpu.memory_space<vmem>>, vector<1x64x2xf32>
    %172 = vector.shape_cast %171 : vector<1x64x2xf32> to vector<64x2xf32>
    %173 = arith.mulf %172, %170 : vector<64x2xf32>
    %174 = arith.addf %169, %173 : vector<64x2xf32>
    %c34 = arith.constant 34 : index
    %c0_127 = arith.constant 0 : index
    %175 = vector.load %arg9[%c34, %c0_127] : memref<128x2xf32, #tpu.memory_space<vmem>>, vector<64x2xf32>
    %c26_128 = arith.constant 26 : index
    %c0_129 = arith.constant 0 : index
    %c0_130 = arith.constant 0 : index
    %176 = vector.load %arg7[%c26_128, %c0_129, %c0_130] : memref<49x64x2xf32, #tpu.memory_space<vmem>>, vector<1x64x2xf32>
    %177 = vector.shape_cast %176 : vector<1x64x2xf32> to vector<64x2xf32>
    %178 = arith.mulf %177, %175 : vector<64x2xf32>
    %179 = arith.addf %174, %178 : vector<64x2xf32>
    %c35 = arith.constant 35 : index
    %c0_131 = arith.constant 0 : index
    %180 = vector.load %arg9[%c35, %c0_131] : memref<128x2xf32, #tpu.memory_space<vmem>>, vector<64x2xf32>
    %c27_132 = arith.constant 27 : index
    %c0_133 = arith.constant 0 : index
    %c0_134 = arith.constant 0 : index
    %181 = vector.load %arg7[%c27_132, %c0_133, %c0_134] : memref<49x64x2xf32, #tpu.memory_space<vmem>>, vector<1x64x2xf32>
    %182 = vector.shape_cast %181 : vector<1x64x2xf32> to vector<64x2xf32>
    %183 = arith.mulf %182, %180 : vector<64x2xf32>
    %184 = arith.addf %179, %183 : vector<64x2xf32>
    %c37 = arith.constant 37 : index
    %c0_135 = arith.constant 0 : index
    %185 = vector.load %arg9[%c37, %c0_135] : memref<128x2xf32, #tpu.memory_space<vmem>>, vector<64x2xf32>
    %c28 = arith.constant 28 : index
    %c0_136 = arith.constant 0 : index
    %c0_137 = arith.constant 0 : index
    %186 = vector.load %arg7[%c28, %c0_136, %c0_137] : memref<49x64x2xf32, #tpu.memory_space<vmem>>, vector<1x64x2xf32>
    %187 = vector.shape_cast %186 : vector<1x64x2xf32> to vector<64x2xf32>
    %188 = arith.mulf %187, %185 : vector<64x2xf32>
    %189 = arith.addf %184, %188 : vector<64x2xf32>
    %c38 = arith.constant 38 : index
    %c0_138 = arith.constant 0 : index
    %190 = vector.load %arg9[%c38, %c0_138] : memref<128x2xf32, #tpu.memory_space<vmem>>, vector<64x2xf32>
    %c29_139 = arith.constant 29 : index
    %c0_140 = arith.constant 0 : index
    %c0_141 = arith.constant 0 : index
    %191 = vector.load %arg7[%c29_139, %c0_140, %c0_141] : memref<49x64x2xf32, #tpu.memory_space<vmem>>, vector<1x64x2xf32>
    %192 = vector.shape_cast %191 : vector<1x64x2xf32> to vector<64x2xf32>
    %193 = arith.mulf %192, %190 : vector<64x2xf32>
    %194 = arith.addf %189, %193 : vector<64x2xf32>
    %c39 = arith.constant 39 : index
    %c0_142 = arith.constant 0 : index
    %195 = vector.load %arg9[%c39, %c0_142] : memref<128x2xf32, #tpu.memory_space<vmem>>, vector<64x2xf32>
    %c30_143 = arith.constant 30 : index
    %c0_144 = arith.constant 0 : index
    %c0_145 = arith.constant 0 : index
    %196 = vector.load %arg7[%c30_143, %c0_144, %c0_145] : memref<49x64x2xf32, #tpu.memory_space<vmem>>, vector<1x64x2xf32>
    %197 = vector.shape_cast %196 : vector<1x64x2xf32> to vector<64x2xf32>
    %198 = arith.mulf %197, %195 : vector<64x2xf32>
    %199 = arith.addf %194, %198 : vector<64x2xf32>
    %c40 = arith.constant 40 : index
    %c0_146 = arith.constant 0 : index
    %200 = vector.load %arg9[%c40, %c0_146] : memref<128x2xf32, #tpu.memory_space<vmem>>, vector<64x2xf32>
    %c31_147 = arith.constant 31 : index
    %c0_148 = arith.constant 0 : index
    %c0_149 = arith.constant 0 : index
    %201 = vector.load %arg7[%c31_147, %c0_148, %c0_149] : memref<49x64x2xf32, #tpu.memory_space<vmem>>, vector<1x64x2xf32>
    %202 = vector.shape_cast %201 : vector<1x64x2xf32> to vector<64x2xf32>
    %203 = arith.mulf %202, %200 : vector<64x2xf32>
    %204 = arith.addf %199, %203 : vector<64x2xf32>
    %c41 = arith.constant 41 : index
    %c0_150 = arith.constant 0 : index
    %205 = vector.load %arg9[%c41, %c0_150] : memref<128x2xf32, #tpu.memory_space<vmem>>, vector<64x2xf32>
    %c32_151 = arith.constant 32 : index
    %c0_152 = arith.constant 0 : index
    %c0_153 = arith.constant 0 : index
    %206 = vector.load %arg7[%c32_151, %c0_152, %c0_153] : memref<49x64x2xf32, #tpu.memory_space<vmem>>, vector<1x64x2xf32>
    %207 = vector.shape_cast %206 : vector<1x64x2xf32> to vector<64x2xf32>
    %208 = arith.mulf %207, %205 : vector<64x2xf32>
    %209 = arith.addf %204, %208 : vector<64x2xf32>
    %c42 = arith.constant 42 : index
    %c0_154 = arith.constant 0 : index
    %210 = vector.load %arg9[%c42, %c0_154] : memref<128x2xf32, #tpu.memory_space<vmem>>, vector<64x2xf32>
    %c33_155 = arith.constant 33 : index
    %c0_156 = arith.constant 0 : index
    %c0_157 = arith.constant 0 : index
    %211 = vector.load %arg7[%c33_155, %c0_156, %c0_157] : memref<49x64x2xf32, #tpu.memory_space<vmem>>, vector<1x64x2xf32>
    %212 = vector.shape_cast %211 : vector<1x64x2xf32> to vector<64x2xf32>
    %213 = arith.mulf %212, %210 : vector<64x2xf32>
    %214 = arith.addf %209, %213 : vector<64x2xf32>
    %c43 = arith.constant 43 : index
    %c0_158 = arith.constant 0 : index
    %215 = vector.load %arg9[%c43, %c0_158] : memref<128x2xf32, #tpu.memory_space<vmem>>, vector<64x2xf32>
    %c34_159 = arith.constant 34 : index
    %c0_160 = arith.constant 0 : index
    %c0_161 = arith.constant 0 : index
    %216 = vector.load %arg7[%c34_159, %c0_160, %c0_161] : memref<49x64x2xf32, #tpu.memory_space<vmem>>, vector<1x64x2xf32>
    %217 = vector.shape_cast %216 : vector<1x64x2xf32> to vector<64x2xf32>
    %218 = arith.mulf %217, %215 : vector<64x2xf32>
    %219 = arith.addf %214, %218 : vector<64x2xf32>
    %c45 = arith.constant 45 : index
    %c0_162 = arith.constant 0 : index
    %220 = vector.load %arg9[%c45, %c0_162] : memref<128x2xf32, #tpu.memory_space<vmem>>, vector<64x2xf32>
    %c35_163 = arith.constant 35 : index
    %c0_164 = arith.constant 0 : index
    %c0_165 = arith.constant 0 : index
    %221 = vector.load %arg7[%c35_163, %c0_164, %c0_165] : memref<49x64x2xf32, #tpu.memory_space<vmem>>, vector<1x64x2xf32>
    %222 = vector.shape_cast %221 : vector<1x64x2xf32> to vector<64x2xf32>
    %223 = arith.mulf %222, %220 : vector<64x2xf32>
    %224 = arith.addf %219, %223 : vector<64x2xf32>
    %c46 = arith.constant 46 : index
    %c0_166 = arith.constant 0 : index
    %225 = vector.load %arg9[%c46, %c0_166] : memref<128x2xf32, #tpu.memory_space<vmem>>, vector<64x2xf32>
    %c36 = arith.constant 36 : index
    %c0_167 = arith.constant 0 : index
    %c0_168 = arith.constant 0 : index
    %226 = vector.load %arg7[%c36, %c0_167, %c0_168] : memref<49x64x2xf32, #tpu.memory_space<vmem>>, vector<1x64x2xf32>
    %227 = vector.shape_cast %226 : vector<1x64x2xf32> to vector<64x2xf32>
    %228 = arith.mulf %227, %225 : vector<64x2xf32>
    %229 = arith.addf %224, %228 : vector<64x2xf32>
    %c47 = arith.constant 47 : index
    %c0_169 = arith.constant 0 : index
    %230 = vector.load %arg9[%c47, %c0_169] : memref<128x2xf32, #tpu.memory_space<vmem>>, vector<64x2xf32>
    %c37_170 = arith.constant 37 : index
    %c0_171 = arith.constant 0 : index
    %c0_172 = arith.constant 0 : index
    %231 = vector.load %arg7[%c37_170, %c0_171, %c0_172] : memref<49x64x2xf32, #tpu.memory_space<vmem>>, vector<1x64x2xf32>
    %232 = vector.shape_cast %231 : vector<1x64x2xf32> to vector<64x2xf32>
    %233 = arith.mulf %232, %230 : vector<64x2xf32>
    %234 = arith.addf %229, %233 : vector<64x2xf32>
    %c48 = arith.constant 48 : index
    %c0_173 = arith.constant 0 : index
    %235 = vector.load %arg9[%c48, %c0_173] : memref<128x2xf32, #tpu.memory_space<vmem>>, vector<64x2xf32>
    %c38_174 = arith.constant 38 : index
    %c0_175 = arith.constant 0 : index
    %c0_176 = arith.constant 0 : index
    %236 = vector.load %arg7[%c38_174, %c0_175, %c0_176] : memref<49x64x2xf32, #tpu.memory_space<vmem>>, vector<1x64x2xf32>
    %237 = vector.shape_cast %236 : vector<1x64x2xf32> to vector<64x2xf32>
    %238 = arith.mulf %237, %235 : vector<64x2xf32>
    %239 = arith.addf %234, %238 : vector<64x2xf32>
    %c49 = arith.constant 49 : index
    %c0_177 = arith.constant 0 : index
    %240 = vector.load %arg9[%c49, %c0_177] : memref<128x2xf32, #tpu.memory_space<vmem>>, vector<64x2xf32>
    %c39_178 = arith.constant 39 : index
    %c0_179 = arith.constant 0 : index
    %c0_180 = arith.constant 0 : index
    %241 = vector.load %arg7[%c39_178, %c0_179, %c0_180] : memref<49x64x2xf32, #tpu.memory_space<vmem>>, vector<1x64x2xf32>
    %242 = vector.shape_cast %241 : vector<1x64x2xf32> to vector<64x2xf32>
    %243 = arith.mulf %242, %240 : vector<64x2xf32>
    %244 = arith.addf %239, %243 : vector<64x2xf32>
    %c50 = arith.constant 50 : index
    %c0_181 = arith.constant 0 : index
    %245 = vector.load %arg9[%c50, %c0_181] : memref<128x2xf32, #tpu.memory_space<vmem>>, vector<64x2xf32>
    %c40_182 = arith.constant 40 : index
    %c0_183 = arith.constant 0 : index
    %c0_184 = arith.constant 0 : index
    %246 = vector.load %arg7[%c40_182, %c0_183, %c0_184] : memref<49x64x2xf32, #tpu.memory_space<vmem>>, vector<1x64x2xf32>
    %247 = vector.shape_cast %246 : vector<1x64x2xf32> to vector<64x2xf32>
    %248 = arith.mulf %247, %245 : vector<64x2xf32>
    %249 = arith.addf %244, %248 : vector<64x2xf32>
    %c51 = arith.constant 51 : index
    %c0_185 = arith.constant 0 : index
    %250 = vector.load %arg9[%c51, %c0_185] : memref<128x2xf32, #tpu.memory_space<vmem>>, vector<64x2xf32>
    %c41_186 = arith.constant 41 : index
    %c0_187 = arith.constant 0 : index
    %c0_188 = arith.constant 0 : index
    %251 = vector.load %arg7[%c41_186, %c0_187, %c0_188] : memref<49x64x2xf32, #tpu.memory_space<vmem>>, vector<1x64x2xf32>
    %252 = vector.shape_cast %251 : vector<1x64x2xf32> to vector<64x2xf32>
    %253 = arith.mulf %252, %250 : vector<64x2xf32>
    %254 = arith.addf %249, %253 : vector<64x2xf32>
    %c53 = arith.constant 53 : index
    %c0_189 = arith.constant 0 : index
    %255 = vector.load %arg9[%c53, %c0_189] : memref<128x2xf32, #tpu.memory_space<vmem>>, vector<64x2xf32>
    %c42_190 = arith.constant 42 : index
    %c0_191 = arith.constant 0 : index
    %c0_192 = arith.constant 0 : index
    %256 = vector.load %arg7[%c42_190, %c0_191, %c0_192] : memref<49x64x2xf32, #tpu.memory_space<vmem>>, vector<1x64x2xf32>
    %257 = vector.shape_cast %256 : vector<1x64x2xf32> to vector<64x2xf32>
    %258 = arith.mulf %257, %255 : vector<64x2xf32>
    %259 = arith.addf %254, %258 : vector<64x2xf32>
    %c54 = arith.constant 54 : index
    %c0_193 = arith.constant 0 : index
    %260 = vector.load %arg9[%c54, %c0_193] : memref<128x2xf32, #tpu.memory_space<vmem>>, vector<64x2xf32>
    %c43_194 = arith.constant 43 : index
    %c0_195 = arith.constant 0 : index
    %c0_196 = arith.constant 0 : index
    %261 = vector.load %arg7[%c43_194, %c0_195, %c0_196] : memref<49x64x2xf32, #tpu.memory_space<vmem>>, vector<1x64x2xf32>
    %262 = vector.shape_cast %261 : vector<1x64x2xf32> to vector<64x2xf32>
    %263 = arith.mulf %262, %260 : vector<64x2xf32>
    %264 = arith.addf %259, %263 : vector<64x2xf32>
    %c55 = arith.constant 55 : index
    %c0_197 = arith.constant 0 : index
    %265 = vector.load %arg9[%c55, %c0_197] : memref<128x2xf32, #tpu.memory_space<vmem>>, vector<64x2xf32>
    %c44 = arith.constant 44 : index
    %c0_198 = arith.constant 0 : index
    %c0_199 = arith.constant 0 : index
    %266 = vector.load %arg7[%c44, %c0_198, %c0_199] : memref<49x64x2xf32, #tpu.memory_space<vmem>>, vector<1x64x2xf32>
    %267 = vector.shape_cast %266 : vector<1x64x2xf32> to vector<64x2xf32>
    %268 = arith.mulf %267, %265 : vector<64x2xf32>
    %269 = arith.addf %264, %268 : vector<64x2xf32>
    %c56 = arith.constant 56 : index
    %c0_200 = arith.constant 0 : index
    %270 = vector.load %arg9[%c56, %c0_200] : memref<128x2xf32, #tpu.memory_space<vmem>>, vector<64x2xf32>
    %c45_201 = arith.constant 45 : index
    %c0_202 = arith.constant 0 : index
    %c0_203 = arith.constant 0 : index
    %271 = vector.load %arg7[%c45_201, %c0_202, %c0_203] : memref<49x64x2xf32, #tpu.memory_space<vmem>>, vector<1x64x2xf32>
    %272 = vector.shape_cast %271 : vector<1x64x2xf32> to vector<64x2xf32>
    %273 = arith.mulf %272, %270 : vector<64x2xf32>
    %274 = arith.addf %269, %273 : vector<64x2xf32>
    %c57 = arith.constant 57 : index
    %c0_204 = arith.constant 0 : index
    %275 = vector.load %arg9[%c57, %c0_204] : memref<128x2xf32, #tpu.memory_space<vmem>>, vector<64x2xf32>
    %c46_205 = arith.constant 46 : index
    %c0_206 = arith.constant 0 : index
    %c0_207 = arith.constant 0 : index
    %276 = vector.load %arg7[%c46_205, %c0_206, %c0_207] : memref<49x64x2xf32, #tpu.memory_space<vmem>>, vector<1x64x2xf32>
    %277 = vector.shape_cast %276 : vector<1x64x2xf32> to vector<64x2xf32>
    %278 = arith.mulf %277, %275 : vector<64x2xf32>
    %279 = arith.addf %274, %278 : vector<64x2xf32>
    %c58 = arith.constant 58 : index
    %c0_208 = arith.constant 0 : index
    %280 = vector.load %arg9[%c58, %c0_208] : memref<128x2xf32, #tpu.memory_space<vmem>>, vector<64x2xf32>
    %c47_209 = arith.constant 47 : index
    %c0_210 = arith.constant 0 : index
    %c0_211 = arith.constant 0 : index
    %281 = vector.load %arg7[%c47_209, %c0_210, %c0_211] : memref<49x64x2xf32, #tpu.memory_space<vmem>>, vector<1x64x2xf32>
    %282 = vector.shape_cast %281 : vector<1x64x2xf32> to vector<64x2xf32>
    %283 = arith.mulf %282, %280 : vector<64x2xf32>
    %284 = arith.addf %279, %283 : vector<64x2xf32>
    %c59 = arith.constant 59 : index
    %c0_212 = arith.constant 0 : index
    %285 = vector.load %arg9[%c59, %c0_212] : memref<128x2xf32, #tpu.memory_space<vmem>>, vector<64x2xf32>
    %c48_213 = arith.constant 48 : index
    %c0_214 = arith.constant 0 : index
    %c0_215 = arith.constant 0 : index
    %286 = vector.load %arg7[%c48_213, %c0_214, %c0_215] : memref<49x64x2xf32, #tpu.memory_space<vmem>>, vector<1x64x2xf32>
    %287 = vector.shape_cast %286 : vector<1x64x2xf32> to vector<64x2xf32>
    %288 = arith.mulf %287, %285 : vector<64x2xf32>
    %289 = arith.addf %284, %288 : vector<64x2xf32>
    %290 = vector.extract_strided_slice %289 {offsets = [0, 0], sizes = [64, 1], strides = [1, 1]} : vector<64x2xf32> to vector<64x1xf32>
    %291 = vector.extract_strided_slice %289 {offsets = [0, 1], sizes = [64, 1], strides = [1, 1]} : vector<64x2xf32> to vector<64x1xf32>
    %292 = arith.addf %290, %291 : vector<64x1xf32>
    %293 = arith.negf %292 : vector<64x1xf32>
    %294 = math.exp %293 : vector<64x1xf32>
    %cst_216 = arith.constant 1.000000e+00 : f32
    %295 = vector.broadcast %cst_216 : f32 to vector<64x1xf32>
    %296 = arith.addf %295, %294 : vector<64x1xf32>
    %297 = arith.divf %295, %296 : vector<64x1xf32>
    %298 = vector.broadcast %297 : vector<64x1xf32> to vector<64x32xf32>
    %299 = arith.mulf %33, %298 : vector<64x32xf32>
    %c0_217 = arith.constant 0 : index
    %c0_218 = arith.constant 0 : index
    %c0_219 = arith.constant 0 : index
    %300 = vector.load %arg8[%c0_217, %c0_218, %c0_219] : memref<1x64x32xf32, #tpu.memory_space<vmem>>, vector<1x64x32xf32>
    %301 = vector.shape_cast %300 : vector<1x64x32xf32> to vector<64x32xf32>
    %302 = vector.shape_cast %299 : vector<64x32xf32> to vector<1x64x32xf32>
    tpu.vector_store %arg8[%c0_217, %c0_218, %c0_219], %302 {strides = array<i32>} : memref<1x64x32xf32, #tpu.memory_space<vmem>>, vector<1x64x32xf32>,
    return
  }
  func.func @transform_0(%arg0: i32) -> (i32, i32, i32) {
    %c0_i32 = arith.constant 0 : i32
    %c0_i32_0 = arith.constant 0 : i32
    %c0_i32_1 = arith.constant 0 : i32
    return %arg0, %c0_i32, %c0_i32_0 : i32, i32, i32
  }
  func.func @transform_1(%arg0: i32) -> (i32, i32, i32) {
    %c0_i32 = arith.constant 0 : i32
    %c0_i32_0 = arith.constant 0 : i32
    %c0_i32_1 = arith.constant 0 : i32
    return %arg0, %c0_i32, %c0_i32_0 : i32, i32, i32
  }
  func.func @transform_2(%arg0: i32) -> (i32, i32) {
    %c0_i32 = arith.constant 0 : i32
    %c0_i32_0 = arith.constant 0 : i32
    %c0_i32_1 = arith.constant 0 : i32
    return %c0_i32, %c0_i32_0 : i32, i32
  }
  func.func @transform_3(%arg0: i32) -> (i32, i32) {
    %c0_i32 = arith.constant 0 : i32
    %c0_i32_0 = arith.constant 0 : i32
    %c0_i32_1 = arith.constant 0 : i32
    return %c0_i32, %c0_i32_0 : i32, i32
  }
  func.func @transform_4(%arg0: i32) -> (i32, i32) {
    %c0_i32 = arith.constant 0 : i32
    %c0_i32_0 = arith.constant 0 : i32
    %c0_i32_1 = arith.constant 0 : i32
    return %c0_i32, %c0_i32_0 : i32, i32
  }
  func.func @transform_5(%arg0: i32) -> (i32, i32) {
    %c0_i32 = arith.constant 0 : i32
    %c0_i32_0 = arith.constant 0 : i32
    %c0_i32_1 = arith.constant 0 : i32
    return %c0_i32, %c0_i32_0 : i32, i32
  }
  func.func @transform_6(%arg0: i32) -> (i32, i32, i32) {
    %c0_i32 = arith.constant 0 : i32
    %c0_i32_0 = arith.constant 0 : i32
    %c0_i32_1 = arith.constant 0 : i32
    %c0_i32_2 = arith.constant 0 : i32
    return %c0_i32, %c0_i32_0, %c0_i32_1 : i32, i32, i32
  }
  func.func @transform_7(%arg0: i32) -> (i32, i32, i32) {
    %c0_i32 = arith.constant 0 : i32
    %c0_i32_0 = arith.constant 0 : i32
    %c0_i32_1 = arith.constant 0 : i32
    return %arg0, %c0_i32, %c0_i32_0 : i32, i32, i32
  }
}

</mosaic_0001>

<llo_original>
// kernel: tpu_custom_call.1
$region0: #{tpu_custom_call.1}
  #allocation0 [shape = 'u32[]', space=smem, size = 0x4, offset = 0x4, fixed_abs, tag = 'smem constant byte address 0x4 - core index']
  #allocation1 [shape = 'u32[144,128]{1,0:T(1,128)}', space=vmem, size = 0x12000, scoped, tag = 'internal scratch']
  #allocation2 [shape = 'f32[128,2]{1,0:T(8,128)}', space=vmem, size = 0x10000, scoped, tag = 'scratch operand']
  %s0 = inlined_call_operand.vmem [shape: f32[2,64,32], index: 0, kind: input, shape index: {}]
  %s1 = inlined_call_operand.vmem [shape: f32[2,64,32], index: 1, kind: input, shape index: {}]
  %s2 = inlined_call_operand.vmem [shape: f32[64,32], index: 2, kind: input, shape index: {}]
  %s3 = inlined_call_operand.vmem [shape: f32[1,32], index: 3, kind: input, shape index: {}]
  %s4 = inlined_call_operand.vmem [shape: f32[32,2], index: 4, kind: input, shape index: {}]
  %s5 = inlined_call_operand.vmem [shape: f32[2,32], index: 5, kind: input, shape index: {}]
  %s6 = inlined_call_operand.vmem [shape: f32[49,64,2], index: 6, kind: input, shape index: {}]
  %s7 = inlined_call_operand.vmem [shape: f32[2,64,32], index: 7, kind: output, shape index: {}]
  %s8 = sld [smem:[#allocation0]]
  $region61: #{tpu_custom_call.1} parent=0
    _
  %s10 = ssub.s32 1, %s8
  %s11 = scalar_select 0, %s10, %s8
  loop: start=0, step=1, limit=4
  $region2: #{tpu_custom_call.1} parent=0 // loop_pre_header
    _
  $region3: #{tpu_custom_call.1} parent=0 // loop_header
    %s13 = sphi 0, %s17
    %p14 = scmp.ge.s32.totalorder %s13, 4
    %s23 = sphi 0, %s25
    %s26 = sphi 0, %s23
    %s27 = sphi 0, %s26
    %s43 = sphi 0, %s27
    %s49 = sphi 0, %s51
    %s52 = sphi 0, %s49
    %s53 = sphi 0, %s52
    %s69 = sphi 0, %s53
    %s73 = sphi 0, %s73
    %s75 = sphi 0, %s73
    %s76 = sphi 0, %s75
    %s90 = sphi 0, %s76
    %s94 = sphi 0, %s94
    %s96 = sphi 0, %s94
    %s97 = sphi 0, %s96
    %s111 = sphi 0, %s97
    %s115 = sphi 0, %s115
    %s117 = sphi 0, %s115
    %s118 = sphi 0, %s117
    %s132 = sphi 0, %s118
    %s136 = sphi 0, %s136
    %s138 = sphi 0, %s136
    %s139 = sphi 0, %s138
    %s153 = sphi 0, %s139
    %s157 = sphi 0, %s157
    %s159 = sphi 0, %s157
    %s160 = sphi 0, %s159
    %s174 = sphi 0, %s160
    %s180 = sphi 0, %s182
    %s183 = sphi 0, %s180
    %s184 = sphi 0, %s183
    %s200 = sphi 0, %s184
  $region4: #{tpu_custom_call.1} parent=0 // loop_header_branch
    %16 = sbr.rel (%p14) target = $region8
  $region5: #{tpu_custom_call.1} parent=0 // loop_body
    %s18 = ssub.s32 %s13, 1
    %s19 = ssub.s32 %s13, 2
    %s20 = sadd.s32 %s13, 1
    %s21 = ssub.s32 %s13, %s20
    %p22 = scmp.eq.s32.totalorder %s21, 0
    %s24 = sadd.s32 %s23, 1
    %s25 = scalar_select %p22, %s23, %s24
    %p28 = pneg %p22
    %p29 = scmp.eq.s32.totalorder %s13, 1
    %p30 = por %p28, %p29
    %p31 = scmp.ne.s32.totalorder %s23, %s26
    %p32 = scmp.eq.s32.totalorder %s13, 0
    %p33 = por %p31, %p32
    %p34 = scmp.ne.s32.totalorder %s23, %s26
    %p35 = scmp.eq.s32.totalorder %s18, 1
    %p36 = por %p34, %p35
    %p37 = scmp.ne.s32.totalorder %s26, %s27
    %p38 = scmp.eq.s32.totalorder %s18, 0
    %p39 = por %p37, %p38
    %p40 = scmp.ne.s32.totalorder %s26, %s27
    %p41 = scmp.eq.s32.totalorder %s19, 1
    %p42 = por %p40, %p41
    %p44 = scmp.ne.s32.totalorder %s27, %s43
    %p45 = scmp.eq.s32.totalorder %s19, 0
    %p46 = por %p44, %p45
    %s47 = ssub.s32 %s13, %s20
    %p48 = scmp.eq.s32.totalorder %s47, 0
    %s50 = sadd.s32 %s49, 1
    %s51 = scalar_select %p48, %s49, %s50
    %p54 = pneg %p48
    %p55 = scmp.eq.s32.totalorder %s13, 1
    %p56 = por %p54, %p55
    %p57 = scmp.ne.s32.totalorder %s49, %s52
    %p58 = scmp.eq.s32.totalorder %s13, 0
    %p59 = por %p57, %p58
    %p60 = scmp.ne.s32.totalorder %s49, %s52
    %p61 = scmp.eq.s32.totalorder %s18, 1
    %p62 = por %p60, %p61
    %p63 = scmp.ne.s32.totalorder %s52, %s53
    %p64 = scmp.eq.s32.totalorder %s18, 0
    %p65 = por %p63, %p64
    %p66 = scmp.ne.s32.totalorder %s52, %s53
    %p67 = scmp.eq.s32.totalorder %s19, 1
    %p68 = por %p66, %p67
    %p70 = scmp.ne.s32.totalorder %s53, %s69
    %p71 = scmp.eq.s32.totalorder %s19, 0
    %p72 = por %p70, %p71
    %s74 = sadd.s32 %s73, 1
    %p77 = scmp.eq.s32.totalorder %s13, 1
    %p78 = scmp.ne.s32.totalorder %s73, %s75
    %p79 = scmp.eq.s32.totalorder %s13, 0
    %p80 = por %p78, %p79
    %p81 = scmp.ne.s32.totalorder %s73, %s75
    %p82 = scmp.eq.s32.totalorder %s18, 1
    %p83 = por %p81, %p82
    %p84 = scmp.ne.s32.totalorder %s75, %s76
    %p85 = scmp.eq.s32.totalorder %s18, 0
    %p86 = por %p84, %p85
    %p87 = scmp.ne.s32.totalorder %s75, %s76
    %p88 = scmp.eq.s32.totalorder %s19, 1
    %p89 = por %p87, %p88
    %p91 = scmp.ne.s32.totalorder %s76, %s90
    %p92 = scmp.eq.s32.totalorder %s19, 0
    %p93 = por %p91, %p92
    %s95 = sadd.s32 %s94, 1
    %p98 = scmp.eq.s32.totalorder %s13, 1
    %p99 = scmp.ne.s32.totalorder %s94, %s96
    %p100 = scmp.eq.s32.totalorder %s13, 0
    %p101 = por %p99, %p100
    %p102 = scmp.ne.s32.totalorder %s94, %s96
    %p103 = scmp.eq.s32.totalorder %s18, 1
    %p104 = por %p102, %p103
    %p105 = scmp.ne.s32.totalorder %s96, %s97
    %p106 = scmp.eq.s32.totalorder %s18, 0
    %p107 = por %p105, %p106
    %p108 = scmp.ne.s32.totalorder %s96, %s97
    %p109 = scmp.eq.s32.totalorder %s19, 1
    %p110 = por %p108, %p109
    %p112 = scmp.ne.s32.totalorder %s97, %s111
    %p113 = scmp.eq.s32.totalorder %s19, 0
    %p114 = por %p112, %p113
    %s116 = sadd.s32 %s115, 1
    %p119 = scmp.eq.s32.totalorder %s13, 1
    %p120 = scmp.ne.s32.totalorder %s115, %s117
    %p121 = scmp.eq.s32.totalorder %s13, 0
    %p122 = por %p120, %p121
    %p123 = scmp.ne.s32.totalorder %s115, %s117
    %p124 = scmp.eq.s32.totalorder %s18, 1
    %p125 = por %p123, %p124
    %p126 = scmp.ne.s32.totalorder %s117, %s118
    %p127 = scmp.eq.s32.totalorder %s18, 0
    %p128 = por %p126, %p127
    %p129 = scmp.ne.s32.totalorder %s117, %s118
    %p130 = scmp.eq.s32.totalorder %s19, 1
    %p131 = por %p129, %p130
    %p133 = scmp.ne.s32.totalorder %s118, %s132
    %p134 = scmp.eq.s32.totalorder %s19, 0
    %p135 = por %p133, %p134
    %s137 = sadd.s32 %s136, 1
    %p140 = scmp.eq.s32.totalorder %s13, 1
    %p141 = scmp.ne.s32.totalorder %s136, %s138
    %p142 = scmp.eq.s32.totalorder %s13, 0
    %p143 = por %p141, %p142
    %p144 = scmp.ne.s32.totalorder %s136, %s138
    %p145 = scmp.eq.s32.totalorder %s18, 1
    %p146 = por %p144, %p145
    %p147 = scmp.ne.s32.totalorder %s138, %s139
    %p148 = scmp.eq.s32.totalorder %s18, 0
    %p149 = por %p147, %p148
    %p150 = scmp.ne.s32.totalorder %s138, %s139
    %p151 = scmp.eq.s32.totalorder %s19, 1
    %p152 = por %p150, %p151
    %p154 = scmp.ne.s32.totalorder %s139, %s153
    %p155 = scmp.eq.s32.totalorder %s19, 0
    %p156 = por %p154, %p155
    %s158 = sadd.s32 %s157, 1
    %p161 = scmp.eq.s32.totalorder %s13, 1
    %p162 = scmp.ne.s32.totalorder %s157, %s159
    %p163 = scmp.eq.s32.totalorder %s13, 0
    %p164 = por %p162, %p163
    %p165 = scmp.ne.s32.totalorder %s157, %s159
    %p166 = scmp.eq.s32.totalorder %s18, 1
    %p167 = por %p165, %p166
    %p168 = scmp.ne.s32.totalorder %s159, %s160
    %p169 = scmp.eq.s32.totalorder %s18, 0
    %p170 = por %p168, %p169
    %p171 = scmp.ne.s32.totalorder %s159, %s160
    %p172 = scmp.eq.s32.totalorder %s19, 1
    %p173 = por %p171, %p172
    %p175 = scmp.ne.s32.totalorder %s160, %s174
    %p176 = scmp.eq.s32.totalorder %s19, 0
    %p177 = por %p175, %p176
    %s178 = ssub.s32 %s13, %s20
    %p179 = scmp.eq.s32.totalorder %s178, 0
    %s181 = sadd.s32 %s180, 1
    %s182 = scalar_select %p179, %s180, %s181
    %p185 = pneg %p179
    %p186 = scmp.eq.s32.totalorder %s13, 1
    %p187 = por %p185, %p186
    %p188 = scmp.ne.s32.totalorder %s180, %s183
    %p189 = scmp.eq.s32.totalorder %s13, 0
    %p190 = por %p188, %p189
    %p191 = scmp.ne.s32.totalorder %s180, %s183
    %p192 = scmp.eq.s32.totalorder %s18, 1
    %p193 = por %p191, %p192
    %p194 = scmp.ne.s32.totalorder %s183, %s184
    %p195 = scmp.eq.s32.totalorder %s18, 0
    %p196 = por %p194, %p195
    %p197 = scmp.ne.s32.totalorder %s183, %s184
    %p198 = scmp.eq.s32.totalorder %s19, 1
    %p199 = por %p197, %p198
    %p201 = scmp.ne.s32.totalorder %s184, %s200
    %p202 = scmp.eq.s32.totalorder %s19, 0
    %p203 = por %p201, %p202
    %p204 = scmp.le.s32.totalorder 1, %s13
    %p205 = scmp.lt.s32.totalorder %s13, 3
    %p206 = pnand %p204, %p205
    %p207 = pneg %p206
    // Predicated region
    $region9: #{tpu_custom_call.1} parent=5 // pred_check
      _
    $region10: #{tpu_custom_call.1} parent=5 // pred_check_branch
      %209 = sbr.rel (%p206) target = $region12
    $region11: #{tpu_custom_call.1} parent=5 // pred_region
      %s210 = ssub.s32 %s13, 1
      // Predicated region
      $region13: #{tpu_custom_call.1} parent=11 // pred_check
        %p211 = pneg %p86
      $region14: #{tpu_custom_call.1} parent=11 // pred_check_branch
        %213 = sbr.rel (%p211) target = $region16
      $region15: #{tpu_custom_call.1} parent=11 // pred_region
        _
      $region16: #{tpu_custom_call.1} parent=11 // pred_fallthru
        _
      // Predicated region
      $region17: #{tpu_custom_call.1} parent=11 // pred_check
        %p214 = pneg %p107
      $region18: #{tpu_custom_call.1} parent=11 // pred_check_branch
        %216 = sbr.rel (%p214) target = $region20
      $region19: #{tpu_custom_call.1} parent=11 // pred_region
        _
      $region20: #{tpu_custom_call.1} parent=11 // pred_fallthru
        _
      // Predicated region
      $region21: #{tpu_custom_call.1} parent=11 // pred_check
        %p217 = pneg %p128
      $region22: #{tpu_custom_call.1} parent=11 // pred_check_branch
        %219 = sbr.rel (%p217) target = $region24
      $region23: #{tpu_custom_call.1} parent=11 // pred_region
        _
      $region24: #{tpu_custom_call.1} parent=11 // pred_fallthru
        _
      // Predicated region
      $region25: #{tpu_custom_call.1} parent=11 // pred_check
        %p220 = pneg %p149
      $region26: #{tpu_custom_call.1} parent=11 // pred_check_branch
        %222 = sbr.rel (%p220) target = $region28
      $region27: #{tpu_custom_call.1} parent=11 // pred_region
        _
      $region28: #{tpu_custom_call.1} parent=11 // pred_fallthru
        _
      // Predicated region
      $region29: #{tpu_custom_call.1} parent=11 // pred_check
        %p223 = pneg %p170
      $region30: #{tpu_custom_call.1} parent=11 // pred_check_branch
        %225 = sbr.rel (%p223) target = $region32
      $region31: #{tpu_custom_call.1} parent=11 // pred_region
        _
      $region32: #{tpu_custom_call.1} parent=11 // pred_fallthru
        _
    $region12: #{tpu_custom_call.1} parent=5 // pred_fallthru
      _
    %p226 = scmp.lt.s32.totalorder %s13, 2
    // Predicated region
    $region33: #{tpu_custom_call.1} parent=5 // pred_check
      %p227 = pneg %p226
    $region34: #{tpu_custom_call.1} parent=5 // pred_check_branch
      %229 = sbr.rel (%p227) target = $region36
    $region35: #{tpu_custom_call.1} parent=5 // pred_region
      // Predicated region
      $region37: #{tpu_custom_call.1} parent=35 // pred_check
        %p230 = pneg %p33
      $region38: #{tpu_custom_call.1} parent=35 // pred_check_branch
        %232 = sbr.rel (%p230) target = $region40
      $region39: #{tpu_custom_call.1} parent=35 // pred_region
        %p233 = scmp.lt.s32.totalorder %s13, 1
        %s234 = scalar_select %p233, %s13, 1
        %s235 = smul.addr %s234, 8
        %s236 = smul.addr %s235, 8
        %s237 = scalar_lea.vmem %s0, %s236
      $region40: #{tpu_custom_call.1} parent=35 // pred_fallthru
        _
      // Predicated region
      $region41: #{tpu_custom_call.1} parent=35 // pred_check
        %p238 = pneg %p59
      $region42: #{tpu_custom_call.1} parent=35 // pred_check_branch
        %240 = sbr.rel (%p238) target = $region44
      $region43: #{tpu_custom_call.1} parent=35 // pred_region
        %p241 = scmp.lt.s32.totalorder %s13, 1
        %s242 = scalar_select %p241, %s13, 1
        %s243 = smul.addr %s242, 8
        %s244 = smul.addr %s243, 8
        %s245 = scalar_lea.vmem %s1, %s244
      $region44: #{tpu_custom_call.1} parent=35 // pred_fallthru
        _
    $region36: #{tpu_custom_call.1} parent=5 // pred_fallthru
      _
    %p246 = scmp.le.s32.totalorder 1, %s13
    %p247 = scmp.lt.s32.totalorder %s13, 3
    %p248 = pnand %p246, %p247
    %p249 = pneg %p248
    // Predicated region
    $region45: #{tpu_custom_call.1} parent=5 // pred_check
      _
    $region46: #{tpu_custom_call.1} parent=5 // pred_check_branch
      %251 = sbr.rel (%p248) target = $region48
    $region47: #{tpu_custom_call.1} parent=5 // pred_region
      %s252 = ssub.s32 %s13, 1
      %p253 = scmp.lt.s32.totalorder %s18, 1
      %s254 = scalar_select %p253, %s18, 1
      %s255 = smul.addr %s254, 8
      %s256 = smul.addr %s255, 8
      %s257 = scalar_lea.vmem %s0, %s256
      %p258 = pneg %p39
      %p259 = pneg %p36
      %p260 = scmp.lt.s32.totalorder %s18, 1
      %s261 = scalar_select %p260, %s18, 1
      %s262 = smul.addr %s261, 8
      %s263 = smul.addr %s262, 8
      %s264 = scalar_lea.vmem %s1, %s263
      %p265 = pneg %p65
      %p266 = pneg %p62
      %p267 = pneg %p86
      %p268 = pneg %p83
      %p269 = pneg %p107
      %p270 = pneg %p104
      %p271 = pneg %p128
      %p272 = pneg %p125
      %p273 = pneg %p149
      %p274 = pneg %p146
      %p275 = pneg %p170
      %p276 = pneg %p167
      %p277 = pneg %p196
      %p278 = pneg %p193
      %p279 = scmp.lt.s32.totalorder %s18, 1
      %s280 = scalar_select %p279, %s18, 1
      %s281 = smul.addr %s280, 8
      %s282 = smul.addr %s281, 8
      %s283 = scalar_lea.vmem %s7, %s282
      %p284 = scmp.lt.s32.totalorder %s18, 1
      %s285 = scalar_select %p284, %s18, 1
      %s286 = smul.addr %s285, 8
      %s287 = smul.addr %s286, 8
      %s288 = scalar_lea.vmem %s0, %s287
      %p289 = scmp.lt.s32.totalorder %s18, 1
      %s290 = scalar_select %p289, %s18, 1
      %s291 = smul.addr %s290, 8
      %s292 = smul.addr %s291, 8
      %s293 = scalar_lea.vmem %s1, %s292
      %p294 = scmp.lt.s32.totalorder %s18, 1
      %s295 = scalar_select %p294, %s18, 1
      %s296 = smul.addr %s295, 8
      %s297 = smul.addr %s296, 8
      %s298 = scalar_lea.vmem %s7, %s297
      %v299 = vld [vmem:[%s288] sm:$0xff]
      %v300 = vld [vmem:[%s288 + $0x8] sm:$0xff]
      %v301 = vld [vmem:[%s288 + $0x10] sm:$0xff]
      %v302 = vld [vmem:[%s288 + $0x18] sm:$0xff]
      %v303 = vld [vmem:[%s288 + $0x20] sm:$0xff]
      %v304 = vld [vmem:[%s288 + $0x28] sm:$0xff]
      %v305 = vld [vmem:[%s288 + $0x30] sm:$0xff]
      %v306 = vld [vmem:[%s288 + $0x38] sm:$0xff]
      %v307 = vld [vmem:[%s293] sm:$0xff]
      %v308 = vld [vmem:[%s293 + $0x8] sm:$0xff]
      %v309 = vld [vmem:[%s293 + $0x10] sm:$0xff]
      %v310 = vld [vmem:[%s293 + $0x18] sm:$0xff]
      %v311 = vld [vmem:[%s293 + $0x20] sm:$0xff]
      %v312 = vld [vmem:[%s293 + $0x28] sm:$0xff]
      %v313 = vld [vmem:[%s293 + $0x30] sm:$0xff]
      %v314 = vld [vmem:[%s293 + $0x38] sm:$0xff]
      %323 = vrot.lane.b32.xlu0 %v307, 32
      %v324 = vpop.permute.xlu0 %323
      %325 = vrot.lane.b32.xlu0 %v308, 32
      %v326 = vpop.permute.xlu0 %325
      %327 = vrot.lane.b32.xlu0 %v309, 32
      %v328 = vpop.permute.xlu0 %327
      %329 = vrot.lane.b32.xlu0 %v310, 32
      %v330 = vpop.permute.xlu0 %329
      %331 = vrot.lane.b32.xlu0 %v311, 32
      %v332 = vpop.permute.xlu0 %331
      %333 = vrot.lane.b32.xlu0 %v312, 32
      %v334 = vpop.permute.xlu0 %333
      %335 = vrot.lane.b32.xlu0 %v313, 32
      %v336 = vpop.permute.xlu0 %335
      %337 = vrot.lane.b32.xlu0 %v314, 32
      %v338 = vpop.permute.xlu0 %337
      %vm347 = vcmask 261120
      %v348 = vsel %vm347, %v299, %v324
      %v349 = vsel %vm347, %v300, %v326
      %v350 = vsel %vm347, %v301, %v328
      %v351 = vsel %vm347, %v302, %v330
      %v352 = vsel %vm347, %v303, %v332
      %v353 = vsel %vm347, %v304, %v334
      %v354 = vsel %vm347, %v305, %v336
      %v355 = vsel %vm347, %v306, %v338
      %v356 = vld [vmem:[%s2] sm:$0xff]
      %v357 = vld [vmem:[%s2 + $0x8] sm:$0xff]
      %v358 = vld [vmem:[%s2 + $0x10] sm:$0xff]
      %v359 = vld [vmem:[%s2 + $0x18] sm:$0xff]
      %v360 = vld [vmem:[%s2 + $0x20] sm:$0xff]
      %v361 = vld [vmem:[%s2 + $0x28] sm:$0xff]
      %v362 = vld [vmem:[%s2 + $0x30] sm:$0xff]
      %v363 = vld [vmem:[%s2 + $0x38] sm:$0xff]
      %v364 = vld [vmem:[%s3] sm:$0x1]
      %v366 = vlaneseq
      %v367 = vshrl.u32 %v366, 7
      %v368 = vsub.s32 0, %v367
      %v369 = vrot.slane %v364, %v368
      %vm371 = vcmask 523264
      %v373 = vsel %vm371, %v348, 0
      %v376 = vsel %vm371, %v349, 0
      %v379 = vsel %vm371, %v350, 0
      %v382 = vsel %vm371, %v351, 0
      %v385 = vsel %vm371, %v352, 0
      %v388 = vsel %vm371, %v353, 0
      %v391 = vsel %vm371, %v354, 0
      %v394 = vsel %vm371, %v355, 0
      %396 = vmatprep.subr.mxu0 0.0
      %397 = vmatpush1.msra.mxu0 %v356
      %398 = vmatprep.subr.mxu0 0.0
      %399 = vmatpush1.msra.mxu0 %v357
      %400 = vmatprep.subr.mxu0 0.0
      %401 = vmatpush1.msra.mxu0 %v358
      %402 = vmatprep.subr.mxu0 0.0
      %403 = vmatpush1.msra.mxu0 %v359
      %404 = vmatprep.subr.mxu0 0.0
      %405 = vmatpush1.msra.mxu0 %v360
      %406 = vmatprep.subr.mxu0 0.0
      %407 = vmatpush1.msra.mxu0 %v361
      %408 = vmatprep.subr.mxu0 0.0
      %409 = vmatpush1.msra.mxu0 %v362
      %410 = vmatprep.subr.mxu0 0.0
      %411 = vmatpush1.msra.mxu0 %v363
      %412 = vmatprep.subr.mxu0 0.0
      %413 = vmatpush1.msra.mxu0 0.0
      %414 = vmatprep.subr.mxu0 0.0
      %415 = vmatpush1.msra.mxu0 0.0
      %416 = vmatprep.subr.mxu0 0.0
      %417 = vmatpush1.msra.mxu0 0.0
      %418 = vmatprep.subr.mxu0 0.0
      %419 = vmatpush1.msra.mxu0 0.0
      %420 = vmatprep.subr.mxu0 0.0
      %421 = vmatpush1.msra.mxu0 0.0
      %422 = vmatprep.subr.mxu0 0.0
      %423 = vmatpush1.msra.mxu0 0.0
      %424 = vmatprep.subr.mxu0 0.0
      %425 = vmatpush1.msra.mxu0 0.0
      %426 = vmatprep.subr.mxu0 0.0
      %427 = vmatpush1.msra.mxu0 0.0
      %428 = vmatprep.subr.mxu0 0.0
      %429 = vmatpush1.msra.mxu0 0.0
      %430 = vmatprep.subr.mxu0 0.0
      %431 = vmatpush1.msra.mxu0 0.0
      %432 = vmatprep.subr.mxu0 0.0
      %433 = vmatpush1.msra.mxu0 0.0
      %434 = vmatprep.subr.mxu0 0.0
      %435 = vmatpush1.msra.mxu0 0.0
      %436 = vmatprep.subr.mxu0 0.0
      %437 = vmatpush1.msra.mxu0 0.0
      %438 = vmatprep.subr.mxu0 0.0
      %439 = vmatpush1.msra.mxu0 0.0
      %440 = vmatprep.subr.mxu0 0.0
      %441 = vmatpush1.msra.mxu0 0.0
      %442 = vmatprep.subr.mxu0 0.0
      %443 = vmatpush1.msra.mxu0 0.0
      %444 = vmatprep.subr.mxu0 0.0
      %445 = vmatpush1.msra.mxu0 0.0
      %446 = vmatprep.subr.mxu0 0.0
      %447 = vmatpush1.msra.mxu0 0.0
      %448 = vmatprep.subr.mxu0 0.0
      %449 = vmatpush1.msra.mxu0 0.0
      %450 = vmatprep.subr.mxu0 0.0
      %451 = vmatpush1.msra.mxu0 0.0
      %452 = vmatprep.subr.mxu0 0.0
      %453 = vmatpush1.msra.mxu0 0.0
      %454 = vmatprep.subr.mxu0 0.0
      %455 = vmatpush1.msra.mxu0 0.0
      %456 = vmatprep.subr.mxu0 0.0
      %457 = vmatpush1.msra.mxu0 0.0
      %458 = vmatprep.subr.mxu0 0.0
      %459 = vmatpush1.msra.mxu0 0.0
      %460 = vmatprep.mubr.f32.mxu0 0.0
      %461 = vmatmul.mubr.f32.gmra.mrb[0].mxu0 %v373
      %v462 = vpop.f32.mrb[0].mxu0
      %v463 = vadd.f32 %v369, %v462
      %v464 = vpop.f32.mrb[0].mxu0
      %465 = vmatprep.mubr.f32.mxu0 0.0
      %466 = vmatmul.mubr.f32.gmra.mrb[0].mxu0 %v376
      %v467 = vpop.f32.mrb[0].mxu0
      %v468 = vadd.f32 %v369, %v467
      %v469 = vpop.f32.mrb[0].mxu0
      %470 = vmatprep.mubr.f32.mxu0 0.0
      %471 = vmatmul.mubr.f32.gmra.mrb[0].mxu0 %v379
      %v472 = vpop.f32.mrb[0].mxu0
      %v473 = vadd.f32 %v369, %v472
      %v474 = vpop.f32.mrb[0].mxu0
      %475 = vmatprep.mubr.f32.mxu0 0.0
      %476 = vmatmul.mubr.f32.gmra.mrb[0].mxu0 %v382
      %v477 = vpop.f32.mrb[0].mxu0
      %v478 = vadd.f32 %v369, %v477
      %v479 = vpop.f32.mrb[0].mxu0
      %480 = vmatprep.mubr.f32.mxu0 0.0
      %481 = vmatmul.mubr.f32.gmra.mrb[0].mxu0 %v385
      %v482 = vpop.f32.mrb[0].mxu0
      %v483 = vadd.f32 %v369, %v482
      %v484 = vpop.f32.mrb[0].mxu0
      %485 = vmatprep.mubr.f32.mxu0 0.0
      %486 = vmatmul.mubr.f32.gmra.mrb[0].mxu0 %v388
      %v487 = vpop.f32.mrb[0].mxu0
      %v488 = vadd.f32 %v369, %v487
      %v489 = vpop.f32.mrb[0].mxu0
      %490 = vmatprep.mubr.f32.mxu0 0.0
      %491 = vmatmul.mubr.f32.gmra.mrb[0].mxu0 %v391
      %v492 = vpop.f32.mrb[0].mxu0
      %v493 = vadd.f32 %v369, %v492
      %v494 = vpop.f32.mrb[0].mxu0
      %495 = vmatprep.mubr.f32.mxu0 0.0
      %496 = vmatmul.mubr.f32.gmra.mrb[0].mxu0 %v394
      %v497 = vpop.f32.mrb[0].mxu0
      %v498 = vadd.f32 %v369, %v497
      %v499 = vpop.f32.mrb[0].mxu0
      %500 = vdwg.mxu0
      %v501 = vmax.f32 %v463, 0.0
      %v502 = vmax.f32 %v468, 0.0
      %v503 = vmax.f32 %v473, 0.0
      %v504 = vmax.f32 %v478, 0.0
      %v505 = vmax.f32 %v483, 0.0
      %v506 = vmax.f32 %v488, 0.0
      %v507 = vmax.f32 %v493, 0.0
      %v508 = vmax.f32 %v498, 0.0
      %v509 = vsel %vm347, %v501, 0.0
      %v510 = vsel %vm347, %v502, 0.0
      %v511 = vadd.f32 %v509, %v510
      %v512 = vsel %vm347, %v503, 0.0
      %v513 = vadd.f32 %v511, %v512
      %v514 = vsel %vm347, %v504, 0.0
      %v515 = vadd.f32 %v513, %v514
      %v516 = vsel %vm347, %v505, 0.0
      %v517 = vadd.f32 %v515, %v516
      %v518 = vsel %vm347, %v506, 0.0
      %v519 = vadd.f32 %v517, %v518
      %v520 = vsel %vm347, %v507, 0.0
      %v521 = vadd.f32 %v519, %v520
      %v522 = vsel %vm347, %v508, 0.0
      %v523 = vadd.f32 %v521, %v522
      %v524 = vrot.slane %v523, 4
      %v525 = vadd.f32 %v523, %v524
      %v526 = vrot.slane %v525, 2
      %v527 = vadd.f32 %v525, %v526
      %v528 = vrot.slane %v527, 1
      %v529 = vadd.f32 %v527, %v528
      %v530 = vmul.f32 %v529, 0.015625
      %v531 = vsel %vm347, %v501, -inf
      %v532 = vsel %vm347, %v502, -inf
      %v533 = vsel %vm347, %v503, -inf
      %v534 = vsel %vm347, %v504, -inf
      %v535 = vsel %vm347, %v505, -inf
      %v536 = vmax.f32 %v531, %v535
      %v537 = vsel %vm347, %v506, -inf
      %v538 = vmax.f32 %v532, %v537
      %v539 = vsel %vm347, %v507, -inf
      %v540 = vmax.f32 %v533, %v539
      %v541 = vsel %vm347, %v508, -inf
      %v542 = vmax.f32 %v534, %v541
      %v543 = vmax.f32 %v536, %v538
      %v544 = vmax.f32 %v540, %v542
      %v545 = vmax.f32 %v543, %v544
      %v546 = vrot.slane %v545, 4
      %v547 = vmax.f32 %v545, %v546
      %v548 = vrot.slane %v547, 2
      %v549 = vmax.f32 %v547, %v548
      %v550 = vrot.slane %v549, 1
      %v551 = vmax.f32 %v549, %v550
      %vm552 = vcmask 1040384
      %v553 = vsel %vm552, %v530, %v551
      %v554 = vld [vmem:[%s4] sm:$0xff]
      %v555 = vld [vmem:[%s4 + $0x8] sm:$0xff]
      %v556 = vld [vmem:[%s4 + $0x10] sm:$0xff]
      %v557 = vld [vmem:[%s4 + $0x18] sm:$0xff]
      %v559 = vsel %vm347, %v553, 0
      %561 = vmatprep.subr.mxu0 0.0
      %562 = vmatpush1.msra.mxu0 %v554
      %563 = vmatprep.subr.mxu0 0.0
      %564 = vmatpush1.msra.mxu0 %v555
      %565 = vmatprep.subr.mxu0 0.0
      %566 = vmatpush1.msra.mxu0 %v556
      %567 = vmatprep.subr.mxu0 0.0
      %568 = vmatpush1.msra.mxu0 %v557
      %569 = vmatprep.subr.mxu0 0.0
      %570 = vmatpush1.msra.mxu0 0.0
      %571 = vmatprep.subr.mxu0 0.0
      %572 = vmatpush1.msra.mxu0 0.0
      %573 = vmatprep.subr.mxu0 0.0
      %574 = vmatpush1.msra.mxu0 0.0
      %575 = vmatprep.subr.mxu0 0.0
      %576 = vmatpush1.msra.mxu0 0.0
      %577 = vmatprep.subr.mxu0 0.0
      %578 = vmatpush1.msra.mxu0 0.0
      %579 = vmatprep.subr.mxu0 0.0
      %580 = vmatpush1.msra.mxu0 0.0
      %581 = vmatprep.subr.mxu0 0.0
      %582 = vmatpush1.msra.mxu0 0.0
      %583 = vmatprep.subr.mxu0 0.0
      %584 = vmatpush1.msra.mxu0 0.0
      %585 = vmatprep.subr.mxu0 0.0
      %586 = vmatpush1.msra.mxu0 0.0
      %587 = vmatprep.subr.mxu0 0.0
      %588 = vmatpush1.msra.mxu0 0.0
      %589 = vmatprep.subr.mxu0 0.0
      %590 = vmatpush1.msra.mxu0 0.0
      %591 = vmatprep.subr.mxu0 0.0
      %592 = vmatpush1.msra.mxu0 0.0
      %593 = vmatprep.subr.mxu0 0.0
      %594 = vmatpush1.msra.mxu0 0.0
      %595 = vmatprep.subr.mxu0 0.0
      %596 = vmatpush1.msra.mxu0 0.0
      %597 = vmatprep.subr.mxu0 0.0
      %598 = vmatpush1.msra.mxu0 0.0
      %599 = vmatprep.subr.mxu0 0.0
      %600 = vmatpush1.msra.mxu0 0.0
      %601 = vmatprep.subr.mxu0 0.0
      %602 = vmatpush1.msra.mxu0 0.0
      %603 = vmatprep.subr.mxu0 0.0
      %604 = vmatpush1.msra.mxu0 0.0
      %605 = vmatprep.subr.mxu0 0.0
      %606 = vmatpush1.msra.mxu0 0.0
      %607 = vmatprep.subr.mxu0 0.0
      %608 = vmatpush1.msra.mxu0 0.0
      %609 = vmatprep.subr.mxu0 0.0
      %610 = vmatpush1.msra.mxu0 0.0
      %611 = vmatprep.subr.mxu0 0.0
      %612 = vmatpush1.msra.mxu0 0.0
      %613 = vmatprep.subr.mxu0 0.0
      %614 = vmatpush1.msra.mxu0 0.0
      %615 = vmatprep.subr.mxu0 0.0
      %616 = vmatpush1.msra.mxu0 0.0
      %617 = vmatprep.subr.mxu0 0.0
      %618 = vmatpush1.msra.mxu0 0.0
      %619 = vmatprep.subr.mxu0 0.0
      %620 = vmatpush1.msra.mxu0 0.0
      %621 = vmatprep.subr.mxu0 0.0
      %622 = vmatpush1.msra.mxu0 0.0
      %623 = vmatprep.subr.mxu0 0.0
      %624 = vmatpush1.msra.mxu0 0.0
      %625 = vmatprep.mubr.f32.mxu0 0.0
      %626 = vmatmul.mubr.f32.gmra.mrb[0].mxu0 %v559
      %v627 = vpop.f32.mrb[0].mxu0
      %v628 = vadd.f32 0.0, %v627
      %v629 = vpop.f32.mrb[0].mxu0
      %630 = vdwg.mxu0
      %v631 = vmax.f32 %v628, 0.0
      %v632 = vld [vmem:[%s5] sm:$0x3]
      %vm633 = vcmask 15360
      %v635 = vsel %vm633, %v631, 0
      %vm637 = vcmask 1041408
      %v639 = vsel %vm637, %v632, 0
      %641 = vmatprep.subr.mxu0 0.0
      %642 = vmatpush1.msra.mxu0 %v639
      %643 = vmatprep.subr.mxu0 0.0
      %644 = vmatpush1.msra.mxu0 0.0
      %645 = vmatprep.subr.mxu0 0.0
      %646 = vmatpush1.msra.mxu0 0.0
      %647 = vmatprep.subr.mxu0 0.0
      %648 = vmatpush1.msra.mxu0 0.0
      %649 = vmatprep.subr.mxu0 0.0
      %650 = vmatpush1.msra.mxu0 0.0
      %651 = vmatprep.subr.mxu0 0.0
      %652 = vmatpush1.msra.mxu0 0.0
      %653 = vmatprep.subr.mxu0 0.0
      %654 = vmatpush1.msra.mxu0 0.0
      %655 = vmatprep.subr.mxu0 0.0
      %656 = vmatpush1.msra.mxu0 0.0
      %657 = vmatprep.subr.mxu0 0.0
      %658 = vmatpush1.msra.mxu0 0.0
      %659 = vmatprep.subr.mxu0 0.0
      %660 = vmatpush1.msra.mxu0 0.0
      %661 = vmatprep.subr.mxu0 0.0
      %662 = vmatpush1.msra.mxu0 0.0
      %663 = vmatprep.subr.mxu0 0.0
      %664 = vmatpush1.msra.mxu0 0.0
      %665 = vmatprep.subr.mxu0 0.0
      %666 = vmatpush1.msra.mxu0 0.0
      %667 = vmatprep.subr.mxu0 0.0
      %668 = vmatpush1.msra.mxu0 0.0
      %669 = vmatprep.subr.mxu0 0.0
      %670 = vmatpush1.msra.mxu0 0.0
      %671 = vmatprep.subr.mxu0 0.0
      %672 = vmatpush1.msra.mxu0 0.0
      %673 = vmatprep.subr.mxu0 0.0
      %674 = vmatpush1.msra.mxu0 0.0
      %675 = vmatprep.subr.mxu0 0.0
      %676 = vmatpush1.msra.mxu0 0.0
      %677 = vmatprep.subr.mxu0 0.0
      %678 = vmatpush1.msra.mxu0 0.0
      %679 = vmatprep.subr.mxu0 0.0
      %680 = vmatpush1.msra.mxu0 0.0
      %681 = vmatprep.subr.mxu0 0.0
      %682 = vmatpush1.msra.mxu0 0.0
      %683 = vmatprep.subr.mxu0 0.0
      %684 = vmatpush1.msra.mxu0 0.0
      %685 = vmatprep.subr.mxu0 0.0
      %686 = vmatpush1.msra.mxu0 0.0
      %687 = vmatprep.subr.mxu0 0.0
      %688 = vmatpush1.msra.mxu0 0.0
      %689 = vmatprep.subr.mxu0 0.0
      %690 = vmatpush1.msra.mxu0 0.0
      %691 = vmatprep.subr.mxu0 0.0
      %692 = vmatpush1.msra.mxu0 0.0
      %693 = vmatprep.subr.mxu0 0.0
      %694 = vmatpush1.msra.mxu0 0.0
      %695 = vmatprep.subr.mxu0 0.0
      %696 = vmatpush1.msra.mxu0 0.0
      %697 = vmatprep.subr.mxu0 0.0
      %698 = vmatpush1.msra.mxu0 0.0
      %699 = vmatprep.subr.mxu0 0.0
      %700 = vmatpush1.msra.mxu0 0.0
      %701 = vmatprep.subr.mxu0 0.0
      %702 = vmatpush1.msra.mxu0 0.0
      %703 = vmatprep.subr.mxu0 0.0
      %704 = vmatpush1.msra.mxu0 0.0
      %705 = vmatprep.mubr.f32.mxu0 0.0
      %706 = vmatmul.mubr.f32.gmra.mrb[0].mxu0 %v635
      %v707 = vpop.f32.mrb[0].mxu0
      %v708 = vadd.f32 0.0, %v707
      %v709 = vpop.f32.mrb[0].mxu0
      %710 = vdwg.mxu0
      %vm711 = vcmask 254976
      %v712 = vsel %vm711, %v708, 0.0
      %v713 = vrot.slane %v712, 4
      %v714 = vadd.f32 %v712, %v713
      %v715 = vrot.slane %v714, 2
      %v716 = vadd.f32 %v714, %v715
      %v717 = vrot.slane %v716, 1
      %v718 = vadd.f32 %v716, %v717
      %v719 = vxor.u32 %v718, 2147483648
      %v720 = vmul.f32 %v719, 1.442695
      %v721 = vpow.pop %v720
      %v722 = vadd.f32 %v721, 1.0
      %v723 = vrcp.pop %v722
      %v724 = vmul.f32 1.0, %v723
      %v725 = vmul.f32 %v501, %v724
      %v726 = vmul.f32 %v502, %v724
      %v727 = vmul.f32 %v503, %v724
      %v728 = vmul.f32 %v504, %v724
      %v729 = vmul.f32 %v505, %v724
      %v730 = vmul.f32 %v506, %v724
      %v731 = vmul.f32 %v507, %v724
      %v732 = vmul.f32 %v508, %v724
      %v733 = vsel %vm347, %v725, 0.0
      %734 = vadd.xlane.f32.xlu0 %v733
      %v735 = vpop.xlane.xlu0 %734
      %v736 = vsel %vm347, %v726, 0.0
      %737 = vadd.xlane.f32.xlu0 %v736
      %v738 = vpop.xlane.xlu0 %737
      %v739 = vsel %vm347, %v727, 0.0
      %740 = vadd.xlane.f32.xlu0 %v739
      %v741 = vpop.xlane.xlu0 %740
      %v742 = vsel %vm347, %v728, 0.0
      %743 = vadd.xlane.f32.xlu0 %v742
      %v744 = vpop.xlane.xlu0 %743
      %v745 = vsel %vm347, %v729, 0.0
      %746 = vadd.xlane.f32.xlu0 %v745
      %v747 = vpop.xlane.xlu0 %746
      %v748 = vsel %vm347, %v730, 0.0
      %749 = vadd.xlane.f32.xlu0 %v748
      %v750 = vpop.xlane.xlu0 %749
      %v751 = vsel %vm347, %v731, 0.0
      %752 = vadd.xlane.f32.xlu0 %v751
      %v753 = vpop.xlane.xlu0 %752
      %v754 = vsel %vm347, %v732, 0.0
      %755 = vadd.xlane.f32.xlu0 %v754
      %v756 = vpop.xlane.xlu0 %755
      %v757 = vmul.f32 %v735, 0.03125
      %v758 = vmul.f32 %v738, 0.03125
      %v759 = vmul.f32 %v741, 0.03125
      %v760 = vmul.f32 %v744, 0.03125
      %v761 = vmul.f32 %v747, 0.03125
      %v762 = vmul.f32 %v750, 0.03125
      %v763 = vmul.f32 %v753, 0.03125
      %v764 = vmul.f32 %v756, 0.03125
      %v765 = vsel %vm347, %v725, -inf
      %766 = vmax.xlane.f32.xlu0 %v765
      %v767 = vpop.xlane.xlu0 %766
      %v768 = vsel %vm347, %v726, -inf
      %769 = vmax.xlane.f32.xlu0 %v768
      %v770 = vpop.xlane.xlu0 %769
      %v771 = vsel %vm347, %v727, -inf
      %772 = vmax.xlane.f32.xlu0 %v771
      %v773 = vpop.xlane.xlu0 %772
      %v774 = vsel %vm347, %v728, -inf
      %775 = vmax.xlane.f32.xlu0 %v774
      %v776 = vpop.xlane.xlu0 %775
      %v777 = vsel %vm347, %v729, -inf
      %778 = vmax.xlane.f32.xlu0 %v777
      %v779 = vpop.xlane.xlu0 %778
      %v780 = vsel %vm347, %v730, -inf
      %781 = vmax.xlane.f32.xlu0 %v780
      %v782 = vpop.xlane.xlu0 %781
      %v783 = vsel %vm347, %v731, -inf
      %784 = vmax.xlane.f32.xlu0 %v783
      %v785 = vpop.xlane.xlu0 %784
      %v786 = vsel %vm347, %v732, -inf
      %787 = vmax.xlane.f32.xlu0 %v786
      %v788 = vpop.xlane.xlu0 %787
      %vm789 = vcmask 7168
      %v790 = vsel %vm789, %v757, %v767
      %v791 = vsel %vm789, %v758, %v770
      %v792 = vsel %vm789, %v759, %v773
      %v793 = vsel %vm789, %v760, %v776
      %v794 = vsel %vm789, %v761, %v779
      %v795 = vsel %vm789, %v762, %v782
      %v796 = vsel %vm789, %v763, %v785
      %v797 = vsel %vm789, %v764, %v788
      %798 = vst.msk [vmem:[#allocation2] sm:$0xff] %vm633, 0.0
      %799 = vst.msk [vmem:[#allocation2 + $0x8] sm:$0xff] %vm633, 0.0
      %800 = vst.msk [vmem:[#allocation2 + $0x10] sm:$0xff] %vm633, 0.0
      %801 = vst.msk [vmem:[#allocation2 + $0x18] sm:$0xff] %vm633, 0.0
      %802 = vst.msk [vmem:[#allocation2 + $0x20] sm:$0xff] %vm633, %v790
      %803 = vst.msk [vmem:[#allocation2 + $0x28] sm:$0xff] %vm633, %v791
      %804 = vst.msk [vmem:[#allocation2 + $0x30] sm:$0xff] %vm633, %v792
      %805 = vst.msk [vmem:[#allocation2 + $0x38] sm:$0xff] %vm633, %v793
      %806 = vst.msk [vmem:[#allocation2 + $0x40] sm:$0xff] %vm633, %v794
      %807 = vst.msk [vmem:[#allocation2 + $0x48] sm:$0xff] %vm633, %v795
      %808 = vst.msk [vmem:[#allocation2 + $0x50] sm:$0xff] %vm633, %v796
      %809 = vst.msk [vmem:[#allocation2 + $0x58] sm:$0xff] %vm633, %v797
      %810 = vst.msk [vmem:[#allocation2 + $0x60] sm:$0xff] %vm633, 0.0
      %811 = vst.msk [vmem:[#allocation2 + $0x68] sm:$0xff] %vm633, 0.0
      %812 = vst.msk [vmem:[#allocation2 + $0x70] sm:$0xff] %vm633, 0.0
      %813 = vst.msk [vmem:[#allocation2 + $0x78] sm:$0xff] %vm633, 0.0
      %v814 = vld [vmem:[#allocation2 + $0x5] sm:$0xff]
      %v815 = vld [vmem:[#allocation2 + $0xd] sm:$0xff]
      %v816 = vld [vmem:[#allocation2 + $0x15] sm:$0xff]
      %v817 = vld [vmem:[#allocation2 + $0x1d] sm:$0xff]
      %v818 = vld [vmem:[#allocation2 + $0x25] sm:$0xff]
      %v819 = vld [vmem:[#allocation2 + $0x2d] sm:$0xff]
      %v820 = vld [vmem:[#allocation2 + $0x35] sm:$0xff]
      %v821 = vld [vmem:[#allocation2 + $0x3d] sm:$0xff]
      %v822 = vld [vmem:[%s6] sm:$0xff]
      %v823 = vld [vmem:[%s6 + $0x8] sm:$0xff]
      %v824 = vld [vmem:[%s6 + $0x10] sm:$0xff]
      %v825 = vld [vmem:[%s6 + $0x18] sm:$0xff]
      %v826 = vld [vmem:[%s6 + $0x20] sm:$0xff]
      %v827 = vld [vmem:[%s6 + $0x28] sm:$0xff]
      %v828 = vld [vmem:[%s6 + $0x30] sm:$0xff]
      %v829 = vld [vmem:[%s6 + $0x38] sm:$0xff]
      %v830 = vmul.f32 %v822, %v814
      %v831 = vmul.f32 %v823, %v815
      %v832 = vmul.f32 %v824, %v816
      %v833 = vmul.f32 %v825, %v817
      %v834 = vmul.f32 %v826, %v818
      %v835 = vmul.f32 %v827, %v819
      %v836 = vmul.f32 %v828, %v820
      %v837 = vmul.f32 %v829, %v821
      %v838 = vadd.f32 %v830, 0.0
      %v839 = vadd.f32 %v831, 0.0
      %v840 = vadd.f32 %v832, 0.0
      %v841 = vadd.f32 %v833, 0.0
      %v842 = vadd.f32 %v834, 0.0
      %v843 = vadd.f32 %v835, 0.0
      %v844 = vadd.f32 %v836, 0.0
      %v845 = vadd.f32 %v837, 0.0
      %v846 = vld [vmem:[#allocation2 + $0x6] sm:$0xff]
      %v847 = vld [vmem:[#allocation2 + $0xe] sm:$0xff]
      %v848 = vld [vmem:[#allocation2 + $0x16] sm:$0xff]
      %v849 = vld [vmem:[#allocation2 + $0x1e] sm:$0xff]
      %v850 = vld [vmem:[#allocation2 + $0x26] sm:$0xff]
      %v851 = vld [vmem:[#allocation2 + $0x2e] sm:$0xff]
      %v852 = vld [vmem:[#allocation2 + $0x36] sm:$0xff]
      %v853 = vld [vmem:[#allocation2 + $0x3e] sm:$0xff]
      %s854 = scalar_lea.vmem %s6, 64
      %v855 = vld [vmem:[%s854] sm:$0xff]
      %v856 = vld [vmem:[%s854 + $0x8] sm:$0xff]
      %v857 = vld [vmem:[%s854 + $0x10] sm:$0xff]
      %v858 = vld [vmem:[%s854 + $0x18] sm:$0xff]
      %v859 = vld [vmem:[%s854 + $0x20] sm:$0xff]
      %v860 = vld [vmem:[%s854 + $0x28] sm:$0xff]
      %v861 = vld [vmem:[%s854 + $0x30] sm:$0xff]
      %v862 = vld [vmem:[%s854 + $0x38] sm:$0xff]
      %v863 = vmul.f32 %v855, %v846
      %v864 = vmul.f32 %v856, %v847
      %v865 = vmul.f32 %v857, %v848
      %v866 = vmul.f32 %v858, %v849
      %v867 = vmul.f32 %v859, %v850
      %v868 = vmul.f32 %v860, %v851
      %v869 = vmul.f32 %v861, %v852
      %v870 = vmul.f32 %v862, %v853
      %v871 = vadd.f32 %v838, %v863
      %v872 = vadd.f32 %v839, %v864
      %v873 = vadd.f32 %v840, %v865
      %v874 = vadd.f32 %v841, %v866
      %v875 = vadd.f32 %v842, %v867
      %v876 = vadd.f32 %v843, %v868
      %v877 = vadd.f32 %v844, %v869
      %v878 = vadd.f32 %v845, %v870
      %v879 = vld [vmem:[#allocation2 + $0x7] sm:$0xff]
      %v880 = vld [vmem:[#allocation2 + $0xf] sm:$0xff]
      %v881 = vld [vmem:[#allocation2 + $0x17] sm:$0xff]
      %v882 = vld [vmem:[#allocation2 + $0x1f] sm:$0xff]
      %v883 = vld [vmem:[#allocation2 + $0x27] sm:$0xff]
      %v884 = vld [vmem:[#allocation2 + $0x2f] sm:$0xff]
      %v885 = vld [vmem:[#allocation2 + $0x37] sm:$0xff]
      %v886 = vld [vmem:[#allocation2 + $0x3f] sm:$0xff]
      %s887 = scalar_lea.vmem %s6, 128
      %v888 = vld [vmem:[%s887] sm:$0xff]
      %v889 = vld [vmem:[%s887 + $0x8] sm:$0xff]
      %v890 = vld [vmem:[%s887 + $0x10] sm:$0xff]
      %v891 = vld [vmem:[%s887 + $0x18] sm:$0xff]
      %v892 = vld [vmem:[%s887 + $0x20] sm:$0xff]
      %v893 = vld [vmem:[%s887 + $0x28] sm:$0xff]
      %v894 = vld [vmem:[%s887 + $0x30] sm:$0xff]
      %v895 = vld [vmem:[%s887 + $0x38] sm:$0xff]
      %v896 = vmul.f32 %v888, %v879
      %v897 = vmul.f32 %v889, %v880
      %v898 = vmul.f32 %v890, %v881
      %v899 = vmul.f32 %v891, %v882
      %v900 = vmul.f32 %v892, %v883
      %v901 = vmul.f32 %v893, %v884
      %v902 = vmul.f32 %v894, %v885
      %v903 = vmul.f32 %v895, %v886
      %v904 = vadd.f32 %v871, %v896
      %v905 = vadd.f32 %v872, %v897
      %v906 = vadd.f32 %v873, %v898
      %v907 = vadd.f32 %v874, %v899
      %v908 = vadd.f32 %v875, %v900
      %v909 = vadd.f32 %v876, %v901
      %v910 = vadd.f32 %v877, %v902
      %v911 = vadd.f32 %v878, %v903
      %v912 = vld [vmem:[#allocation2 + $0x8] sm:$0xff]
      %v913 = vld [vmem:[#allocation2 + $0x10] sm:$0xff]
      %v914 = vld [vmem:[#allocation2 + $0x18] sm:$0xff]
      %v915 = vld [vmem:[#allocation2 + $0x20] sm:$0xff]
      %v916 = vld [vmem:[#allocation2 + $0x28] sm:$0xff]
      %v917 = vld [vmem:[#allocation2 + $0x30] sm:$0xff]
      %v918 = vld [vmem:[#allocation2 + $0x38] sm:$0xff]
      %v919 = vld [vmem:[#allocation2 + $0x40] sm:$0xff]
      %s920 = scalar_lea.vmem %s6, 192
      %v921 = vld [vmem:[%s920] sm:$0xff]
      %v922 = vld [vmem:[%s920 + $0x8] sm:$0xff]
      %v923 = vld [vmem:[%s920 + $0x10] sm:$0xff]
      %v924 = vld [vmem:[%s920 + $0x18] sm:$0xff]
      %v925 = vld [vmem:[%s920 + $0x20] sm:$0xff]
      %v926 = vld [vmem:[%s920 + $0x28] sm:$0xff]
      %v927 = vld [vmem:[%s920 + $0x30] sm:$0xff]
      %v928 = vld [vmem:[%s920 + $0x38] sm:$0xff]
      %v929 = vmul.f32 %v921, %v912
      %v930 = vmul.f32 %v922, %v913
      %v931 = vmul.f32 %v923, %v914
      %v932 = vmul.f32 %v924, %v915
      %v933 = vmul.f32 %v925, %v916
      %v934 = vmul.f32 %v926, %v917
      %v935 = vmul.f32 %v927, %v918
      %v936 = vmul.f32 %v928, %v919
      %v937 = vadd.f32 %v904, %v929
      %v938 = vadd.f32 %v905, %v930
      %v939 = vadd.f32 %v906, %v931
      %v940 = vadd.f32 %v907, %v932
      %v941 = vadd.f32 %v908, %v933
      %v942 = vadd.f32 %v909, %v934
      %v943 = vadd.f32 %v910, %v935
      %v944 = vadd.f32 %v911, %v936
      %v945 = vld [vmem:[#allocation2 + $0x9] sm:$0xff]
      %v946 = vld [vmem:[#allocation2 + $0x11] sm:$0xff]
      %v947 = vld [vmem:[#allocation2 + $0x19] sm:$0xff]
      %v948 = vld [vmem:[#allocation2 + $0x21] sm:$0xff]
      %v949 = vld [vmem:[#allocation2 + $0x29] sm:$0xff]
      %v950 = vld [vmem:[#allocation2 + $0x31] sm:$0xff]
      %v951 = vld [vmem:[#allocation2 + $0x39] sm:$0xff]
      %v952 = vld [vmem:[#allocation2 + $0x41] sm:$0xff]
      %s953 = scalar_lea.vmem %s6, 256
      %v954 = vld [vmem:[%s953] sm:$0xff]
      %v955 = vld [vmem:[%s953 + $0x8] sm:$0xff]
      %v956 = vld [vmem:[%s953 + $0x10] sm:$0xff]
      %v957 = vld [vmem:[%s953 + $0x18] sm:$0xff]
      %v958 = vld [vmem:[%s953 + $0x20] sm:$0xff]
      %v959 = vld [vmem:[%s953 + $0x28] sm:$0xff]
      %v960 = vld [vmem:[%s953 + $0x30] sm:$0xff]
      %v961 = vld [vmem:[%s953 + $0x38] sm:$0xff]
      %v962 = vmul.f32 %v954, %v945
      %v963 = vmul.f32 %v955, %v946
      %v964 = vmul.f32 %v956, %v947
      %v965 = vmul.f32 %v957, %v948
      %v966 = vmul.f32 %v958, %v949
      %v967 = vmul.f32 %v959, %v950
      %v968 = vmul.f32 %v960, %v951
      %v969 = vmul.f32 %v961, %v952
      %v970 = vadd.f32 %v937, %v962
      %v971 = vadd.f32 %v938, %v963
      %v972 = vadd.f32 %v939, %v964
      %v973 = vadd.f32 %v940, %v965
      %v974 = vadd.f32 %v941, %v966
      %v975 = vadd.f32 %v942, %v967
      %v976 = vadd.f32 %v943, %v968
      %v977 = vadd.f32 %v944, %v969
      %v978 = vld [vmem:[#allocation2 + $0xa] sm:$0xff]
      %v979 = vld [vmem:[#allocation2 + $0x12] sm:$0xff]
      %v980 = vld [vmem:[#allocation2 + $0x1a] sm:$0xff]
      %v981 = vld [vmem:[#allocation2 + $0x22] sm:$0xff]
      %v982 = vld [vmem:[#allocation2 + $0x2a] sm:$0xff]
      %v983 = vld [vmem:[#allocation2 + $0x32] sm:$0xff]
      %v984 = vld [vmem:[#allocation2 + $0x3a] sm:$0xff]
      %v985 = vld [vmem:[#allocation2 + $0x42] sm:$0xff]
      %s986 = scalar_lea.vmem %s6, 320
      %v987 = vld [vmem:[%s986] sm:$0xff]
      %v988 = vld [vmem:[%s986 + $0x8] sm:$0xff]
      %v989 = vld [vmem:[%s986 + $0x10] sm:$0xff]
      %v990 = vld [vmem:[%s986 + $0x18] sm:$0xff]
      %v991 = vld [vmem:[%s986 + $0x20] sm:$0xff]
      %v992 = vld [vmem:[%s986 + $0x28] sm:$0xff]
      %v993 = vld [vmem:[%s986 + $0x30] sm:$0xff]
      %v994 = vld [vmem:[%s986 + $0x38] sm:$0xff]
      %v995 = vmul.f32 %v987, %v978
      %v996 = vmul.f32 %v988, %v979
      %v997 = vmul.f32 %v989, %v980
      %v998 = vmul.f32 %v990, %v981
      %v999 = vmul.f32 %v991, %v982
      %v1000 = vmul.f32 %v992, %v983
      %v1001 = vmul.f32 %v993, %v984
      %v1002 = vmul.f32 %v994, %v985
      %v1003 = vadd.f32 %v970, %v995
      %v1004 = vadd.f32 %v971, %v996
      %v1005 = vadd.f32 %v972, %v997
      %v1006 = vadd.f32 %v973, %v998
      %v1007 = vadd.f32 %v974, %v999
      %v1008 = vadd.f32 %v975, %v1000
      %v1009 = vadd.f32 %v976, %v1001
      %v1010 = vadd.f32 %v977, %v1002
      %v1011 = vld [vmem:[#allocation2 + $0xb] sm:$0xff]
      %v1012 = vld [vmem:[#allocation2 + $0x13] sm:$0xff]
      %v1013 = vld [vmem:[#allocation2 + $0x1b] sm:$0xff]
      %v1014 = vld [vmem:[#allocation2 + $0x23] sm:$0xff]
      %v1015 = vld [vmem:[#allocation2 + $0x2b] sm:$0xff]
      %v1016 = vld [vmem:[#allocation2 + $0x33] sm:$0xff]
      %v1017 = vld [vmem:[#allocation2 + $0x3b] sm:$0xff]
      %v1018 = vld [vmem:[#allocation2 + $0x43] sm:$0xff]
      %s1019 = scalar_lea.vmem %s6, 384
      %v1020 = vld [vmem:[%s1019] sm:$0xff]
      %v1021 = vld [vmem:[%s1019 + $0x8] sm:$0xff]
      %v1022 = vld [vmem:[%s1019 + $0x10] sm:$0xff]
      %v1023 = vld [vmem:[%s1019 + $0x18] sm:$0xff]
      %v1024 = vld [vmem:[%s1019 + $0x20] sm:$0xff]
      %v1025 = vld [vmem:[%s1019 + $0x28] sm:$0xff]
      %v1026 = vld [vmem:[%s1019 + $0x30] sm:$0xff]
      %v1027 = vld [vmem:[%s1019 + $0x38] sm:$0xff]
      %v1028 = vmul.f32 %v1020, %v1011
      %v1029 = vmul.f32 %v1021, %v1012
      %v1030 = vmul.f32 %v1022, %v1013
      %v1031 = vmul.f32 %v1023, %v1014
      %v1032 = vmul.f32 %v1024, %v1015
      %v1033 = vmul.f32 %v1025, %v1016
      %v1034 = vmul.f32 %v1026, %v1017
      %v1035 = vmul.f32 %v1027, %v1018
      %v1036 = vadd.f32 %v1003, %v1028
      %v1037 = vadd.f32 %v1004, %v1029
      %v1038 = vadd.f32 %v1005, %v1030
      %v1039 = vadd.f32 %v1006, %v1031
      %v1040 = vadd.f32 %v1007, %v1032
      %v1041 = vadd.f32 %v1008, %v1033
      %v1042 = vadd.f32 %v1009, %v1034
      %v1043 = vadd.f32 %v1010, %v1035
      %v1044 = vld [vmem:[#allocation2 + $0x45] sm:$0xff]
      %s1045 = scalar_lea.vmem %s6, 448
      %v1046 = vld [vmem:[%s1045] sm:$0xff]
      %v1047 = vld [vmem:[%s1045 + $0x8] sm:$0xff]
      %v1048 = vld [vmem:[%s1045 + $0x10] sm:$0xff]
      %v1049 = vld [vmem:[%s1045 + $0x18] sm:$0xff]
      %v1050 = vld [vmem:[%s1045 + $0x20] sm:$0xff]
      %v1051 = vld [vmem:[%s1045 + $0x28] sm:$0xff]
      %v1052 = vld [vmem:[%s1045 + $0x30] sm:$0xff]
      %v1053 = vld [vmem:[%s1045 + $0x38] sm:$0xff]
      %v1054 = vmul.f32 %v1046, %v815
      %v1055 = vmul.f32 %v1047, %v816
      %v1056 = vmul.f32 %v1048, %v817
      %v1057 = vmul.f32 %v1049, %v818
      %v1058 = vmul.f32 %v1050, %v819
      %v1059 = vmul.f32 %v1051, %v820
      %v1060 = vmul.f32 %v1052, %v821
      %v1061 = vmul.f32 %v1053, %v1044
      %v1062 = vadd.f32 %v1036, %v1054
      %v1063 = vadd.f32 %v1037, %v1055
      %v1064 = vadd.f32 %v1038, %v1056
      %v1065 = vadd.f32 %v1039, %v1057
      %v1066 = vadd.f32 %v1040, %v1058
      %v1067 = vadd.f32 %v1041, %v1059
      %v1068 = vadd.f32 %v1042, %v1060
      %v1069 = vadd.f32 %v1043, %v1061
      %v1070 = vld [vmem:[#allocation2 + $0x46] sm:$0xff]
      %s1071 = scalar_lea.vmem %s6, 512
      %v1072 = vld [vmem:[%s1071] sm:$0xff]
      %v1073 = vld [vmem:[%s1071 + $0x8] sm:$0xff]
      %v1074 = vld [vmem:[%s1071 + $0x10] sm:$0xff]
      %v1075 = vld [vmem:[%s1071 + $0x18] sm:$0xff]
      %v1076 = vld [vmem:[%s1071 + $0x20] sm:$0xff]
      %v1077 = vld [vmem:[%s1071 + $0x28] sm:$0xff]
      %v1078 = vld [vmem:[%s1071 + $0x30] sm:$0xff]
      %v1079 = vld [vmem:[%s1071 + $0x38] sm:$0xff]
      %v1080 = vmul.f32 %v1072, %v847
      %v1081 = vmul.f32 %v1073, %v848
      %v1082 = vmul.f32 %v1074, %v849
      %v1083 = vmul.f32 %v1075, %v850
      %v1084 = vmul.f32 %v1076, %v851
      %v1085 = vmul.f32 %v1077, %v852
      %v1086 = vmul.f32 %v1078, %v853
      %v1087 = vmul.f32 %v1079, %v1070
      %v1088 = vadd.f32 %v1062, %v1080
      %v1089 = vadd.f32 %v1063, %v1081
      %v1090 = vadd.f32 %v1064, %v1082
      %v1091 = vadd.f32 %v1065, %v1083
      %v1092 = vadd.f32 %v1066, %v1084
      %v1093 = vadd.f32 %v1067, %v1085
      %v1094 = vadd.f32 %v1068, %v1086
      %v1095 = vadd.f32 %v1069, %v1087
      %v1096 = vld [vmem:[#allocation2 + $0x47] sm:$0xff]
      %s1097 = scalar_lea.vmem %s6, 576
      %v1098 = vld [vmem:[%s1097] sm:$0xff]
      %v1099 = vld [vmem:[%s1097 + $0x8] sm:$0xff]
      %v1100 = vld [vmem:[%s1097 + $0x10] sm:$0xff]
      %v1101 = vld [vmem:[%s1097 + $0x18] sm:$0xff]
      %v1102 = vld [vmem:[%s1097 + $0x20] sm:$0xff]
      %v1103 = vld [vmem:[%s1097 + $0x28] sm:$0xff]
      %v1104 = vld [vmem:[%s1097 + $0x30] sm:$0xff]
      %v1105 = vld [vmem:[%s1097 + $0x38] sm:$0xff]
      %v1106 = vmul.f32 %v1098, %v880
      %v1107 = vmul.f32 %v1099, %v881
      %v1108 = vmul.f32 %v1100, %v882
      %v1109 = vmul.f32 %v1101, %v883
      %v1110 = vmul.f32 %v1102, %v884
      %v1111 = vmul.f32 %v1103, %v885
      %v1112 = vmul.f32 %v1104, %v886
      %v1113 = vmul.f32 %v1105, %v1096
      %v1114 = vadd.f32 %v1088, %v1106
      %v1115 = vadd.f32 %v1089, %v1107
      %v1116 = vadd.f32 %v1090, %v1108
      %v1117 = vadd.f32 %v1091, %v1109
      %v1118 = vadd.f32 %v1092, %v1110
      %v1119 = vadd.f32 %v1093, %v1111
      %v1120 = vadd.f32 %v1094, %v1112
      %v1121 = vadd.f32 %v1095, %v1113
      %v1122 = vld [vmem:[#allocation2 + $0x48] sm:$0xff]
      %s1123 = scalar_lea.vmem %s6, 640
      %v1124 = vld [vmem:[%s1123] sm:$0xff]
      %v1125 = vld [vmem:[%s1123 + $0x8] sm:$0xff]
      %v1126 = vld [vmem:[%s1123 + $0x10] sm:$0xff]
      %v1127 = vld [vmem:[%s1123 + $0x18] sm:$0xff]
      %v1128 = vld [vmem:[%s1123 + $0x20] sm:$0xff]
      %v1129 = vld [vmem:[%s1123 + $0x28] sm:$0xff]
      %v1130 = vld [vmem:[%s1123 + $0x30] sm:$0xff]
      %v1131 = vld [vmem:[%s1123 + $0x38] sm:$0xff]
      %v1132 = vmul.f32 %v1124, %v913
      %v1133 = vmul.f32 %v1125, %v914
      %v1134 = vmul.f32 %v1126, %v915
      %v1135 = vmul.f32 %v1127, %v916
      %v1136 = vmul.f32 %v1128, %v917
      %v1137 = vmul.f32 %v1129, %v918
      %v1138 = vmul.f32 %v1130, %v919
      %v1139 = vmul.f32 %v1131, %v1122
      %v1140 = vadd.f32 %v1114, %v1132
      %v1141 = vadd.f32 %v1115, %v1133
      %v1142 = vadd.f32 %v1116, %v1134
      %v1143 = vadd.f32 %v1117, %v1135
      %v1144 = vadd.f32 %v1118, %v1136
      %v1145 = vadd.f32 %v1119, %v1137
      %v1146 = vadd.f32 %v1120, %v1138
      %v1147 = vadd.f32 %v1121, %v1139
      %v1148 = vld [vmem:[#allocation2 + $0x49] sm:$0xff]
      %s1149 = scalar_lea.vmem %s6, 704
      %v1150 = vld [vmem:[%s1149] sm:$0xff]
      %v1151 = vld [vmem:[%s1149 + $0x8] sm:$0xff]
      %v1152 = vld [vmem:[%s1149 + $0x10] sm:$0xff]
      %v1153 = vld [vmem:[%s1149 + $0x18] sm:$0xff]
      %v1154 = vld [vmem:[%s1149 + $0x20] sm:$0xff]
      %v1155 = vld [vmem:[%s1149 + $0x28] sm:$0xff]
      %v1156 = vld [vmem:[%s1149 + $0x30] sm:$0xff]
      %v1157 = vld [vmem:[%s1149 + $0x38] sm:$0xff]
      %v1158 = vmul.f32 %v1150, %v946
      %v1159 = vmul.f32 %v1151, %v947
      %v1160 = vmul.f32 %v1152, %v948
      %v1161 = vmul.f32 %v1153, %v949
      %v1162 = vmul.f32 %v1154, %v950
      %v1163 = vmul.f32 %v1155, %v951
      %v1164 = vmul.f32 %v1156, %v952
      %v1165 = vmul.f32 %v1157, %v1148
      %v1166 = vadd.f32 %v1140, %v1158
      %v1167 = vadd.f32 %v1141, %v1159
      %v1168 = vadd.f32 %v1142, %v1160
      %v1169 = vadd.f32 %v1143, %v1161
      %v1170 = vadd.f32 %v1144, %v1162
      %v1171 = vadd.f32 %v1145, %v1163
      %v1172 = vadd.f32 %v1146, %v1164
      %v1173 = vadd.f32 %v1147, %v1165
      %v1174 = vld [vmem:[#allocation2 + $0x4a] sm:$0xff]
      %s1175 = scalar_lea.vmem %s6, 768
      %v1176 = vld [vmem:[%s1175] sm:$0xff]
      %v1177 = vld [vmem:[%s1175 + $0x8] sm:$0xff]
      %v1178 = vld [vmem:[%s1175 + $0x10] sm:$0xff]
      %v1179 = vld [vmem:[%s1175 + $0x18] sm:$0xff]
      %v1180 = vld [vmem:[%s1175 + $0x20] sm:$0xff]
      %v1181 = vld [vmem:[%s1175 + $0x28] sm:$0xff]
      %v1182 = vld [vmem:[%s1175 + $0x30] sm:$0xff]
      %v1183 = vld [vmem:[%s1175 + $0x38] sm:$0xff]
      %v1184 = vmul.f32 %v1176, %v979
      %v1185 = vmul.f32 %v1177, %v980
      %v1186 = vmul.f32 %v1178, %v981
      %v1187 = vmul.f32 %v1179, %v982
      %v1188 = vmul.f32 %v1180, %v983
      %v1189 = vmul.f32 %v1181, %v984
      %v1190 = vmul.f32 %v1182, %v985
      %v1191 = vmul.f32 %v1183, %v1174
      %v1192 = vadd.f32 %v1166, %v1184
      %v1193 = vadd.f32 %v1167, %v1185
      %v1194 = vadd.f32 %v1168, %v1186
      %v1195 = vadd.f32 %v1169, %v1187
      %v1196 = vadd.f32 %v1170, %v1188
      %v1197 = vadd.f32 %v1171, %v1189
      %v1198 = vadd.f32 %v1172, %v1190
      %v1199 = vadd.f32 %v1173, %v1191
      %v1200 = vld [vmem:[#allocation2 + $0x4b] sm:$0xff]
      %s1201 = scalar_lea.vmem %s6, 832
      %v1202 = vld [vmem:[%s1201] sm:$0xff]
      %v1203 = vld [vmem:[%s1201 + $0x8] sm:$0xff]
      %v1204 = vld [vmem:[%s1201 + $0x10] sm:$0xff]
      %v1205 = vld [vmem:[%s1201 + $0x18] sm:$0xff]
      %v1206 = vld [vmem:[%s1201 + $0x20] sm:$0xff]
      %v1207 = vld [vmem:[%s1201 + $0x28] sm:$0xff]
      %v1208 = vld [vmem:[%s1201 + $0x30] sm:$0xff]
      %v1209 = vld [vmem:[%s1201 + $0x38] sm:$0xff]
      %v1210 = vmul.f32 %v1202, %v1012
      %v1211 = vmul.f32 %v1203, %v1013
      %v1212 = vmul.f32 %v1204, %v1014
      %v1213 = vmul.f32 %v1205, %v1015
      %v1214 = vmul.f32 %v1206, %v1016
      %v1215 = vmul.f32 %v1207, %v1017
      %v1216 = vmul.f32 %v1208, %v1018
      %v1217 = vmul.f32 %v1209, %v1200
      %v1218 = vadd.f32 %v1192, %v1210
      %v1219 = vadd.f32 %v1193, %v1211
      %v1220 = vadd.f32 %v1194, %v1212
      %v1221 = vadd.f32 %v1195, %v1213
      %v1222 = vadd.f32 %v1196, %v1214
      %v1223 = vadd.f32 %v1197, %v1215
      %v1224 = vadd.f32 %v1198, %v1216
      %v1225 = vadd.f32 %v1199, %v1217
      %v1226 = vld [vmem:[#allocation2 + $0x4d] sm:$0xff]
      %s1227 = scalar_lea.vmem %s6, 896
      %v1228 = vld [vmem:[%s1227] sm:$0xff]
      %v1229 = vld [vmem:[%s1227 + $0x8] sm:$0xff]
      %v1230 = vld [vmem:[%s1227 + $0x10] sm:$0xff]
      %v1231 = vld [vmem:[%s1227 + $0x18] sm:$0xff]
      %v1232 = vld [vmem:[%s1227 + $0x20] sm:$0xff]
      %v1233 = vld [vmem:[%s1227 + $0x28] sm:$0xff]
      %v1234 = vld [vmem:[%s1227 + $0x30] sm:$0xff]
      %v1235 = vld [vmem:[%s1227 + $0x38] sm:$0xff]
      %v1236 = vmul.f32 %v1228, %v816
      %v1237 = vmul.f32 %v1229, %v817
      %v1238 = vmul.f32 %v1230, %v818
      %v1239 = vmul.f32 %v1231, %v819
      %v1240 = vmul.f32 %v1232, %v820
      %v1241 = vmul.f32 %v1233, %v821
      %v1242 = vmul.f32 %v1234, %v1044
      %v1243 = vmul.f32 %v1235, %v1226
      %v1244 = vadd.f32 %v1218, %v1236
      %v1245 = vadd.f32 %v1219, %v1237
      %v1246 = vadd.f32 %v1220, %v1238
      %v1247 = vadd.f32 %v1221, %v1239
      %v1248 = vadd.f32 %v1222, %v1240
      %v1249 = vadd.f32 %v1223, %v1241
      %v1250 = vadd.f32 %v1224, %v1242
      %v1251 = vadd.f32 %v1225, %v1243
      %v1252 = vld [vmem:[#allocation2 + $0x4e] sm:$0xff]
      %s1253 = scalar_lea.vmem %s6, 960
      %v1254 = vld [vmem:[%s1253] sm:$0xff]
      %v1255 = vld [vmem:[%s1253 + $0x8] sm:$0xff]
      %v1256 = vld [vmem:[%s1253 + $0x10] sm:$0xff]
      %v1257 = vld [vmem:[%s1253 + $0x18] sm:$0xff]
      %v1258 = vld [vmem:[%s1253 + $0x20] sm:$0xff]
      %v1259 = vld [vmem:[%s1253 + $0x28] sm:$0xff]
      %v1260 = vld [vmem:[%s1253 + $0x30] sm:$0xff]
      %v1261 = vld [vmem:[%s1253 + $0x38] sm:$0xff]
      %v1262 = vmul.f32 %v1254, %v848
      %v1263 = vmul.f32 %v1255, %v849
      %v1264 = vmul.f32 %v1256, %v850
      %v1265 = vmul.f32 %v1257, %v851
      %v1266 = vmul.f32 %v1258, %v852
      %v1267 = vmul.f32 %v1259, %v853
      %v1268 = vmul.f32 %v1260, %v1070
      %v1269 = vmul.f32 %v1261, %v1252
      %v1270 = vadd.f32 %v1244, %v1262
      %v1271 = vadd.f32 %v1245, %v1263
      %v1272 = vadd.f32 %v1246, %v1264
      %v1273 = vadd.f32 %v1247, %v1265
      %v1274 = vadd.f32 %v1248, %v1266
      %v1275 = vadd.f32 %v1249, %v1267
      %v1276 = vadd.f32 %v1250, %v1268
      %v1277 = vadd.f32 %v1251, %v1269
      %v1278 = vld [vmem:[#allocation2 + $0x4f] sm:$0xff]
      %s1279 = scalar_lea.vmem %s6, 1024
      %v1280 = vld [vmem:[%s1279] sm:$0xff]
      %v1281 = vld [vmem:[%s1279 + $0x8] sm:$0xff]
      %v1282 = vld [vmem:[%s1279 + $0x10] sm:$0xff]
      %v1283 = vld [vmem:[%s1279 + $0x18] sm:$0xff]
      %v1284 = vld [vmem:[%s1279 + $0x20] sm:$0xff]
      %v1285 = vld [vmem:[%s1279 + $0x28] sm:$0xff]
      %v1286 = vld [vmem:[%s1279 + $0x30] sm:$0xff]
      %v1287 = vld [vmem:[%s1279 + $0x38] sm:$0xff]
      %v1288 = vmul.f32 %v1280, %v881
      %v1289 = vmul.f32 %v1281, %v882
      %v1290 = vmul.f32 %v1282, %v883
      %v1291 = vmul.f32 %v1283, %v884
      %v1292 = vmul.f32 %v1284, %v885
      %v1293 = vmul.f32 %v1285, %v886
      %v1294 = vmul.f32 %v1286, %v1096
      %v1295 = vmul.f32 %v1287, %v1278
      %v1296 = vadd.f32 %v1270, %v1288
      %v1297 = vadd.f32 %v1271, %v1289
      %v1298 = vadd.f32 %v1272, %v1290
      %v1299 = vadd.f32 %v1273, %v1291
      %v1300 = vadd.f32 %v1274, %v1292
      %v1301 = vadd.f32 %v1275, %v1293
      %v1302 = vadd.f32 %v1276, %v1294
      %v1303 = vadd.f32 %v1277, %v1295
      %v1304 = vld [vmem:[#allocation2 + $0x50] sm:$0xff]
      %s1305 = scalar_lea.vmem %s6, 1088
      %v1306 = vld [vmem:[%s1305] sm:$0xff]
      %v1307 = vld [vmem:[%s1305 + $0x8] sm:$0xff]
      %v1308 = vld [vmem:[%s1305 + $0x10] sm:$0xff]
      %v1309 = vld [vmem:[%s1305 + $0x18] sm:$0xff]
      %v1310 = vld [vmem:[%s1305 + $0x20] sm:$0xff]
      %v1311 = vld [vmem:[%s1305 + $0x28] sm:$0xff]
      %v1312 = vld [vmem:[%s1305 + $0x30] sm:$0xff]
      %v1313 = vld [vmem:[%s1305 + $0x38] sm:$0xff]
      %v1314 = vmul.f32 %v1306, %v914
      %v1315 = vmul.f32 %v1307, %v915
      %v1316 = vmul.f32 %v1308, %v916
      %v1317 = vmul.f32 %v1309, %v917
      %v1318 = vmul.f32 %v1310, %v918
      %v1319 = vmul.f32 %v1311, %v919
      %v1320 = vmul.f32 %v1312, %v1122
      %v1321 = vmul.f32 %v1313, %v1304
      %v1322 = vadd.f32 %v1296, %v1314
      %v1323 = vadd.f32 %v1297, %v1315
      %v1324 = vadd.f32 %v1298, %v1316
      %v1325 = vadd.f32 %v1299, %v1317
      %v1326 = vadd.f32 %v1300, %v1318
      %v1327 = vadd.f32 %v1301, %v1319
      %v1328 = vadd.f32 %v1302, %v1320
      %v1329 = vadd.f32 %v1303, %v1321
      %v1330 = vld [vmem:[#allocation2 + $0x51] sm:$0xff]
      %s1331 = scalar_lea.vmem %s6, 1152
      %v1332 = vld [vmem:[%s1331] sm:$0xff]
      %v1333 = vld [vmem:[%s1331 + $0x8] sm:$0xff]
      %v1334 = vld [vmem:[%s1331 + $0x10] sm:$0xff]
      %v1335 = vld [vmem:[%s1331 + $0x18] sm:$0xff]
      %v1336 = vld [vmem:[%s1331 + $0x20] sm:$0xff]
      %v1337 = vld [vmem:[%s1331 + $0x28] sm:$0xff]
      %v1338 = vld [vmem:[%s1331 + $0x30] sm:$0xff]
      %v1339 = vld [vmem:[%s1331 + $0x38] sm:$0xff]
      %v1340 = vmul.f32 %v1332, %v947
      %v1341 = vmul.f32 %v1333, %v948
      %v1342 = vmul.f32 %v1334, %v949
      %v1343 = vmul.f32 %v1335, %v950
      %v1344 = vmul.f32 %v1336, %v951
      %v1345 = vmul.f32 %v1337, %v952
      %v1346 = vmul.f32 %v1338, %v1148
      %v1347 = vmul.f32 %v1339, %v1330
      %v1348 = vadd.f32 %v1322, %v1340
      %v1349 = vadd.f32 %v1323, %v1341
      %v1350 = vadd.f32 %v1324, %v1342
      %v1351 = vadd.f32 %v1325, %v1343
      %v1352 = vadd.f32 %v1326, %v1344
      %v1353 = vadd.f32 %v1327, %v1345
      %v1354 = vadd.f32 %v1328, %v1346
      %v1355 = vadd.f32 %v1329, %v1347
      %v1356 = vld [vmem:[#allocation2 + $0x52] sm:$0xff]
      %s1357 = scalar_lea.vmem %s6, 1216
      %v1358 = vld [vmem:[%s1357] sm:$0xff]
      %v1359 = vld [vmem:[%s1357 + $0x8] sm:$0xff]
      %v1360 = vld [vmem:[%s1357 + $0x10] sm:$0xff]
      %v1361 = vld [vmem:[%s1357 + $0x18] sm:$0xff]
      %v1362 = vld [vmem:[%s1357 + $0x20] sm:$0xff]
      %v1363 = vld [vmem:[%s1357 + $0x28] sm:$0xff]
      %v1364 = vld [vmem:[%s1357 + $0x30] sm:$0xff]
      %v1365 = vld [vmem:[%s1357 + $0x38] sm:$0xff]
      %v1366 = vmul.f32 %v1358, %v980
      %v1367 = vmul.f32 %v1359, %v981
      %v1368 = vmul.f32 %v1360, %v982
      %v1369 = vmul.f32 %v1361, %v983
      %v1370 = vmul.f32 %v1362, %v984
      %v1371 = vmul.f32 %v1363, %v985
      %v1372 = vmul.f32 %v1364, %v1174
      %v1373 = vmul.f32 %v1365, %v1356
      %v1374 = vadd.f32 %v1348, %v1366
      %v1375 = vadd.f32 %v1349, %v1367
      %v1376 = vadd.f32 %v1350, %v1368
      %v1377 = vadd.f32 %v1351, %v1369
      %v1378 = vadd.f32 %v1352, %v1370
      %v1379 = vadd.f32 %v1353, %v1371
      %v1380 = vadd.f32 %v1354, %v1372
      %v1381 = vadd.f32 %v1355, %v1373
      %v1382 = vld [vmem:[#allocation2 + $0x53] sm:$0xff]
      %s1383 = scalar_lea.vmem %s6, 1280
      %v1384 = vld [vmem:[%s1383] sm:$0xff]
      %v1385 = vld [vmem:[%s1383 + $0x8] sm:$0xff]
      %v1386 = vld [vmem:[%s1383 + $0x10] sm:$0xff]
      %v1387 = vld [vmem:[%s1383 + $0x18] sm:$0xff]
      %v1388 = vld [vmem:[%s1383 + $0x20] sm:$0xff]
      %v1389 = vld [vmem:[%s1383 + $0x28] sm:$0xff]
      %v1390 = vld [vmem:[%s1383 + $0x30] sm:$0xff]
      %v1391 = vld [vmem:[%s1383 + $0x38] sm:$0xff]
      %v1392 = vmul.f32 %v1384, %v1013
      %v1393 = vmul.f32 %v1385, %v1014
      %v1394 = vmul.f32 %v1386, %v1015
      %v1395 = vmul.f32 %v1387, %v1016
      %v1396 = vmul.f32 %v1388, %v1017
      %v1397 = vmul.f32 %v1389, %v1018
      %v1398 = vmul.f32 %v1390, %v1200
      %v1399 = vmul.f32 %v1391, %v1382
      %v1400 = vadd.f32 %v1374, %v1392
      %v1401 = vadd.f32 %v1375, %v1393
      %v1402 = vadd.f32 %v1376, %v1394
      %v1403 = vadd.f32 %v1377, %v1395
      %v1404 = vadd.f32 %v1378, %v1396
      %v1405 = vadd.f32 %v1379, %v1397
      %v1406 = vadd.f32 %v1380, %v1398
      %v1407 = vadd.f32 %v1381, %v1399
      %v1408 = vld [vmem:[#allocation2 + $0x55] sm:$0xff]
      %s1409 = scalar_lea.vmem %s6, 1344
      %v1410 = vld [vmem:[%s1409] sm:$0xff]
      %v1411 = vld [vmem:[%s1409 + $0x8] sm:$0xff]
      %v1412 = vld [vmem:[%s1409 + $0x10] sm:$0xff]
      %v1413 = vld [vmem:[%s1409 + $0x18] sm:$0xff]
      %v1414 = vld [vmem:[%s1409 + $0x20] sm:$0xff]
      %v1415 = vld [vmem:[%s1409 + $0x28] sm:$0xff]
      %v1416 = vld [vmem:[%s1409 + $0x30] sm:$0xff]
      %v1417 = vld [vmem:[%s1409 + $0x38] sm:$0xff]
      %v1418 = vmul.f32 %v1410, %v817
      %v1419 = vmul.f32 %v1411, %v818
      %v1420 = vmul.f32 %v1412, %v819
      %v1421 = vmul.f32 %v1413, %v820
      %v1422 = vmul.f32 %v1414, %v821
      %v1423 = vmul.f32 %v1415, %v1044
      %v1424 = vmul.f32 %v1416, %v1226
      %v1425 = vmul.f32 %v1417, %v1408
      %v1426 = vadd.f32 %v1400, %v1418
      %v1427 = vadd.f32 %v1401, %v1419
      %v1428 = vadd.f32 %v1402, %v1420
      %v1429 = vadd.f32 %v1403, %v1421
      %v1430 = vadd.f32 %v1404, %v1422
      %v1431 = vadd.f32 %v1405, %v1423
      %v1432 = vadd.f32 %v1406, %v1424
      %v1433 = vadd.f32 %v1407, %v1425
      %v1434 = vld [vmem:[#allocation2 + $0x56] sm:$0xff]
      %s1435 = scalar_lea.vmem %s6, 1408
      %v1436 = vld [vmem:[%s1435] sm:$0xff]
      %v1437 = vld [vmem:[%s1435 + $0x8] sm:$0xff]
      %v1438 = vld [vmem:[%s1435 + $0x10] sm:$0xff]
      %v1439 = vld [vmem:[%s1435 + $0x18] sm:$0xff]
      %v1440 = vld [vmem:[%s1435 + $0x20] sm:$0xff]
      %v1441 = vld [vmem:[%s1435 + $0x28] sm:$0xff]
      %v1442 = vld [vmem:[%s1435 + $0x30] sm:$0xff]
      %v1443 = vld [vmem:[%s1435 + $0x38] sm:$0xff]
      %v1444 = vmul.f32 %v1436, %v849
      %v1445 = vmul.f32 %v1437, %v850
      %v1446 = vmul.f32 %v1438, %v851
      %v1447 = vmul.f32 %v1439, %v852
      %v1448 = vmul.f32 %v1440, %v853
      %v1449 = vmul.f32 %v1441, %v1070
      %v1450 = vmul.f32 %v1442, %v1252
      %v1451 = vmul.f32 %v1443, %v1434
      %v1452 = vadd.f32 %v1426, %v1444
      %v1453 = vadd.f32 %v1427, %v1445
      %v1454 = vadd.f32 %v1428, %v1446
      %v1455 = vadd.f32 %v1429, %v1447
      %v1456 = vadd.f32 %v1430, %v1448
      %v1457 = vadd.f32 %v1431, %v1449
      %v1458 = vadd.f32 %v1432, %v1450
      %v1459 = vadd.f32 %v1433, %v1451
      %v1460 = vld [vmem:[#allocation2 + $0x57] sm:$0xff]
      %s1461 = scalar_lea.vmem %s6, 1472
      %v1462 = vld [vmem:[%s1461] sm:$0xff]
      %v1463 = vld [vmem:[%s1461 + $0x8] sm:$0xff]
      %v1464 = vld [vmem:[%s1461 + $0x10] sm:$0xff]
      %v1465 = vld [vmem:[%s1461 + $0x18] sm:$0xff]
      %v1466 = vld [vmem:[%s1461 + $0x20] sm:$0xff]
      %v1467 = vld [vmem:[%s1461 + $0x28] sm:$0xff]
      %v1468 = vld [vmem:[%s1461 + $0x30] sm:$0xff]
      %v1469 = vld [vmem:[%s1461 + $0x38] sm:$0xff]
      %v1470 = vmul.f32 %v1462, %v882
      %v1471 = vmul.f32 %v1463, %v883
      %v1472 = vmul.f32 %v1464, %v884
      %v1473 = vmul.f32 %v1465, %v885
      %v1474 = vmul.f32 %v1466, %v886
      %v1475 = vmul.f32 %v1467, %v1096
      %v1476 = vmul.f32 %v1468, %v1278
      %v1477 = vmul.f32 %v1469, %v1460
      %v1478 = vadd.f32 %v1452, %v1470
      %v1479 = vadd.f32 %v1453, %v1471
      %v1480 = vadd.f32 %v1454, %v1472
      %v1481 = vadd.f32 %v1455, %v1473
      %v1482 = vadd.f32 %v1456, %v1474
      %v1483 = vadd.f32 %v1457, %v1475
      %v1484 = vadd.f32 %v1458, %v1476
      %v1485 = vadd.f32 %v1459, %v1477
      %v1486 = vld [vmem:[#allocation2 + $0x58] sm:$0xff]
      %s1487 = scalar_lea.vmem %s6, 1536
      %v1488 = vld [vmem:[%s1487] sm:$0xff]
      %v1489 = vld [vmem:[%s1487 + $0x8] sm:$0xff]
      %v1490 = vld [vmem:[%s1487 + $0x10] sm:$0xff]
      %v1491 = vld [vmem:[%s1487 + $0x18] sm:$0xff]
      %v1492 = vld [vmem:[%s1487 + $0x20] sm:$0xff]
      %v1493 = vld [vmem:[%s1487 + $0x28] sm:$0xff]
      %v1494 = vld [vmem:[%s1487 + $0x30] sm:$0xff]
      %v1495 = vld [vmem:[%s1487 + $0x38] sm:$0xff]
      %v1496 = vmul.f32 %v1488, %v915
      %v1497 = vmul.f32 %v1489, %v916
      %v1498 = vmul.f32 %v1490, %v917
      %v1499 = vmul.f32 %v1491, %v918
      %v1500 = vmul.f32 %v1492, %v919
      %v1501 = vmul.f32 %v1493, %v1122
      %v1502 = vmul.f32 %v1494, %v1304
      %v1503 = vmul.f32 %v1495, %v1486
      %v1504 = vadd.f32 %v1478, %v1496
      %v1505 = vadd.f32 %v1479, %v1497
      %v1506 = vadd.f32 %v1480, %v1498
      %v1507 = vadd.f32 %v1481, %v1499
      %v1508 = vadd.f32 %v1482, %v1500
      %v1509 = vadd.f32 %v1483, %v1501
      %v1510 = vadd.f32 %v1484, %v1502
      %v1511 = vadd.f32 %v1485, %v1503
      %v1512 = vld [vmem:[#allocation2 + $0x59] sm:$0xff]
      %s1513 = scalar_lea.vmem %s6, 1600
      %v1514 = vld [vmem:[%s1513] sm:$0xff]
      %v1515 = vld [vmem:[%s1513 + $0x8] sm:$0xff]
      %v1516 = vld [vmem:[%s1513 + $0x10] sm:$0xff]
      %v1517 = vld [vmem:[%s1513 + $0x18] sm:$0xff]
      %v1518 = vld [vmem:[%s1513 + $0x20] sm:$0xff]
      %v1519 = vld [vmem:[%s1513 + $0x28] sm:$0xff]
      %v1520 = vld [vmem:[%s1513 + $0x30] sm:$0xff]
      %v1521 = vld [vmem:[%s1513 + $0x38] sm:$0xff]
      %v1522 = vmul.f32 %v1514, %v948
      %v1523 = vmul.f32 %v1515, %v949
      %v1524 = vmul.f32 %v1516, %v950
      %v1525 = vmul.f32 %v1517, %v951
      %v1526 = vmul.f32 %v1518, %v952
      %v1527 = vmul.f32 %v1519, %v1148
      %v1528 = vmul.f32 %v1520, %v1330
      %v1529 = vmul.f32 %v1521, %v1512
      %v1530 = vadd.f32 %v1504, %v1522
      %v1531 = vadd.f32 %v1505, %v1523
      %v1532 = vadd.f32 %v1506, %v1524
      %v1533 = vadd.f32 %v1507, %v1525
      %v1534 = vadd.f32 %v1508, %v1526
      %v1535 = vadd.f32 %v1509, %v1527
      %v1536 = vadd.f32 %v1510, %v1528
      %v1537 = vadd.f32 %v1511, %v1529
      %v1538 = vld [vmem:[#allocation2 + $0x5a] sm:$0xff]
      %s1539 = scalar_lea.vmem %s6, 1664
      %v1540 = vld [vmem:[%s1539] sm:$0xff]
      %v1541 = vld [vmem:[%s1539 + $0x8] sm:$0xff]
      %v1542 = vld [vmem:[%s1539 + $0x10] sm:$0xff]
      %v1543 = vld [vmem:[%s1539 + $0x18] sm:$0xff]
      %v1544 = vld [vmem:[%s1539 + $0x20] sm:$0xff]
      %v1545 = vld [vmem:[%s1539 + $0x28] sm:$0xff]
      %v1546 = vld [vmem:[%s1539 + $0x30] sm:$0xff]
      %v1547 = vld [vmem:[%s1539 + $0x38] sm:$0xff]
      %v1548 = vmul.f32 %v1540, %v981
      %v1549 = vmul.f32 %v1541, %v982
      %v1550 = vmul.f32 %v1542, %v983
      %v1551 = vmul.f32 %v1543, %v984
      %v1552 = vmul.f32 %v1544, %v985
      %v1553 = vmul.f32 %v1545, %v1174
      %v1554 = vmul.f32 %v1546, %v1356
      %v1555 = vmul.f32 %v1547, %v1538
      %v1556 = vadd.f32 %v1530, %v1548
      %v1557 = vadd.f32 %v1531, %v1549
      %v1558 = vadd.f32 %v1532, %v1550
      %v1559 = vadd.f32 %v1533, %v1551
      %v1560 = vadd.f32 %v1534, %v1552
      %v1561 = vadd.f32 %v1535, %v1553
      %v1562 = vadd.f32 %v1536, %v1554
      %v1563 = vadd.f32 %v1537, %v1555
      %v1564 = vld [vmem:[#allocation2 + $0x5b] sm:$0xff]
      %s1565 = scalar_lea.vmem %s6, 1728
      %v1566 = vld [vmem:[%s1565] sm:$0xff]
      %v1567 = vld [vmem:[%s1565 + $0x8] sm:$0xff]
      %v1568 = vld [vmem:[%s1565 + $0x10] sm:$0xff]
      %v1569 = vld [vmem:[%s1565 + $0x18] sm:$0xff]
      %v1570 = vld [vmem:[%s1565 + $0x20] sm:$0xff]
      %v1571 = vld [vmem:[%s1565 + $0x28] sm:$0xff]
      %v1572 = vld [vmem:[%s1565 + $0x30] sm:$0xff]
      %v1573 = vld [vmem:[%s1565 + $0x38] sm:$0xff]
      %v1574 = vmul.f32 %v1566, %v1014
      %v1575 = vmul.f32 %v1567, %v1015
      %v1576 = vmul.f32 %v1568, %v1016
      %v1577 = vmul.f32 %v1569, %v1017
      %v1578 = vmul.f32 %v1570, %v1018
      %v1579 = vmul.f32 %v1571, %v1200
      %v1580 = vmul.f32 %v1572, %v1382
      %v1581 = vmul.f32 %v1573, %v1564
      %v1582 = vadd.f32 %v1556, %v1574
      %v1583 = vadd.f32 %v1557, %v1575
      %v1584 = vadd.f32 %v1558, %v1576
      %v1585 = vadd.f32 %v1559, %v1577
      %v1586 = vadd.f32 %v1560, %v1578
      %v1587 = vadd.f32 %v1561, %v1579
      %v1588 = vadd.f32 %v1562, %v1580
      %v1589 = vadd.f32 %v1563, %v1581
      %v1590 = vld [vmem:[#allocation2 + $0x5d] sm:$0xff]
      %s1591 = scalar_lea.vmem %s6, 1792
      %v1592 = vld [vmem:[%s1591] sm:$0xff]
      %v1593 = vld [vmem:[%s1591 + $0x8] sm:$0xff]
      %v1594 = vld [vmem:[%s1591 + $0x10] sm:$0xff]
      %v1595 = vld [vmem:[%s1591 + $0x18] sm:$0xff]
      %v1596 = vld [vmem:[%s1591 + $0x20] sm:$0xff]
      %v1597 = vld [vmem:[%s1591 + $0x28] sm:$0xff]
      %v1598 = vld [vmem:[%s1591 + $0x30] sm:$0xff]
      %v1599 = vld [vmem:[%s1591 + $0x38] sm:$0xff]
      %v1600 = vmul.f32 %v1592, %v818
      %v1601 = vmul.f32 %v1593, %v819
      %v1602 = vmul.f32 %v1594, %v820
      %v1603 = vmul.f32 %v1595, %v821
      %v1604 = vmul.f32 %v1596, %v1044
      %v1605 = vmul.f32 %v1597, %v1226
      %v1606 = vmul.f32 %v1598, %v1408
      %v1607 = vmul.f32 %v1599, %v1590
      %v1608 = vadd.f32 %v1582, %v1600
      %v1609 = vadd.f32 %v1583, %v1601
      %v1610 = vadd.f32 %v1584, %v1602
      %v1611 = vadd.f32 %v1585, %v1603
      %v1612 = vadd.f32 %v1586, %v1604
      %v1613 = vadd.f32 %v1587, %v1605
      %v1614 = vadd.f32 %v1588, %v1606
      %v1615 = vadd.f32 %v1589, %v1607
      %v1616 = vld [vmem:[#allocation2 + $0x5e] sm:$0xff]
      %s1617 = scalar_lea.vmem %s6, 1856
      %v1618 = vld [vmem:[%s1617] sm:$0xff]
      %v1619 = vld [vmem:[%s1617 + $0x8] sm:$0xff]
      %v1620 = vld [vmem:[%s1617 + $0x10] sm:$0xff]
      %v1621 = vld [vmem:[%s1617 + $0x18] sm:$0xff]
      %v1622 = vld [vmem:[%s1617 + $0x20] sm:$0xff]
      %v1623 = vld [vmem:[%s1617 + $0x28] sm:$0xff]
      %v1624 = vld [vmem:[%s1617 + $0x30] sm:$0xff]
      %v1625 = vld [vmem:[%s1617 + $0x38] sm:$0xff]
      %v1626 = vmul.f32 %v1618, %v850
      %v1627 = vmul.f32 %v1619, %v851
      %v1628 = vmul.f32 %v1620, %v852
      %v1629 = vmul.f32 %v1621, %v853
      %v1630 = vmul.f32 %v1622, %v1070
      %v1631 = vmul.f32 %v1623, %v1252
      %v1632 = vmul.f32 %v1624, %v1434
      %v1633 = vmul.f32 %v1625, %v1616
      %v1634 = vadd.f32 %v1608, %v1626
      %v1635 = vadd.f32 %v1609, %v1627
      %v1636 = vadd.f32 %v1610, %v1628
      %v1637 = vadd.f32 %v1611, %v1629
      %v1638 = vadd.f32 %v1612, %v1630
      %v1639 = vadd.f32 %v1613, %v1631
      %v1640 = vadd.f32 %v1614, %v1632
      %v1641 = vadd.f32 %v1615, %v1633
      %v1642 = vld [vmem:[#allocation2 + $0x5f] sm:$0xff]
      %s1643 = scalar_lea.vmem %s6, 1920
      %v1644 = vld [vmem:[%s1643] sm:$0xff]
      %v1645 = vld [vmem:[%s1643 + $0x8] sm:$0xff]
      %v1646 = vld [vmem:[%s1643 + $0x10] sm:$0xff]
      %v1647 = vld [vmem:[%s1643 + $0x18] sm:$0xff]
      %v1648 = vld [vmem:[%s1643 + $0x20] sm:$0xff]
      %v1649 = vld [vmem:[%s1643 + $0x28] sm:$0xff]
      %v1650 = vld [vmem:[%s1643 + $0x30] sm:$0xff]
      %v1651 = vld [vmem:[%s1643 + $0x38] sm:$0xff]
      %v1652 = vmul.f32 %v1644, %v883
      %v1653 = vmul.f32 %v1645, %v884
      %v1654 = vmul.f32 %v1646, %v885
      %v1655 = vmul.f32 %v1647, %v886
      %v1656 = vmul.f32 %v1648, %v1096
      %v1657 = vmul.f32 %v1649, %v1278
      %v1658 = vmul.f32 %v1650, %v1460
      %v1659 = vmul.f32 %v1651, %v1642
      %v1660 = vadd.f32 %v1634, %v1652
      %v1661 = vadd.f32 %v1635, %v1653
      %v1662 = vadd.f32 %v1636, %v1654
      %v1663 = vadd.f32 %v1637, %v1655
      %v1664 = vadd.f32 %v1638, %v1656
      %v1665 = vadd.f32 %v1639, %v1657
      %v1666 = vadd.f32 %v1640, %v1658
      %v1667 = vadd.f32 %v1641, %v1659
      %v1668 = vld [vmem:[#allocation2 + $0x60] sm:$0xff]
      %s1669 = scalar_lea.vmem %s6, 1984
      %v1670 = vld [vmem:[%s1669] sm:$0xff]
      %v1671 = vld [vmem:[%s1669 + $0x8] sm:$0xff]
      %v1672 = vld [vmem:[%s1669 + $0x10] sm:$0xff]
      %v1673 = vld [vmem:[%s1669 + $0x18] sm:$0xff]
      %v1674 = vld [vmem:[%s1669 + $0x20] sm:$0xff]
      %v1675 = vld [vmem:[%s1669 + $0x28] sm:$0xff]
      %v1676 = vld [vmem:[%s1669 + $0x30] sm:$0xff]
      %v1677 = vld [vmem:[%s1669 + $0x38] sm:$0xff]
      %v1678 = vmul.f32 %v1670, %v916
      %v1679 = vmul.f32 %v1671, %v917
      %v1680 = vmul.f32 %v1672, %v918
      %v1681 = vmul.f32 %v1673, %v919
      %v1682 = vmul.f32 %v1674, %v1122
      %v1683 = vmul.f32 %v1675, %v1304
      %v1684 = vmul.f32 %v1676, %v1486
      %v1685 = vmul.f32 %v1677, %v1668
      %v1686 = vadd.f32 %v1660, %v1678
      %v1687 = vadd.f32 %v1661, %v1679
      %v1688 = vadd.f32 %v1662, %v1680
      %v1689 = vadd.f32 %v1663, %v1681
      %v1690 = vadd.f32 %v1664, %v1682
      %v1691 = vadd.f32 %v1665, %v1683
      %v1692 = vadd.f32 %v1666, %v1684
      %v1693 = vadd.f32 %v1667, %v1685
      %v1694 = vld [vmem:[#allocation2 + $0x61] sm:$0xff]
      %s1695 = scalar_lea.vmem %s6, 2048
      %v1696 = vld [vmem:[%s1695] sm:$0xff]
      %v1697 = vld [vmem:[%s1695 + $0x8] sm:$0xff]
      %v1698 = vld [vmem:[%s1695 + $0x10] sm:$0xff]
      %v1699 = vld [vmem:[%s1695 + $0x18] sm:$0xff]
      %v1700 = vld [vmem:[%s1695 + $0x20] sm:$0xff]
      %v1701 = vld [vmem:[%s1695 + $0x28] sm:$0xff]
      %v1702 = vld [vmem:[%s1695 + $0x30] sm:$0xff]
      %v1703 = vld [vmem:[%s1695 + $0x38] sm:$0xff]
      %v1704 = vmul.f32 %v1696, %v949
      %v1705 = vmul.f32 %v1697, %v950
      %v1706 = vmul.f32 %v1698, %v951
      %v1707 = vmul.f32 %v1699, %v952
      %v1708 = vmul.f32 %v1700, %v1148
      %v1709 = vmul.f32 %v1701, %v1330
      %v1710 = vmul.f32 %v1702, %v1512
      %v1711 = vmul.f32 %v1703, %v1694
      %v1712 = vadd.f32 %v1686, %v1704
      %v1713 = vadd.f32 %v1687, %v1705
      %v1714 = vadd.f32 %v1688, %v1706
      %v1715 = vadd.f32 %v1689, %v1707
      %v1716 = vadd.f32 %v1690, %v1708
      %v1717 = vadd.f32 %v1691, %v1709
      %v1718 = vadd.f32 %v1692, %v1710
      %v1719 = vadd.f32 %v1693, %v1711
      %v1720 = vld [vmem:[#allocation2 + $0x62] sm:$0xff]
      %s1721 = scalar_lea.vmem %s6, 2112
      %v1722 = vld [vmem:[%s1721] sm:$0xff]
      %v1723 = vld [vmem:[%s1721 + $0x8] sm:$0xff]
      %v1724 = vld [vmem:[%s1721 + $0x10] sm:$0xff]
      %v1725 = vld [vmem:[%s1721 + $0x18] sm:$0xff]
      %v1726 = vld [vmem:[%s1721 + $0x20] sm:$0xff]
      %v1727 = vld [vmem:[%s1721 + $0x28] sm:$0xff]
      %v1728 = vld [vmem:[%s1721 + $0x30] sm:$0xff]
      %v1729 = vld [vmem:[%s1721 + $0x38] sm:$0xff]
      %v1730 = vmul.f32 %v1722, %v982
      %v1731 = vmul.f32 %v1723, %v983
      %v1732 = vmul.f32 %v1724, %v984
      %v1733 = vmul.f32 %v1725, %v985
      %v1734 = vmul.f32 %v1726, %v1174
      %v1735 = vmul.f32 %v1727, %v1356
      %v1736 = vmul.f32 %v1728, %v1538
      %v1737 = vmul.f32 %v1729, %v1720
      %v1738 = vadd.f32 %v1712, %v1730
      %v1739 = vadd.f32 %v1713, %v1731
      %v1740 = vadd.f32 %v1714, %v1732
      %v1741 = vadd.f32 %v1715, %v1733
      %v1742 = vadd.f32 %v1716, %v1734
      %v1743 = vadd.f32 %v1717, %v1735
      %v1744 = vadd.f32 %v1718, %v1736
      %v1745 = vadd.f32 %v1719, %v1737
      %v1746 = vld [vmem:[#allocation2 + $0x63] sm:$0xff]
      %s1747 = scalar_lea.vmem %s6, 2176
      %v1748 = vld [vmem:[%s1747] sm:$0xff]
      %v1749 = vld [vmem:[%s1747 + $0x8] sm:$0xff]
      %v1750 = vld [vmem:[%s1747 + $0x10] sm:$0xff]
      %v1751 = vld [vmem:[%s1747 + $0x18] sm:$0xff]
      %v1752 = vld [vmem:[%s1747 + $0x20] sm:$0xff]
      %v1753 = vld [vmem:[%s1747 + $0x28] sm:$0xff]
      %v1754 = vld [vmem:[%s1747 + $0x30] sm:$0xff]
      %v1755 = vld [vmem:[%s1747 + $0x38] sm:$0xff]
      %v1756 = vmul.f32 %v1748, %v1015
      %v1757 = vmul.f32 %v1749, %v1016
      %v1758 = vmul.f32 %v1750, %v1017
      %v1759 = vmul.f32 %v1751, %v1018
      %v1760 = vmul.f32 %v1752, %v1200
      %v1761 = vmul.f32 %v1753, %v1382
      %v1762 = vmul.f32 %v1754, %v1564
      %v1763 = vmul.f32 %v1755, %v1746
      %v1764 = vadd.f32 %v1738, %v1756
      %v1765 = vadd.f32 %v1739, %v1757
      %v1766 = vadd.f32 %v1740, %v1758
      %v1767 = vadd.f32 %v1741, %v1759
      %v1768 = vadd.f32 %v1742, %v1760
      %v1769 = vadd.f32 %v1743, %v1761
      %v1770 = vadd.f32 %v1744, %v1762
      %v1771 = vadd.f32 %v1745, %v1763
      %v1772 = vld [vmem:[#allocation2 + $0x65] sm:$0xff]
      %s1773 = scalar_lea.vmem %s6, 2240
      %v1774 = vld [vmem:[%s1773] sm:$0xff]
      %v1775 = vld [vmem:[%s1773 + $0x8] sm:$0xff]
      %v1776 = vld [vmem:[%s1773 + $0x10] sm:$0xff]
      %v1777 = vld [vmem:[%s1773 + $0x18] sm:$0xff]
      %v1778 = vld [vmem:[%s1773 + $0x20] sm:$0xff]
      %v1779 = vld [vmem:[%s1773 + $0x28] sm:$0xff]
      %v1780 = vld [vmem:[%s1773 + $0x30] sm:$0xff]
      %v1781 = vld [vmem:[%s1773 + $0x38] sm:$0xff]
      %v1782 = vmul.f32 %v1774, %v819
      %v1783 = vmul.f32 %v1775, %v820
      %v1784 = vmul.f32 %v1776, %v821
      %v1785 = vmul.f32 %v1777, %v1044
      %v1786 = vmul.f32 %v1778, %v1226
      %v1787 = vmul.f32 %v1779, %v1408
      %v1788 = vmul.f32 %v1780, %v1590
      %v1789 = vmul.f32 %v1781, %v1772
      %v1790 = vadd.f32 %v1764, %v1782
      %v1791 = vadd.f32 %v1765, %v1783
      %v1792 = vadd.f32 %v1766, %v1784
      %v1793 = vadd.f32 %v1767, %v1785
      %v1794 = vadd.f32 %v1768, %v1786
      %v1795 = vadd.f32 %v1769, %v1787
      %v1796 = vadd.f32 %v1770, %v1788
      %v1797 = vadd.f32 %v1771, %v1789
      %v1798 = vld [vmem:[#allocation2 + $0x66] sm:$0xff]
      %s1799 = scalar_lea.vmem %s6, 2304
      %v1800 = vld [vmem:[%s1799] sm:$0xff]
      %v1801 = vld [vmem:[%s1799 + $0x8] sm:$0xff]
      %v1802 = vld [vmem:[%s1799 + $0x10] sm:$0xff]
      %v1803 = vld [vmem:[%s1799 + $0x18] sm:$0xff]
      %v1804 = vld [vmem:[%s1799 + $0x20] sm:$0xff]
      %v1805 = vld [vmem:[%s1799 + $0x28] sm:$0xff]
      %v1806 = vld [vmem:[%s1799 + $0x30] sm:$0xff]
      %v1807 = vld [vmem:[%s1799 + $0x38] sm:$0xff]
      %v1808 = vmul.f32 %v1800, %v851
      %v1809 = vmul.f32 %v1801, %v852
      %v1810 = vmul.f32 %v1802, %v853
      %v1811 = vmul.f32 %v1803, %v1070
      %v1812 = vmul.f32 %v1804, %v1252
      %v1813 = vmul.f32 %v1805, %v1434
      %v1814 = vmul.f32 %v1806, %v1616
      %v1815 = vmul.f32 %v1807, %v1798
      %v1816 = vadd.f32 %v1790, %v1808
      %v1817 = vadd.f32 %v1791, %v1809
      %v1818 = vadd.f32 %v1792, %v1810
      %v1819 = vadd.f32 %v1793, %v1811
      %v1820 = vadd.f32 %v1794, %v1812
      %v1821 = vadd.f32 %v1795, %v1813
      %v1822 = vadd.f32 %v1796, %v1814
      %v1823 = vadd.f32 %v1797, %v1815
      %v1824 = vld [vmem:[#allocation2 + $0x67] sm:$0xff]
      %s1825 = scalar_lea.vmem %s6, 2368
      %v1826 = vld [vmem:[%s1825] sm:$0xff]
      %v1827 = vld [vmem:[%s1825 + $0x8] sm:$0xff]
      %v1828 = vld [vmem:[%s1825 + $0x10] sm:$0xff]
      %v1829 = vld [vmem:[%s1825 + $0x18] sm:$0xff]
      %v1830 = vld [vmem:[%s1825 + $0x20] sm:$0xff]
      %v1831 = vld [vmem:[%s1825 + $0x28] sm:$0xff]
      %v1832 = vld [vmem:[%s1825 + $0x30] sm:$0xff]
      %v1833 = vld [vmem:[%s1825 + $0x38] sm:$0xff]
      %v1834 = vmul.f32 %v1826, %v884
      %v1835 = vmul.f32 %v1827, %v885
      %v1836 = vmul.f32 %v1828, %v886
      %v1837 = vmul.f32 %v1829, %v1096
      %v1838 = vmul.f32 %v1830, %v1278
      %v1839 = vmul.f32 %v1831, %v1460
      %v1840 = vmul.f32 %v1832, %v1642
      %v1841 = vmul.f32 %v1833, %v1824
      %v1842 = vadd.f32 %v1816, %v1834
      %v1843 = vadd.f32 %v1817, %v1835
      %v1844 = vadd.f32 %v1818, %v1836
      %v1845 = vadd.f32 %v1819, %v1837
      %v1846 = vadd.f32 %v1820, %v1838
      %v1847 = vadd.f32 %v1821, %v1839
      %v1848 = vadd.f32 %v1822, %v1840
      %v1849 = vadd.f32 %v1823, %v1841
      %v1850 = vld [vmem:[#allocation2 + $0x68] sm:$0xff]
      %s1851 = scalar_lea.vmem %s6, 2432
      %v1852 = vld [vmem:[%s1851] sm:$0xff]
      %v1853 = vld [vmem:[%s1851 + $0x8] sm:$0xff]
      %v1854 = vld [vmem:[%s1851 + $0x10] sm:$0xff]
      %v1855 = vld [vmem:[%s1851 + $0x18] sm:$0xff]
      %v1856 = vld [vmem:[%s1851 + $0x20] sm:$0xff]
      %v1857 = vld [vmem:[%s1851 + $0x28] sm:$0xff]
      %v1858 = vld [vmem:[%s1851 + $0x30] sm:$0xff]
      %v1859 = vld [vmem:[%s1851 + $0x38] sm:$0xff]
      %v1860 = vmul.f32 %v1852, %v917
      %v1861 = vmul.f32 %v1853, %v918
      %v1862 = vmul.f32 %v1854, %v919
      %v1863 = vmul.f32 %v1855, %v1122
      %v1864 = vmul.f32 %v1856, %v1304
      %v1865 = vmul.f32 %v1857, %v1486
      %v1866 = vmul.f32 %v1858, %v1668
      %v1867 = vmul.f32 %v1859, %v1850
      %v1868 = vadd.f32 %v1842, %v1860
      %v1869 = vadd.f32 %v1843, %v1861
      %v1870 = vadd.f32 %v1844, %v1862
      %v1871 = vadd.f32 %v1845, %v1863
      %v1872 = vadd.f32 %v1846, %v1864
      %v1873 = vadd.f32 %v1847, %v1865
      %v1874 = vadd.f32 %v1848, %v1866
      %v1875 = vadd.f32 %v1849, %v1867
      %v1876 = vld [vmem:[#allocation2 + $0x69] sm:$0xff]
      %s1877 = scalar_lea.vmem %s6, 2496
      %v1878 = vld [vmem:[%s1877] sm:$0xff]
      %v1879 = vld [vmem:[%s1877 + $0x8] sm:$0xff]
      %v1880 = vld [vmem:[%s1877 + $0x10] sm:$0xff]
      %v1881 = vld [vmem:[%s1877 + $0x18] sm:$0xff]
      %v1882 = vld [vmem:[%s1877 + $0x20] sm:$0xff]
      %v1883 = vld [vmem:[%s1877 + $0x28] sm:$0xff]
      %v1884 = vld [vmem:[%s1877 + $0x30] sm:$0xff]
      %v1885 = vld [vmem:[%s1877 + $0x38] sm:$0xff]
      %v1886 = vmul.f32 %v1878, %v950
      %v1887 = vmul.f32 %v1879, %v951
      %v1888 = vmul.f32 %v1880, %v952
      %v1889 = vmul.f32 %v1881, %v1148
      %v1890 = vmul.f32 %v1882, %v1330
      %v1891 = vmul.f32 %v1883, %v1512
      %v1892 = vmul.f32 %v1884, %v1694
      %v1893 = vmul.f32 %v1885, %v1876
      %v1894 = vadd.f32 %v1868, %v1886
      %v1895 = vadd.f32 %v1869, %v1887
      %v1896 = vadd.f32 %v1870, %v1888
      %v1897 = vadd.f32 %v1871, %v1889
      %v1898 = vadd.f32 %v1872, %v1890
      %v1899 = vadd.f32 %v1873, %v1891
      %v1900 = vadd.f32 %v1874, %v1892
      %v1901 = vadd.f32 %v1875, %v1893
      %v1902 = vld [vmem:[#allocation2 + $0x6a] sm:$0xff]
      %s1903 = scalar_lea.vmem %s6, 2560
      %v1904 = vld [vmem:[%s1903] sm:$0xff]
      %v1905 = vld [vmem:[%s1903 + $0x8] sm:$0xff]
      %v1906 = vld [vmem:[%s1903 + $0x10] sm:$0xff]
      %v1907 = vld [vmem:[%s1903 + $0x18] sm:$0xff]
      %v1908 = vld [vmem:[%s1903 + $0x20] sm:$0xff]
      %v1909 = vld [vmem:[%s1903 + $0x28] sm:$0xff]
      %v1910 = vld [vmem:[%s1903 + $0x30] sm:$0xff]
      %v1911 = vld [vmem:[%s1903 + $0x38] sm:$0xff]
      %v1912 = vmul.f32 %v1904, %v983
      %v1913 = vmul.f32 %v1905, %v984
      %v1914 = vmul.f32 %v1906, %v985
      %v1915 = vmul.f32 %v1907, %v1174
      %v1916 = vmul.f32 %v1908, %v1356
      %v1917 = vmul.f32 %v1909, %v1538
      %v1918 = vmul.f32 %v1910, %v1720
      %v1919 = vmul.f32 %v1911, %v1902
      %v1920 = vadd.f32 %v1894, %v1912
      %v1921 = vadd.f32 %v1895, %v1913
      %v1922 = vadd.f32 %v1896, %v1914
      %v1923 = vadd.f32 %v1897, %v1915
      %v1924 = vadd.f32 %v1898, %v1916
      %v1925 = vadd.f32 %v1899, %v1917
      %v1926 = vadd.f32 %v1900, %v1918
      %v1927 = vadd.f32 %v1901, %v1919
      %v1928 = vld [vmem:[#allocation2 + $0x6b] sm:$0xff]
      %s1929 = scalar_lea.vmem %s6, 2624
      %v1930 = vld [vmem:[%s1929] sm:$0xff]
      %v1931 = vld [vmem:[%s1929 + $0x8] sm:$0xff]
      %v1932 = vld [vmem:[%s1929 + $0x10] sm:$0xff]
      %v1933 = vld [vmem:[%s1929 + $0x18] sm:$0xff]
      %v1934 = vld [vmem:[%s1929 + $0x20] sm:$0xff]
      %v1935 = vld [vmem:[%s1929 + $0x28] sm:$0xff]
      %v1936 = vld [vmem:[%s1929 + $0x30] sm:$0xff]
      %v1937 = vld [vmem:[%s1929 + $0x38] sm:$0xff]
      %v1938 = vmul.f32 %v1930, %v1016
      %v1939 = vmul.f32 %v1931, %v1017
      %v1940 = vmul.f32 %v1932, %v1018
      %v1941 = vmul.f32 %v1933, %v1200
      %v1942 = vmul.f32 %v1934, %v1382
      %v1943 = vmul.f32 %v1935, %v1564
      %v1944 = vmul.f32 %v1936, %v1746
      %v1945 = vmul.f32 %v1937, %v1928
      %v1946 = vadd.f32 %v1920, %v1938
      %v1947 = vadd.f32 %v1921, %v1939
      %v1948 = vadd.f32 %v1922, %v1940
      %v1949 = vadd.f32 %v1923, %v1941
      %v1950 = vadd.f32 %v1924, %v1942
      %v1951 = vadd.f32 %v1925, %v1943
      %v1952 = vadd.f32 %v1926, %v1944
      %v1953 = vadd.f32 %v1927, %v1945
      %v1954 = vld [vmem:[#allocation2 + $0x6d] sm:$0xff]
      %s1955 = scalar_lea.vmem %s6, 2688
      %v1956 = vld [vmem:[%s1955] sm:$0xff]
      %v1957 = vld [vmem:[%s1955 + $0x8] sm:$0xff]
      %v1958 = vld [vmem:[%s1955 + $0x10] sm:$0xff]
      %v1959 = vld [vmem:[%s1955 + $0x18] sm:$0xff]
      %v1960 = vld [vmem:[%s1955 + $0x20] sm:$0xff]
      %v1961 = vld [vmem:[%s1955 + $0x28] sm:$0xff]
      %v1962 = vld [vmem:[%s1955 + $0x30] sm:$0xff]
      %v1963 = vld [vmem:[%s1955 + $0x38] sm:$0xff]
      %v1964 = vmul.f32 %v1956, %v820
      %v1965 = vmul.f32 %v1957, %v821
      %v1966 = vmul.f32 %v1958, %v1044
      %v1967 = vmul.f32 %v1959, %v1226
      %v1968 = vmul.f32 %v1960, %v1408
      %v1969 = vmul.f32 %v1961, %v1590
      %v1970 = vmul.f32 %v1962, %v1772
      %v1971 = vmul.f32 %v1963, %v1954
      %v1972 = vadd.f32 %v1946, %v1964
      %v1973 = vadd.f32 %v1947, %v1965
      %v1974 = vadd.f32 %v1948, %v1966
      %v1975 = vadd.f32 %v1949, %v1967
      %v1976 = vadd.f32 %v1950, %v1968
      %v1977 = vadd.f32 %v1951, %v1969
      %v1978 = vadd.f32 %v1952, %v1970
      %v1979 = vadd.f32 %v1953, %v1971
      %v1980 = vld [vmem:[#allocation2 + $0x6e] sm:$0xff]
      %s1981 = scalar_lea.vmem %s6, 2752
      %v1982 = vld [vmem:[%s1981] sm:$0xff]
      %v1983 = vld [vmem:[%s1981 + $0x8] sm:$0xff]
      %v1984 = vld [vmem:[%s1981 + $0x10] sm:$0xff]
      %v1985 = vld [vmem:[%s1981 + $0x18] sm:$0xff]
      %v1986 = vld [vmem:[%s1981 + $0x20] sm:$0xff]
      %v1987 = vld [vmem:[%s1981 + $0x28] sm:$0xff]
      %v1988 = vld [vmem:[%s1981 + $0x30] sm:$0xff]
      %v1989 = vld [vmem:[%s1981 + $0x38] sm:$0xff]
      %v1990 = vmul.f32 %v1982, %v852
      %v1991 = vmul.f32 %v1983, %v853
      %v1992 = vmul.f32 %v1984, %v1070
      %v1993 = vmul.f32 %v1985, %v1252
      %v1994 = vmul.f32 %v1986, %v1434
      %v1995 = vmul.f32 %v1987, %v1616
      %v1996 = vmul.f32 %v1988, %v1798
      %v1997 = vmul.f32 %v1989, %v1980
      %v1998 = vadd.f32 %v1972, %v1990
      %v1999 = vadd.f32 %v1973, %v1991
      %v2000 = vadd.f32 %v1974, %v1992
      %v2001 = vadd.f32 %v1975, %v1993
      %v2002 = vadd.f32 %v1976, %v1994
      %v2003 = vadd.f32 %v1977, %v1995
      %v2004 = vadd.f32 %v1978, %v1996
      %v2005 = vadd.f32 %v1979, %v1997
      %v2006 = vld [vmem:[#allocation2 + $0x6f] sm:$0xff]
      %s2007 = scalar_lea.vmem %s6, 2816
      %v2008 = vld [vmem:[%s2007] sm:$0xff]
      %v2009 = vld [vmem:[%s2007 + $0x8] sm:$0xff]
      %v2010 = vld [vmem:[%s2007 + $0x10] sm:$0xff]
      %v2011 = vld [vmem:[%s2007 + $0x18] sm:$0xff]
      %v2012 = vld [vmem:[%s2007 + $0x20] sm:$0xff]
      %v2013 = vld [vmem:[%s2007 + $0x28] sm:$0xff]
      %v2014 = vld [vmem:[%s2007 + $0x30] sm:$0xff]
      %v2015 = vld [vmem:[%s2007 + $0x38] sm:$0xff]
      %v2016 = vmul.f32 %v2008, %v885
      %v2017 = vmul.f32 %v2009, %v886
      %v2018 = vmul.f32 %v2010, %v1096
      %v2019 = vmul.f32 %v2011, %v1278
      %v2020 = vmul.f32 %v2012, %v1460
      %v2021 = vmul.f32 %v2013, %v1642
      %v2022 = vmul.f32 %v2014, %v1824
      %v2023 = vmul.f32 %v2015, %v2006
      %v2024 = vadd.f32 %v1998, %v2016
      %v2025 = vadd.f32 %v1999, %v2017
      %v2026 = vadd.f32 %v2000, %v2018
      %v2027 = vadd.f32 %v2001, %v2019
      %v2028 = vadd.f32 %v2002, %v2020
      %v2029 = vadd.f32 %v2003, %v2021
      %v2030 = vadd.f32 %v2004, %v2022
      %v2031 = vadd.f32 %v2005, %v2023
      %v2032 = vld [vmem:[#allocation2 + $0x70] sm:$0xff]
      %s2033 = scalar_lea.vmem %s6, 2880
      %v2034 = vld [vmem:[%s2033] sm:$0xff]
      %v2035 = vld [vmem:[%s2033 + $0x8] sm:$0xff]
      %v2036 = vld [vmem:[%s2033 + $0x10] sm:$0xff]
      %v2037 = vld [vmem:[%s2033 + $0x18] sm:$0xff]
      %v2038 = vld [vmem:[%s2033 + $0x20] sm:$0xff]
      %v2039 = vld [vmem:[%s2033 + $0x28] sm:$0xff]
      %v2040 = vld [vmem:[%s2033 + $0x30] sm:$0xff]
      %v2041 = vld [vmem:[%s2033 + $0x38] sm:$0xff]
      %v2042 = vmul.f32 %v2034, %v918
      %v2043 = vmul.f32 %v2035, %v919
      %v2044 = vmul.f32 %v2036, %v1122
      %v2045 = vmul.f32 %v2037, %v1304
      %v2046 = vmul.f32 %v2038, %v1486
      %v2047 = vmul.f32 %v2039, %v1668
      %v2048 = vmul.f32 %v2040, %v1850
      %v2049 = vmul.f32 %v2041, %v2032
      %v2050 = vadd.f32 %v2024, %v2042
      %v2051 = vadd.f32 %v2025, %v2043
      %v2052 = vadd.f32 %v2026, %v2044
      %v2053 = vadd.f32 %v2027, %v2045
      %v2054 = vadd.f32 %v2028, %v2046
      %v2055 = vadd.f32 %v2029, %v2047
      %v2056 = vadd.f32 %v2030, %v2048
      %v2057 = vadd.f32 %v2031, %v2049
      %v2058 = vld [vmem:[#allocation2 + $0x71] sm:$0xff]
      %s2059 = scalar_lea.vmem %s6, 2944
      %v2060 = vld [vmem:[%s2059] sm:$0xff]
      %v2061 = vld [vmem:[%s2059 + $0x8] sm:$0xff]
      %v2062 = vld [vmem:[%s2059 + $0x10] sm:$0xff]
      %v2063 = vld [vmem:[%s2059 + $0x18] sm:$0xff]
      %v2064 = vld [vmem:[%s2059 + $0x20] sm:$0xff]
      %v2065 = vld [vmem:[%s2059 + $0x28] sm:$0xff]
      %v2066 = vld [vmem:[%s2059 + $0x30] sm:$0xff]
      %v2067 = vld [vmem:[%s2059 + $0x38] sm:$0xff]
      %v2068 = vmul.f32 %v2060, %v951
      %v2069 = vmul.f32 %v2061, %v952
      %v2070 = vmul.f32 %v2062, %v1148
      %v2071 = vmul.f32 %v2063, %v1330
      %v2072 = vmul.f32 %v2064, %v1512
      %v2073 = vmul.f32 %v2065, %v1694
      %v2074 = vmul.f32 %v2066, %v1876
      %v2075 = vmul.f32 %v2067, %v2058
      %v2076 = vadd.f32 %v2050, %v2068
      %v2077 = vadd.f32 %v2051, %v2069
      %v2078 = vadd.f32 %v2052, %v2070
      %v2079 = vadd.f32 %v2053, %v2071
      %v2080 = vadd.f32 %v2054, %v2072
      %v2081 = vadd.f32 %v2055, %v2073
      %v2082 = vadd.f32 %v2056, %v2074
      %v2083 = vadd.f32 %v2057, %v2075
      %v2084 = vld [vmem:[#allocation2 + $0x72] sm:$0xff]
      %s2085 = scalar_lea.vmem %s6, 3008
      %v2086 = vld [vmem:[%s2085] sm:$0xff]
      %v2087 = vld [vmem:[%s2085 + $0x8] sm:$0xff]
      %v2088 = vld [vmem:[%s2085 + $0x10] sm:$0xff]
      %v2089 = vld [vmem:[%s2085 + $0x18] sm:$0xff]
      %v2090 = vld [vmem:[%s2085 + $0x20] sm:$0xff]
      %v2091 = vld [vmem:[%s2085 + $0x28] sm:$0xff]
      %v2092 = vld [vmem:[%s2085 + $0x30] sm:$0xff]
      %v2093 = vld [vmem:[%s2085 + $0x38] sm:$0xff]
      %v2094 = vmul.f32 %v2086, %v984
      %v2095 = vmul.f32 %v2087, %v985
      %v2096 = vmul.f32 %v2088, %v1174
      %v2097 = vmul.f32 %v2089, %v1356
      %v2098 = vmul.f32 %v2090, %v1538
      %v2099 = vmul.f32 %v2091, %v1720
      %v2100 = vmul.f32 %v2092, %v1902
      %v2101 = vmul.f32 %v2093, %v2084
      %v2102 = vadd.f32 %v2076, %v2094
      %v2103 = vadd.f32 %v2077, %v2095
      %v2104 = vadd.f32 %v2078, %v2096
      %v2105 = vadd.f32 %v2079, %v2097
      %v2106 = vadd.f32 %v2080, %v2098
      %v2107 = vadd.f32 %v2081, %v2099
      %v2108 = vadd.f32 %v2082, %v2100
      %v2109 = vadd.f32 %v2083, %v2101
      %v2110 = vld [vmem:[#allocation2 + $0x73] sm:$0xff]
      %s2111 = scalar_lea.vmem %s6, 3072
      %v2112 = vld [vmem:[%s2111] sm:$0xff]
      %v2113 = vld [vmem:[%s2111 + $0x8] sm:$0xff]
      %v2114 = vld [vmem:[%s2111 + $0x10] sm:$0xff]
      %v2115 = vld [vmem:[%s2111 + $0x18] sm:$0xff]
      %v2116 = vld [vmem:[%s2111 + $0x20] sm:$0xff]
      %v2117 = vld [vmem:[%s2111 + $0x28] sm:$0xff]
      %v2118 = vld [vmem:[%s2111 + $0x30] sm:$0xff]
      %v2119 = vld [vmem:[%s2111 + $0x38] sm:$0xff]
      %v2120 = vmul.f32 %v2112, %v1017
      %v2121 = vmul.f32 %v2113, %v1018
      %v2122 = vmul.f32 %v2114, %v1200
      %v2123 = vmul.f32 %v2115, %v1382
      %v2124 = vmul.f32 %v2116, %v1564
      %v2125 = vmul.f32 %v2117, %v1746
      %v2126 = vmul.f32 %v2118, %v1928
      %v2127 = vmul.f32 %v2119, %v2110
      %v2128 = vadd.f32 %v2102, %v2120
      %v2129 = vadd.f32 %v2103, %v2121
      %v2130 = vadd.f32 %v2104, %v2122
      %v2131 = vadd.f32 %v2105, %v2123
      %v2132 = vadd.f32 %v2106, %v2124
      %v2133 = vadd.f32 %v2107, %v2125
      %v2134 = vadd.f32 %v2108, %v2126
      %v2135 = vadd.f32 %v2109, %v2127
      %2144 = vrot.lane.b32.xlu0 %v2128, 127
      %v2145 = vpop.permute.xlu0 %2144
      %2146 = vrot.lane.b32.xlu0 %v2129, 127
      %v2147 = vpop.permute.xlu0 %2146
      %2148 = vrot.lane.b32.xlu0 %v2130, 127
      %v2149 = vpop.permute.xlu0 %2148
      %2150 = vrot.lane.b32.xlu0 %v2131, 127
      %v2151 = vpop.permute.xlu0 %2150
      %2152 = vrot.lane.b32.xlu0 %v2132, 127
      %v2153 = vpop.permute.xlu0 %2152
      %2154 = vrot.lane.b32.xlu0 %v2133, 127
      %v2155 = vpop.permute.xlu0 %2154
      %2156 = vrot.lane.b32.xlu0 %v2134, 127
      %v2157 = vpop.permute.xlu0 %2156
      %2158 = vrot.lane.b32.xlu0 %v2135, 127
      %v2159 = vpop.permute.xlu0 %2158
      %v2168 = vadd.f32 %v2128, %v2145
      %v2169 = vadd.f32 %v2129, %v2147
      %v2170 = vadd.f32 %v2130, %v2149
      %v2171 = vadd.f32 %v2131, %v2151
      %v2172 = vadd.f32 %v2132, %v2153
      %v2173 = vadd.f32 %v2133, %v2155
      %v2174 = vadd.f32 %v2134, %v2157
      %v2175 = vadd.f32 %v2135, %v2159
      %v2176 = vxor.u32 %v2168, 2147483648
      %v2177 = vxor.u32 %v2169, 2147483648
      %v2178 = vxor.u32 %v2170, 2147483648
      %v2179 = vxor.u32 %v2171, 2147483648
      %v2180 = vxor.u32 %v2172, 2147483648
      %v2181 = vxor.u32 %v2173, 2147483648
      %v2182 = vxor.u32 %v2174, 2147483648
      %v2183 = vxor.u32 %v2175, 2147483648
      %v2184 = vmul.f32 %v2176, 1.442695
      %v2185 = vpow.pop %v2184
      %v2186 = vmul.f32 %v2177, 1.442695
      %v2187 = vpow.pop %v2186
      %v2188 = vmul.f32 %v2178, 1.442695
      %v2189 = vpow.pop %v2188
      %v2190 = vmul.f32 %v2179, 1.442695
      %v2191 = vpow.pop %v2190
      %v2192 = vmul.f32 %v2180, 1.442695
      %v2193 = vpow.pop %v2192
      %v2194 = vmul.f32 %v2181, 1.442695
      %v2195 = vpow.pop %v2194
      %v2196 = vmul.f32 %v2182, 1.442695
      %v2197 = vpow.pop %v2196
      %v2198 = vmul.f32 %v2183, 1.442695
      %v2199 = vpow.pop %v2198
      %v2200 = vadd.f32 %v2185, 1.0
      %v2201 = vadd.f32 %v2187, 1.0
      %v2202 = vadd.f32 %v2189, 1.0
      %v2203 = vadd.f32 %v2191, 1.0
      %v2204 = vadd.f32 %v2193, 1.0
      %v2205 = vadd.f32 %v2195, 1.0
      %v2206 = vadd.f32 %v2197, 1.0
      %v2207 = vadd.f32 %v2199, 1.0
      %v2208 = vrcp.pop %v2200
      %v2209 = vmul.f32 1.0, %v2208
      %v2210 = vrcp.pop %v2201
      %v2211 = vmul.f32 1.0, %v2210
      %v2212 = vrcp.pop %v2202
      %v2213 = vmul.f32 1.0, %v2212
      %v2214 = vrcp.pop %v2203
      %v2215 = vmul.f32 1.0, %v2214
      %v2216 = vrcp.pop %v2204
      %v2217 = vmul.f32 1.0, %v2216
      %v2218 = vrcp.pop %v2205
      %v2219 = vmul.f32 1.0, %v2218
      %v2220 = vrcp.pop %v2206
      %v2221 = vmul.f32 1.0, %v2220
      %v2222 = vrcp.pop %v2207
      %v2223 = vmul.f32 1.0, %v2222
      %2225 = vset.pattern.permute.xlu0 0
      %2226 = vperm.xlu0 %2225, %v2209
      %v2227 = vpop.permute.xlu0 %2226
      %2230 = vset.pattern.permute.xlu0 0
      %2231 = vperm.xlu0 %2230, %v2211
      %v2232 = vpop.permute.xlu0 %2231
      %2235 = vset.pattern.permute.xlu0 0
      %2236 = vperm.xlu0 %2235, %v2213
      %v2237 = vpop.permute.xlu0 %2236
      %2240 = vset.pattern.permute.xlu0 0
      %2241 = vperm.xlu0 %2240, %v2215
      %v2242 = vpop.permute.xlu0 %2241
      %2245 = vset.pattern.permute.xlu0 0
      %2246 = vperm.xlu0 %2245, %v2217
      %v2247 = vpop.permute.xlu0 %2246
      %2250 = vset.pattern.permute.xlu0 0
      %2251 = vperm.xlu0 %2250, %v2219
      %v2252 = vpop.permute.xlu0 %2251
      %2255 = vset.pattern.permute.xlu0 0
      %2256 = vperm.xlu0 %2255, %v2221
      %v2257 = vpop.permute.xlu0 %2256
      %2260 = vset.pattern.permute.xlu0 0
      %2261 = vperm.xlu0 %2260, %v2223
      %v2262 = vpop.permute.xlu0 %2261
      %v2264 = vmul.f32 %v725, %v2227
      %v2265 = vmul.f32 %v726, %v2232
      %v2266 = vmul.f32 %v727, %v2237
      %v2267 = vmul.f32 %v728, %v2242
      %v2268 = vmul.f32 %v729, %v2247
      %v2269 = vmul.f32 %v730, %v2252
      %v2270 = vmul.f32 %v731, %v2257
      %v2271 = vmul.f32 %v732, %v2262
      %2272 = vst.msk [vmem:[%s298] sm:$0xff] %vm347, %v2264
      %2273 = vst.msk [vmem:[%s298 + $0x8] sm:$0xff] %vm347, %v2265
      %2274 = vst.msk [vmem:[%s298 + $0x10] sm:$0xff] %vm347, %v2266
      %2275 = vst.msk [vmem:[%s298 + $0x18] sm:$0xff] %vm347, %v2267
      %2276 = vst.msk [vmem:[%s298 + $0x20] sm:$0xff] %vm347, %v2268
      %2277 = vst.msk [vmem:[%s298 + $0x28] sm:$0xff] %vm347, %v2269
      %2278 = vst.msk [vmem:[%s298 + $0x30] sm:$0xff] %vm347, %v2270
      %2279 = vst.msk [vmem:[%s298 + $0x38] sm:$0xff] %vm347, %v2271
      %p2280 = scmp.lt.s32.totalorder %s18, 1
      %s2281 = scalar_select %p2280, %s18, 1
      %s2282 = smul.addr %s2281, 8
      %s2283 = smul.addr %s2282, 8
      %s2284 = scalar_lea.vmem %s7, %s2283
      // Predicated region
      $region49: #{tpu_custom_call.1} parent=47 // pred_check
        %p2285 = pneg %p193
      $region50: #{tpu_custom_call.1} parent=47 // pred_check_branch
        %2287 = sbr.rel (%p2285) target = $region52
      $region51: #{tpu_custom_call.1} parent=47 // pred_region
        _
      $region52: #{tpu_custom_call.1} parent=47 // pred_fallthru
        _
    $region48: #{tpu_custom_call.1} parent=5 // pred_fallthru
      _
    %p2288 = scmp.le.s32.totalorder 2, %s13
    // Predicated region
    $region53: #{tpu_custom_call.1} parent=5 // pred_check
      %p2289 = pneg %p2288
    $region54: #{tpu_custom_call.1} parent=5 // pred_check_branch
      %2291 = sbr.rel (%p2289) target = $region56
    $region55: #{tpu_custom_call.1} parent=5 // pred_region
      %s2292 = ssub.s32 %s13, 2
      // Predicated region
      $region57: #{tpu_custom_call.1} parent=55 // pred_check
        %p2293 = pneg %p199
      $region58: #{tpu_custom_call.1} parent=55 // pred_check_branch
        %2295 = sbr.rel (%p2293) target = $region60
      $region59: #{tpu_custom_call.1} parent=55 // pred_region
        %p2296 = scmp.lt.s32.totalorder %s19, 1
        %s2297 = scalar_select %p2296, %s19, 1
        %s2298 = smul.addr %s2297, 8
        %s2299 = smul.addr %s2298, 8
        %s2300 = scalar_lea.vmem %s7, %s2299
      $region60: #{tpu_custom_call.1} parent=55 // pred_fallthru
        _
    $region56: #{tpu_custom_call.1} parent=5 // pred_fallthru
      _
  $region6: #{tpu_custom_call.1} parent=0 // loop_footer
    %s17 = sadd.s32 1, %s13
  $region7: #{tpu_custom_call.1} parent=0 // loop_footer_branch
    %12 = sbr.rel target = $region3
  $region8: #{tpu_custom_call.1} parent=0 // loop_exit
    _

</llo_original>
